<compile_context>
chip_gen: v5e
topology: v5e:2x2
jax: 0.10.0
libtpu: 0.0.40
codegen_flags: <defaults>
</compile_context>

<pallas_src>
import functools
import math

import jax
import jax.numpy as jnp
import numpy as np
from jax.experimental import pallas as pl
from jax.experimental.pallas import tpu as pltpu

# ---------------------------------------------------------------- config -----
WORD_EMB_DIM = 32          # config['model']['word_embedding_dim']
NHEAD = 2                  # config['model']['nhead']
NUM_ENC_LAYERS = 2         # config['model']['num_encoder_layers']
FFN_DIM = 128              # (PyTorch default dim_feedforward=2048, scaled down)
LABEL_DIM = 16             # config['model']['label_embedding_dim']
HIDDEN_DIM = 32            # config['model']['hidden_dim']
NUM_CLASSES_LIST = [3, 5]  # config['data']['num_classes_list']
NUM_CLASSES = 8            # config['data']['num_classes'] == sum(list)
ALPHA = 0.5                # config['model']['alpha']
IMG_FEAT_DIM = 64          # stand-in for resnet34.fc.out_features (=1000)
NUM_WORDS = 50
SEQ_LEN = 8
LN_EPS = 1e-5
LANE = 128

_VMEM = functools.partial(pl.BlockSpec, memory_space=pltpu.MemorySpace.VMEM)


def _dot(a, b):
    return jnp.dot(a, b, preferred_element_type=jnp.float32)


# --------------------------------------------------------------- the kernel --
def _fused_kernel(ids_ref, img_ref, slab_ref, out_ref, *, offs, S, G, E,
                  nhead, dh, num_layers, eps, alpha, n_sec, n_vid,
                  num_words, out_rows):
    f32 = jnp.float32
    n_tok = S * G

    def W(name):                              # static slab slice -> load
        r0, nr, nc = offs[name]
        return slab_ref[r0:r0 + nr, 0:nc]

    # ---- embedding gather as one-hot @ table (MXU, no in-kernel gather) -----
    ids = ids_ref[...]                                            # (n_tok, 1)
    iota = jax.lax.broadcasted_iota(jnp.int32, (n_tok, num_words), 1)
    onehot = (iota == ids).astype(f32)                            # (n_tok, V)
    # token row order is word-major: row = s*G + g  (PyTorch seq-first layout)
    x = _dot(onehot, W("embedding"))                              # (n_tok, E)

    # ---- transformer encoder (post-norm, relu, eval mode) -------------------
    def ln(v, gname, bname):
        mu = jnp.mean(v, axis=-1, keepdims=True)
        vc = v - mu
        var = jnp.mean(vc * vc, axis=-1, keepdims=True)
        return vc * jax.lax.rsqrt(var + eps) * W(gname) + W(bname)

    scale = 1.0 / math.sqrt(dh)
    for l in range(num_layers):
        # per-head projections (weights pre-split -> no activation lane slices)
        qs, ks, vs = [], [], []
        for h in range(nhead):
            p = f"l{l}h{h}"
            qs.append((_dot(x, W(p + "_wq")) + W(p + "_bq")).reshape(S, G, dh))
            ks.append((_dot(x, W(p + "_wk")) + W(p + "_bk")).reshape(S, G, dh))
            vs.append((_dot(x, W(p + "_wv")) + W(p + "_bv")).reshape(S, G, dh))
        # stack heads along the batch axis: one einsum pair for all heads
        qb = jnp.concatenate(qs, axis=0)                  # (nhead*S, G, dh)
        kb = jnp.concatenate(ks, axis=0)
        vb = jnp.concatenate(vs, axis=0)
        s_ = jnp.einsum('bqd,bkd->bqk', qb, kb,
                        preferred_element_type=f32) * scale      # (.., G, G)
        s_ = s_ - jnp.max(s_, axis=-1, keepdims=True)
        p_ = jnp.exp(s_)
        p_ = p_ / jnp.sum(p_, axis=-1, keepdims=True)             # exact
        ob = jnp.einsum('bqk,bkd->bqd', p_, vb,
                        preferred_element_type=f32)               # (.., G, dh)
        attn = W(f"l{l}_bo")                                      # (1, E)
        for h in range(nhead):
            oh = ob[h * S:(h + 1) * S].reshape(n_tok, dh)
            attn = attn + _dot(oh, W(f"l{l}h{h}_wo"))
        x1 = ln(x + attn, f"l{l}_n1g", f"l{l}_n1b")               # residual in LN
        ff = jnp.maximum(_dot(x1, W(f"l{l}_w1")) + W(f"l{l}_fb1"), 0.0)
        ff = _dot(ff, W(f"l{l}_w2")) + W(f"l{l}_fb2")
        x = ln(x1 + ff, f"l{l}_n2g", f"l{l}_n2b")
    x = ln(x, "enc_g", "enc_b")                                   # (n_tok, E)
    wx3 = x.reshape(S, G, E)

    # ---- image branch: avg-pool folded into the projection weight ----------
    proj = _dot(img_ref[...], W("img_w")) + W("img_b")            # (N_img, D)
    img = _dot(W("sel"), proj)                                    # (G, D)

    # ---- TCA: class-mean commutes with the attention matmul ----------------
    def tca(wl_name, sh_name):
        oh = jnp.tanh(_dot(x, W(wl_name)))                        # (n_tok, L)
        sc = _dot(oh, W(sh_name))                                 # (n_tok, c)
        c = sc.shape[-1]
        sc3 = sc.reshape(S, G, c)
        sc3 = sc3 - jnp.max(sc3, axis=0, keepdims=True)           # softmax over words
        p = jnp.exp(sc3)
        p = p / jnp.sum(p, axis=0, keepdims=True)
        pbar = jnp.mean(p, axis=2, keepdims=True)                 # (S, G, 1)
        return jnp.sum(pbar * wx3, axis=0)                        # (G, E)

    # ---- ForwardUnit 0 (hidden_dim == 0: empty last_h) ----------------------
    t0 = tca("u0_wl", "u0_sh")
    u0_in = jnp.concatenate([img, t0], axis=-1)                   # (G, 96)
    h0 = jnp.maximum(_dot(u0_in, W("u0_w1")) + W("u0_b1"), 0.0)
    f0 = jnp.maximum(_dot(h0, W("u0_w2")) + W("u0_b2"), 0.0)
    logits = _dot(f0, W("u0_w3"))                                 # (G, 128) lane-padded

    # ---- ForwardUnit 1 -------------------------------------------------------
    t1 = tca("u1_wl", "u1_sh")
    u1_in = jnp.concatenate([img, t1, h0], axis=-1)               # (G, 128) -> full-K MXU
    h1 = jnp.maximum(_dot(u1_in, W("u1_w1")) + W("u1_b1"), 0.0)
    f1 = jnp.maximum(_dot(h1, W("u1_w2")) + W("u1_b2"), 0.0)
    logits = logits + _dot(f1, W("u1_w3")) + W("b3")
    seg_local = jax.nn.sigmoid(logits)                            # (G, 128)
    seg_global = h1                                               # (G, HIDDEN)

    # ---- segment -> section -> video pooling (static structure) -------------
    neg = jnp.float32(-1e30)
    sec_mask = W("sec_mask")                                      # (n_sec, G)
    sec_ls = jnp.max(jnp.where(sec_mask[:, :, None] > 0.5,
                               seg_local[None, :, :], neg), axis=1)
    sec_gf = _dot(W("sec_mean"), seg_global)                      # (n_sec, H)

    vid_mask = W("vid_mask")
    vid_ls = jnp.max(jnp.where(vid_mask[:, :, None] > 0.5,
                               sec_ls[None, :, :], neg), axis=1)
    vid_gf = _dot(W("vid_mean"), sec_gf)                          # (n_vid, H)

    sec_gs = jax.nn.sigmoid(_dot(sec_gf, W("sec_w")) + W("sec_b"))
    vid_gs = jax.nn.sigmoid(_dot(vid_gf, W("vid_w")) + W("vid_b"))

    sec_fin = (1.0 - alpha) * sec_ls + alpha * sec_gs             # (n_sec, 128)
    vid_fin = (1.0 - alpha) * vid_ls + alpha * vid_gs             # (n_vid, 128)

    parts = [sec_fin, vid_fin]
    pad_rows = out_rows - n_sec - n_vid
    if pad_rows:
        parts.append(jnp.zeros((pad_rows, LANE), f32))
    out_ref[...] = jnp.concatenate(parts, axis=0)                 # lane-dense (8,128)


# --------------------------------------------- static structure -> constants -
def _image_select_matrix(image_segments, n_images):
    """Folds (f[:-1]+f[1:])/2 and the boundary-row mask into one matrix."""
    avg = np.zeros((n_images - 1, n_images), np.float32)
    for i in range(n_images - 1):
        avg[i, i] = 0.5
        avg[i, i + 1] = 0.5
    masked = []
    offset = 0
    for video in image_segments:
        for idx in range(1, len(video) + 1):
            masked.append(sum(video[:idx]) + offset - 1)
        offset += sum(video)
    masked.pop(-1)
    keep = [i for i in range(n_images - 1) if i not in masked]
    sel = np.zeros((len(keep), n_images - 1), np.float32)
    for r, i in enumerate(keep):
        sel[r, i] = 1.0
    return jnp.asarray(sel @ avg)                      # (n_keep, n_images)


def _pool_matrices(segments):
    """Mean-pooling matrices and max-pooling masks for the static hierarchy."""
    sec_slices = []
    end = 0
    for video in segments:
        for n_seg in video:
            sec_slices.append((end, end + n_seg))
            end += n_seg
    n_segments = end
    n_sections = len(sec_slices)
    sec_mean = np.zeros((n_sections, n_segments), np.float32)
    sec_mask = np.zeros((n_sections, n_segments), np.float32)
    for i, (s, e) in enumerate(sec_slices):
        sec_mean[i, s:e] = 1.0 / (e - s)
        sec_mask[i, s:e] = 1.0
    vid_slices = []
    end = 0
    for video in segments:
        vid_slices.append((end, end + len(video)))
        end += len(video)
    n_videos = len(vid_slices)
    vid_mean = np.zeros((n_videos, n_sections), np.float32)
    vid_mask = np.zeros((n_videos, n_sections), np.float32)
    for i, (s, e) in enumerate(vid_slices):
        vid_mean[i, s:e] = 1.0 / (e - s)
        vid_mask[i, s:e] = 1.0
    return (jnp.asarray(sec_mean), jnp.asarray(sec_mask),
            jnp.asarray(vid_mean), jnp.asarray(vid_mask))


# ----------------------------------------------------- slab packing (once) ---
def _pack_slab(blocks):
    """blocks: [(name, 2-D array with <=128 cols)]. Returns (slab (R,128), offsets)."""
    offs = {}
    parts = []
    r = 0
    for name, a in blocks:
        a = jnp.asarray(a, jnp.float32)
        if a.ndim == 1:
            a = a.reshape(1, -1)
        nr, nc = a.shape
        assert nc <= LANE, (name, a.shape)
        rpad = (-nr) % 8                           # keep every block 8-row aligned
        offs[name] = (r, nr, nc)
        parts.append(jnp.pad(a, ((0, rpad), (0, LANE - nc))))
        r += nr + rpad
    return jnp.concatenate(parts, axis=0), offs


def prepare(params, segments, image_segments, *, n_images, image_hw):
    """Pack every weight / bias / static-structure constant into one slab."""
    E = WORD_EMB_DIM
    dh = E // NHEAD
    blocks = []
    add = lambda name, arr: blocks.append((name, arr))

    add("embedding", params["embedding"])
    hw = image_hw[0] * image_hw[1]
    # fold global-avg-pool into the projection weight: one K=3*H*W matmul
    add("img_w", jnp.repeat(params["img_w"] / hw, hw, axis=0))    # (3*hw, D)
    add("img_b", params["img_b"].reshape(1, -1))
    add("sel", _image_select_matrix(image_segments, n_images))

    for l, lyr in enumerate(params["transformer"]["layers"]):
        wqkv, bqkv = lyr["in_proj_w"], lyr["in_proj_b"]           # (E,3E), (3E,)
        wo = lyr["out_proj_w"]                                    # (E, E)
        for h in range(NHEAD):
            sl = slice(h * dh, (h + 1) * dh)
            add(f"l{l}h{h}_wq", wqkv[:, 0 * E:1 * E][:, sl])
            add(f"l{l}h{h}_wk", wqkv[:, 1 * E:2 * E][:, sl])
            add(f"l{l}h{h}_wv", wqkv[:, 2 * E:3 * E][:, sl])
            add(f"l{l}h{h}_bq", bqkv[0 * E:1 * E][sl].reshape(1, -1))
            add(f"l{l}h{h}_bk", bqkv[1 * E:2 * E][sl].reshape(1, -1))
            add(f"l{l}h{h}_bv", bqkv[2 * E:3 * E][sl].reshape(1, -1))
            add(f"l{l}h{h}_wo", wo[sl, :])
        add(f"l{l}_bo", lyr["out_proj_b"].reshape(1, -1))
        add(f"l{l}_w1", lyr["lin1_w"])
        add(f"l{l}_fb1", lyr["lin1_b"].reshape(1, -1))
        add(f"l{l}_w2", lyr["lin2_w"])
        add(f"l{l}_fb2", lyr["lin2_b"].reshape(1, -1))
        add(f"l{l}_n1g", lyr["norm1_g"].reshape(1, -1))
        add(f"l{l}_n1b", lyr["norm1_b"].reshape(1, -1))
        add(f"l{l}_n2g", lyr["norm2_g"].reshape(1, -1))
        add(f"l{l}_n2b", lyr["norm2_b"].reshape(1, -1))
    add("enc_g", params["transformer"]["norm_g"].reshape(1, -1))
    add("enc_b", params["transformer"]["norm_b"].reshape(1, -1))

    u0, u1 = params["units"]
    c0, c1 = u0["w3"].shape[1], u1["w3"].shape[1]
    C = c0 + c1
    # score heads lane-padded to 128 disjoint column ranges:
    # sigmoid(pad0 + pad1 + bias) == concatenation of per-unit sigmoid scores.
    add("u0_wl", u0["tca_wl"]); add("u0_sh", u0["tca_sh"])
    add("u0_w1", u0["w1"]); add("u0_b1", u0["b1"].reshape(1, -1))
    add("u0_w2", u0["w2"]); add("u0_b2", u0["b2"].reshape(1, -1))
    add("u0_w3", jnp.pad(u0["w3"], ((0, 0), (0, LANE - c0))))
    add("u1_wl", u1["tca_wl"]); add("u1_sh", u1["tca_sh"])
    add("u1_w1", u1["w1"]); add("u1_b1", u1["b1"].reshape(1, -1))
    add("u1_w2", u1["w2"]); add("u1_b2", u1["b2"].reshape(1, -1))
    add("u1_w3", jnp.pad(u1["w3"], ((0, 0), (c0, LANE - C))))
    add("b3", jnp.pad(jnp.concatenate([u0["b3"], u1["b3"]]).reshape(1, -1),
                      ((0, 0), (0, LANE - C))))

    sec_mean, sec_mask, vid_mean, vid_mask = _pool_matrices(segments)
    add("sec_mean", sec_mean); add("sec_mask", sec_mask)
    add("vid_mean", vid_mean); add("vid_mask", vid_mask)
    add("sec_w", jnp.pad(params["section_w"], ((0, 0), (0, LANE - C))))
    add("sec_b", jnp.pad(params["section_b"].reshape(1, -1), ((0, 0), (0, LANE - C))))
    add("vid_w", jnp.pad(params["video_w"], ((0, 0), (0, LANE - C))))
    add("vid_b", jnp.pad(params["video_b"].reshape(1, -1), ((0, 0), (0, LANE - C))))

    slab, offs = _pack_slab(blocks)
    meta = dict(n_sec=sec_mean.shape[0], n_vid=vid_mean.shape[0], C=C)
    return slab, offs, meta


# ---------------------------------------------------------------- forward ----
def make_forward(offs, *, S, G, E, nhead, num_layers, n_sec, n_vid, n_classes,
                 num_words, alpha, eps=LN_EPS):
    dh = E // nhead
    out_rows = max(8, ((n_sec + n_vid + 7) // 8) * 8)
    kern = functools.partial(
        _fused_kernel, offs=offs, S=S, G=G, E=E, nhead=nhead, dh=dh,
        num_layers=num_layers, eps=eps, alpha=alpha, n_sec=n_sec, n_vid=n_vid,
        num_words=num_words, out_rows=out_rows)

    @jax.jit
    def forward(slab, images, text_pad):
        # PyTorch TransformerEncoder (batch_first=False) attends over the
        # segment axis; token row order handed to the kernel is word-major
        # (row = word_pos * n_seg + seg) so no activation transposes are needed.
        ids = jnp.transpose(text_pad).reshape(-1, 1).astype(jnp.int32)   # (S*G, 1)
        img_flat = images.reshape(images.shape[0], -1).astype(jnp.float32)
        out = pl.pallas_call(
            kern,
            out_shape=jax.ShapeDtypeStruct((out_rows, LANE), jnp.float32),
            in_specs=[_VMEM(), _VMEM(), _VMEM()],
            out_specs=_VMEM(),
        )(ids, img_flat, slab)
        sec = out[0:n_sec, 0:n_classes]
        vid = out[n_sec:n_sec + n_vid, 0:n_classes]
        return sec, vid

    return forward


# ----------------------------------------------------------------- params ----
def init_params(key):
    keys = iter(jax.random.split(key, 64))

    def wmat(shape):
        # weights stored pre-transposed: (in_features, out_features)
        return (1.0 / math.sqrt(shape[0])) * jax.random.normal(
            next(keys), shape, jnp.float32)

    zeros = lambda s: jnp.zeros(s, jnp.float32)
    ones = lambda s: jnp.ones(s, jnp.float32)

    e = WORD_EMB_DIM
    layers = []
    for _ in range(NUM_ENC_LAYERS):
        layers.append(dict(
            in_proj_w=wmat((e, 3 * e)), in_proj_b=zeros((3 * e,)),
            out_proj_w=wmat((e, e)), out_proj_b=zeros((e,)),
            lin1_w=wmat((e, FFN_DIM)), lin1_b=zeros((FFN_DIM,)),
            lin2_w=wmat((FFN_DIM, e)), lin2_b=zeros((e,)),
            norm1_g=ones((e,)), norm1_b=zeros((e,)),
            norm2_g=ones((e,)), norm2_b=zeros((e,)),
        ))
    transformer = dict(layers=layers, norm_g=ones((e,)), norm_b=zeros((e,)))

    units = []
    for idx, c in enumerate(NUM_CLASSES_LIST):
        hidden_in = 0 if idx == 0 else HIDDEN_DIM
        in_dim = IMG_FEAT_DIM + WORD_EMB_DIM + hidden_in
        units.append(dict(
            tca_wl=wmat((WORD_EMB_DIM, LABEL_DIM)),    # linear_label.weight^T
            tca_sh=wmat((LABEL_DIM, c)),               # S_h^T
            w1=wmat((in_dim, HIDDEN_DIM)), b1=zeros((HIDDEN_DIM,)),
            w2=wmat((HIDDEN_DIM, HIDDEN_DIM)), b2=zeros((HIDDEN_DIM,)),
            w3=wmat((HIDDEN_DIM, c)), b3=zeros((c,)),
        ))

    return dict(
        img_w=wmat((3, IMG_FEAT_DIM)), img_b=zeros((IMG_FEAT_DIM,)),
        embedding=wmat((NUM_WORDS, WORD_EMB_DIM)),
        transformer=transformer,
        units=units,
        section_w=wmat((HIDDEN_DIM, NUM_CLASSES)), section_b=zeros((NUM_CLASSES,)),
        video_w=wmat((HIDDEN_DIM, NUM_CLASSES)), video_b=zeros((NUM_CLASSES,)),
    )


# ------------------------------------------------------------------- main ----
if __name__ == "__main__":
    key = jax.random.PRNGKey(0)
    k_img, k_txt = jax.random.split(key)

    # 2 videos; images per segment (2 images/segment so the adjacent-average +
    # boundary-mask yields exactly one image feature per segment).
    image_segments = ((2, 2), (2, 2))
    # 2 videos; per-video list of "segments per section".
    segments = ((1, 1), (2,))

    n_images = sum(sum(v) for v in image_segments)       # 8
    n_segments = sum(sum(v) for v in segments)           # 4
    n_sections = sum(len(v) for v in segments)           # 3
    n_videos = len(segments)                             # 2
    img_h = img_w = 16

    images = jax.random.normal(k_img, (n_images, 3, img_h, img_w), jnp.float32)
    text_pad = jax.random.randint(k_txt, (n_segments, SEQ_LEN), 0, NUM_WORDS)

    params = init_params(jax.random.PRNGKey(42))
    slab, offs, meta = prepare(params, segments, image_segments,
                               n_images=n_images, image_hw=(img_h, img_w))
    assert meta["C"] == NUM_CLASSES

    forward = make_forward(offs, S=SEQ_LEN, G=n_segments, E=WORD_EMB_DIM,
                           nhead=NHEAD, num_layers=NUM_ENC_LAYERS,
                           n_sec=meta["n_sec"], n_vid=meta["n_vid"],
                           n_classes=meta["C"], num_words=NUM_WORDS,
                           alpha=ALPHA)

    section_scores, video_scores = forward(slab, images, text_pad)
    jax.block_until_ready((section_scores, video_scores))

    assert section_scores.shape == (n_sections, NUM_CLASSES), section_scores.shape
    assert video_scores.shape == (n_videos, NUM_CLASSES), video_scores.shape
    assert bool(jnp.all(jnp.isfinite(section_scores)))
    assert bool(jnp.all(jnp.isfinite(video_scores)))
    print("KERNEL_OK")
</pallas_src>

<mosaic_0001>
module attributes {stable_mosaic.version = 11 : i64} {
  func.func @_fused_kernel(%arg0: memref<32x1xi32, #tpu.memory_space<vmem>>, %arg1: memref<8x768xf32, #tpu.memory_space<vmem>>, %arg2: memref<2432x128xf32, #tpu.memory_space<vmem>>, %arg3: memref<8x128xf32, #tpu.memory_space<vmem>>) attributes {dimension_semantics = [], scalar_prefetch = 0 : i64, scratch_operands = 0 : i64, tpu.core_type = #tpu.core_type<tc>} {
    %c0 = arith.constant 0 : index
    %c0_0 = arith.constant 0 : index
    %0 = vector.load %arg0[%c0, %c0_0] : memref<32x1xi32, #tpu.memory_space<vmem>>, vector<32x1xi32>
    %1 = tpu.iota {dimensions = array<i32: 1>} : vector<32x50xi32>
    %2 = vector.broadcast %0 : vector<32x1xi32> to vector<32x50xi32>
    %3 = arith.cmpi eq, %1, %2 : vector<32x50xi32>
    %4 = arith.extui %3 : vector<32x50xi1> to vector<32x50xi32>
    %5 = arith.sitofp %4 : vector<32x50xi32> to vector<32x50xf32>
    %c0_1 = arith.constant 0 : index
    %c0_2 = arith.constant 0 : index
    %6 = vector.load %arg2[%c0_1, %c0_2] : memref<2432x128xf32, #tpu.memory_space<vmem>>, vector<50x32xf32>
    %cst = arith.constant dense<0.000000e+00> : vector<32x32xf32>
    %7 = tpu.matmul %5, %6, %cst {dimension_numbers = #tpu.dot_dimension_numbers<[1], [0], [0], [1], [0, 0, 1, 1], [], []>} : vector<32x50xf32>, vector<50x32xf32>, vector<32x32xf32> -> vector<32x32xf32>
    %c840 = arith.constant 840 : index
    %c0_3 = arith.constant 0 : index
    %8 = vector.load %arg2[%c840, %c0_3] : memref<2432x128xf32, #tpu.memory_space<vmem>>, vector<32x16xf32>
    %cst_4 = arith.constant dense<0.000000e+00> : vector<32x16xf32>
    %9 = tpu.matmul %7, %8, %cst_4 {dimension_numbers = #tpu.dot_dimension_numbers<[1], [0], [0], [1], [0, 0, 1, 1], [], []>} : vector<32x32xf32>, vector<32x16xf32>, vector<32x16xf32> -> vector<32x16xf32>
    %c936 = arith.constant 936 : index
    %c0_5 = arith.constant 0 : index
    %10 = vector.load %arg2[%c936, %c0_5] : memref<2432x128xf32, #tpu.memory_space<vmem>>, vector<1x16xf32>
    %11 = vector.broadcast %10 : vector<1x16xf32> to vector<32x16xf32>
    %12 = arith.addf %9, %11 : vector<32x16xf32>
    %13 = vector.shape_cast %12 : vector<32x16xf32> to vector<8x4x16xf32>
    %c872 = arith.constant 872 : index
    %c0_6 = arith.constant 0 : index
    %14 = vector.load %arg2[%c872, %c0_6] : memref<2432x128xf32, #tpu.memory_space<vmem>>, vector<32x16xf32>
    %cst_7 = arith.constant dense<0.000000e+00> : vector<32x16xf32>
    %15 = tpu.matmul %7, %14, %cst_7 {dimension_numbers = #tpu.dot_dimension_numbers<[1], [0], [0], [1], [0, 0, 1, 1], [], []>} : vector<32x32xf32>, vector<32x16xf32>, vector<32x16xf32> -> vector<32x16xf32>
    %c944 = arith.constant 944 : index
    %c0_8 = arith.constant 0 : index
    %16 = vector.load %arg2[%c944, %c0_8] : memref<2432x128xf32, #tpu.memory_space<vmem>>, vector<1x16xf32>
    %17 = vector.broadcast %16 : vector<1x16xf32> to vector<32x16xf32>
    %18 = arith.addf %15, %17 : vector<32x16xf32>
    %19 = vector.shape_cast %18 : vector<32x16xf32> to vector<8x4x16xf32>
    %c904 = arith.constant 904 : index
    %c0_9 = arith.constant 0 : index
    %20 = vector.load %arg2[%c904, %c0_9] : memref<2432x128xf32, #tpu.memory_space<vmem>>, vector<32x16xf32>
    %cst_10 = arith.constant dense<0.000000e+00> : vector<32x16xf32>
    %21 = tpu.matmul %7, %20, %cst_10 {dimension_numbers = #tpu.dot_dimension_numbers<[1], [0], [0], [1], [0, 0, 1, 1], [], []>} : vector<32x32xf32>, vector<32x16xf32>, vector<32x16xf32> -> vector<32x16xf32>
    %c952 = arith.constant 952 : index
    %c0_11 = arith.constant 0 : index
    %22 = vector.load %arg2[%c952, %c0_11] : memref<2432x128xf32, #tpu.memory_space<vmem>>, vector<1x16xf32>
    %23 = vector.broadcast %22 : vector<1x16xf32> to vector<32x16xf32>
    %24 = arith.addf %21, %23 : vector<32x16xf32>
    %25 = vector.shape_cast %24 : vector<32x16xf32> to vector<8x4x16xf32>
    %c976 = arith.constant 976 : index
    %c0_12 = arith.constant 0 : index
    %26 = vector.load %arg2[%c976, %c0_12] : memref<2432x128xf32, #tpu.memory_space<vmem>>, vector<32x16xf32>
    %cst_13 = arith.constant dense<0.000000e+00> : vector<32x16xf32>
    %27 = tpu.matmul %7, %26, %cst_13 {dimension_numbers = #tpu.dot_dimension_numbers<[1], [0], [0], [1], [0, 0, 1, 1], [], []>} : vector<32x32xf32>, vector<32x16xf32>, vector<32x16xf32> -> vector<32x16xf32>
    %c1072 = arith.constant 1072 : index
    %c0_14 = arith.constant 0 : index
    %28 = vector.load %arg2[%c1072, %c0_14] : memref<2432x128xf32, #tpu.memory_space<vmem>>, vector<1x16xf32>
    %29 = vector.broadcast %28 : vector<1x16xf32> to vector<32x16xf32>
    %30 = arith.addf %27, %29 : vector<32x16xf32>
    %31 = vector.shape_cast %30 : vector<32x16xf32> to vector<8x4x16xf32>
    %c1008 = arith.constant 1008 : index
    %c0_15 = arith.constant 0 : index
    %32 = vector.load %arg2[%c1008, %c0_15] : memref<2432x128xf32, #tpu.memory_space<vmem>>, vector<32x16xf32>
    %cst_16 = arith.constant dense<0.000000e+00> : vector<32x16xf32>
    %33 = tpu.matmul %7, %32, %cst_16 {dimension_numbers = #tpu.dot_dimension_numbers<[1], [0], [0], [1], [0, 0, 1, 1], [], []>} : vector<32x32xf32>, vector<32x16xf32>, vector<32x16xf32> -> vector<32x16xf32>
    %c1080 = arith.constant 1080 : index
    %c0_17 = arith.constant 0 : index
    %34 = vector.load %arg2[%c1080, %c0_17] : memref<2432x128xf32, #tpu.memory_space<vmem>>, vector<1x16xf32>
    %35 = vector.broadcast %34 : vector<1x16xf32> to vector<32x16xf32>
    %36 = arith.addf %33, %35 : vector<32x16xf32>
    %37 = vector.shape_cast %36 : vector<32x16xf32> to vector<8x4x16xf32>
    %c1040 = arith.constant 1040 : index
    %c0_18 = arith.constant 0 : index
    %38 = vector.load %arg2[%c1040, %c0_18] : memref<2432x128xf32, #tpu.memory_space<vmem>>, vector<32x16xf32>
    %cst_19 = arith.constant dense<0.000000e+00> : vector<32x16xf32>
    %39 = tpu.matmul %7, %38, %cst_19 {dimension_numbers = #tpu.dot_dimension_numbers<[1], [0], [0], [1], [0, 0, 1, 1], [], []>} : vector<32x32xf32>, vector<32x16xf32>, vector<32x16xf32> -> vector<32x16xf32>
    %c1088 = arith.constant 1088 : index
    %c0_20 = arith.constant 0 : index
    %40 = vector.load %arg2[%c1088, %c0_20] : memref<2432x128xf32, #tpu.memory_space<vmem>>, vector<1x16xf32>
    %41 = vector.broadcast %40 : vector<1x16xf32> to vector<32x16xf32>
    %42 = arith.addf %39, %41 : vector<32x16xf32>
    %43 = vector.shape_cast %42 : vector<32x16xf32> to vector<8x4x16xf32>
    %44 = tpu.concatenate %13, %31 in 0 : vector<8x4x16xf32>, vector<8x4x16xf32> -> vector<16x4x16xf32>
    %45 = tpu.concatenate %19, %37 in 0 : vector<8x4x16xf32>, vector<8x4x16xf32> -> vector<16x4x16xf32>
    %46 = tpu.concatenate %25, %43 in 0 : vector<8x4x16xf32>, vector<8x4x16xf32> -> vector<16x4x16xf32>
    "tpu.trace_start"() <{level = 10 : i32, message = "bqd,bkd->bqk"}> : () -> ()
    %cst_21 = arith.constant dense<0.000000e+00> : vector<16x4x4xf32>
    %47 = tpu.matmul %44, %45, %cst_21 {dimension_numbers = #tpu.dot_dimension_numbers<[2], [2], [1], [1], [0, 0, 0, 1, 1, 1], [0], [0]>} : vector<16x4x16xf32>, vector<16x4x16xf32>, vector<16x4x4xf32> -> vector<16x4x4xf32>
    "tpu.trace_stop"() : () -> ()
    %cst_22 = arith.constant 2.500000e-01 : f32
    %48 = vector.broadcast %cst_22 : f32 to vector<16x4x4xf32>
    %49 = arith.mulf %47, %48 : vector<16x4x4xf32>
    %cst_23 = arith.constant dense<0xFF800000> : vector<16x4xf32>
    %50 = vector.multi_reduction <maximumf>, %49, %cst_23 [2] : vector<16x4x4xf32> to vector<16x4xf32>
    %51 = vector.shape_cast %50 : vector<16x4xf32> to vector<16x4x1xf32>
    %52 = vector.broadcast %51 : vector<16x4x1xf32> to vector<16x4x4xf32>
    %53 = arith.subf %49, %52 : vector<16x4x4xf32>
    %54 = math.exp %53 : vector<16x4x4xf32>
    %cst_24 = arith.constant dense<0.000000e+00> : vector<16x4xf32>
    %55 = vector.multi_reduction <add>, %54, %cst_24 [2] : vector<16x4x4xf32> to vector<16x4xf32>
    %56 = vector.shape_cast %55 : vector<16x4xf32> to vector<16x4x1xf32>
    %57 = vector.broadcast %56 : vector<16x4x1xf32> to vector<16x4x4xf32>
    %58 = arith.divf %54, %57 : vector<16x4x4xf32>
    "tpu.trace_start"() <{level = 10 : i32, message = "bqk,bkd->bqd"}> : () -> ()
    %cst_25 = arith.constant dense<0.000000e+00> : vector<16x4x16xf32>
    %59 = tpu.matmul %58, %46, %cst_25 {dimension_numbers = #tpu.dot_dimension_numbers<[2], [1], [1], [2], [0, 0, 0, 1, 1, 2], [0], [0]>} : vector<16x4x4xf32>, vector<16x4x16xf32>, vector<16x4x16xf32> -> vector<16x4x16xf32>
    "tpu.trace_stop"() : () -> ()
    %c1112 = arith.constant 1112 : index
    %c0_26 = arith.constant 0 : index
    %60 = vector.load %arg2[%c1112, %c0_26] : memref<2432x128xf32, #tpu.memory_space<vmem>>, vector<1x32xf32>
    %61 = vector.extract_strided_slice %59 {offsets = [0, 0, 0], sizes = [8, 4, 16], strides = [1, 1, 1]} : vector<16x4x16xf32> to vector<8x4x16xf32>
    %62 = vector.shape_cast %61 : vector<8x4x16xf32> to vector<32x16xf32>
    %c960 = arith.constant 960 : index
    %c0_27 = arith.constant 0 : index
    %63 = vector.load %arg2[%c960, %c0_27] : memref<2432x128xf32, #tpu.memory_space<vmem>>, vector<16x32xf32>
    %cst_28 = arith.constant dense<0.000000e+00> : vector<32x32xf32>
    %64 = tpu.matmul %62, %63, %cst_28 {dimension_numbers = #tpu.dot_dimension_numbers<[1], [0], [0], [1], [0, 0, 1, 1], [], []>} : vector<32x16xf32>, vector<16x32xf32>, vector<32x32xf32> -> vector<32x32xf32>
    %65 = vector.broadcast %60 : vector<1x32xf32> to vector<32x32xf32>
    %66 = arith.addf %65, %64 : vector<32x32xf32>
    %67 = vector.extract_strided_slice %59 {offsets = [8, 0, 0], sizes = [8, 4, 16], strides = [1, 1, 1]} : vector<16x4x16xf32> to vector<8x4x16xf32>
    %68 = vector.shape_cast %67 : vector<8x4x16xf32> to vector<32x16xf32>
    %c1096 = arith.constant 1096 : index
    %c0_29 = arith.constant 0 : index
    %69 = vector.load %arg2[%c1096, %c0_29] : memref<2432x128xf32, #tpu.memory_space<vmem>>, vector<16x32xf32>
    %cst_30 = arith.constant dense<0.000000e+00> : vector<32x32xf32>
    %70 = tpu.matmul %68, %69, %cst_30 {dimension_numbers = #tpu.dot_dimension_numbers<[1], [0], [0], [1], [0, 0, 1, 1], [], []>} : vector<32x16xf32>, vector<16x32xf32>, vector<32x32xf32> -> vector<32x32xf32>
    %71 = arith.addf %66, %70 : vector<32x32xf32>
    %72 = arith.addf %7, %71 : vector<32x32xf32>
    %cst_31 = arith.constant dense<0.000000e+00> : vector<32xf32>
    %73 = vector.multi_reduction <add>, %72, %cst_31 [1] : vector<32x32xf32> to vector<32xf32>
    %74 = vector.shape_cast %73 : vector<32xf32> to vector<32x1xf32>
    %cst_32 = arith.constant 3.200000e+01 : f32
    %75 = vector.broadcast %cst_32 : f32 to vector<32x1xf32>
    %76 = arith.divf %74, %75 : vector<32x1xf32>
    %77 = vector.broadcast %76 : vector<32x1xf32> to vector<32x32xf32>
    %78 = arith.subf %72, %77 : vector<32x32xf32>
    %79 = arith.mulf %78, %78 : vector<32x32xf32>
    %cst_33 = arith.constant dense<0.000000e+00> : vector<32xf32>
    %80 = vector.multi_reduction <add>, %79, %cst_33 [1] : vector<32x32xf32> to vector<32xf32>
    %81 = vector.shape_cast %80 : vector<32xf32> to vector<32x1xf32>
    %cst_34 = arith.constant 3.200000e+01 : f32
    %82 = vector.broadcast %cst_34 : f32 to vector<32x1xf32>
    %83 = arith.divf %81, %82 : vector<32x1xf32>
    %cst_35 = arith.constant 9.99999974E-6 : f32
    %84 = vector.broadcast %cst_35 : f32 to vector<32x1xf32>
    %85 = arith.addf %83, %84 : vector<32x1xf32>
    %86 = math.rsqrt %85 : vector<32x1xf32>
    %87 = vector.broadcast %86 : vector<32x1xf32> to vector<32x32xf32>
    %88 = arith.mulf %78, %87 : vector<32x32xf32>
    %c1296 = arith.constant 1296 : index
    %c0_36 = arith.constant 0 : index
    %89 = vector.load %arg2[%c1296, %c0_36] : memref<2432x128xf32, #tpu.memory_space<vmem>>, vector<1x32xf32>
    %90 = vector.broadcast %89 : vector<1x32xf32> to vector<32x32xf32>
    %91 = arith.mulf %88, %90 : vector<32x32xf32>
    %c1304 = arith.constant 1304 : index
    %c0_37 = arith.constant 0 : index
    %92 = vector.load %arg2[%c1304, %c0_37] : memref<2432x128xf32, #tpu.memory_space<vmem>>, vector<1x32xf32>
    %93 = vector.broadcast %92 : vector<1x32xf32> to vector<32x32xf32>
    %94 = arith.addf %91, %93 : vector<32x32xf32>
    %c1120 = arith.constant 1120 : index
    %c0_38 = arith.constant 0 : index
    %95 = vector.load %arg2[%c1120, %c0_38] : memref<2432x128xf32, #tpu.memory_space<vmem>>, vector<32x128xf32>
    %cst_39 = arith.constant dense<0.000000e+00> : vector<32x128xf32>
    %96 = tpu.matmul %94, %95, %cst_39 {dimension_numbers = #tpu.dot_dimension_numbers<[1], [0], [0], [1], [0, 0, 1, 1], [], []>} : vector<32x32xf32>, vector<32x128xf32>, vector<32x128xf32> -> vector<32x128xf32>
    %c1152 = arith.constant 1152 : index
    %c0_40 = arith.constant 0 : index
    %97 = vector.load %arg2[%c1152, %c0_40] : memref<2432x128xf32, #tpu.memory_space<vmem>>, vector<1x128xf32>
    %98 = vector.broadcast %97 : vector<1x128xf32> to vector<32x128xf32>
    %99 = arith.addf %96, %98 : vector<32x128xf32>
    %cst_41 = arith.constant 0.000000e+00 : f32
    %100 = vector.broadcast %cst_41 : f32 to vector<32x128xf32>
    %101 = arith.maximumf %99, %100 : vector<32x128xf32>
    %c1160 = arith.constant 1160 : index
    %c0_42 = arith.constant 0 : index
    %102 = vector.load %arg2[%c1160, %c0_42] : memref<2432x128xf32, #tpu.memory_space<vmem>>, vector<128x32xf32>
    %cst_43 = arith.constant dense<0.000000e+00> : vector<32x32xf32>
    %103 = tpu.matmul %101, %102, %cst_43 {dimension_numbers = #tpu.dot_dimension_numbers<[1], [0], [0], [1], [0, 0, 1, 1], [], []>} : vector<32x128xf32>, vector<128x32xf32>, vector<32x32xf32> -> vector<32x32xf32>
    %c1288 = arith.constant 1288 : index
    %c0_44 = arith.constant 0 : index
    %104 = vector.load %arg2[%c1288, %c0_44] : memref<2432x128xf32, #tpu.memory_space<vmem>>, vector<1x32xf32>
    %105 = vector.broadcast %104 : vector<1x32xf32> to vector<32x32xf32>
    %106 = arith.addf %103, %105 : vector<32x32xf32>
    %107 = arith.addf %94, %106 : vector<32x32xf32>
    %cst_45 = arith.constant dense<0.000000e+00> : vector<32xf32>
    %108 = vector.multi_reduction <add>, %107, %cst_45 [1] : vector<32x32xf32> to vector<32xf32>
    %109 = vector.shape_cast %108 : vector<32xf32> to vector<32x1xf32>
    %cst_46 = arith.constant 3.200000e+01 : f32
    %110 = vector.broadcast %cst_46 : f32 to vector<32x1xf32>
    %111 = arith.divf %109, %110 : vector<32x1xf32>
    %112 = vector.broadcast %111 : vector<32x1xf32> to vector<32x32xf32>
    %113 = arith.subf %107, %112 : vector<32x32xf32>
    %114 = arith.mulf %113, %113 : vector<32x32xf32>
    %cst_47 = arith.constant dense<0.000000e+00> : vector<32xf32>
    %115 = vector.multi_reduction <add>, %114, %cst_47 [1] : vector<32x32xf32> to vector<32xf32>
    %116 = vector.shape_cast %115 : vector<32xf32> to vector<32x1xf32>
    %cst_48 = arith.constant 3.200000e+01 : f32
    %117 = vector.broadcast %cst_48 : f32 to vector<32x1xf32>
    %118 = arith.divf %116, %117 : vector<32x1xf32>
    %cst_49 = arith.constant 9.99999974E-6 : f32
    %119 = vector.broadcast %cst_49 : f32 to vector<32x1xf32>
    %120 = arith.addf %118, %119 : vector<32x1xf32>
    %121 = math.rsqrt %120 : vector<32x1xf32>
    %122 = vector.broadcast %121 : vector<32x1xf32> to vector<32x32xf32>
    %123 = arith.mulf %113, %122 : vector<32x32xf32>
    %c1312 = arith.constant 1312 : index
    %c0_50 = arith.constant 0 : index
    %124 = vector.load %arg2[%c1312, %c0_50] : memref<2432x128xf32, #tpu.memory_space<vmem>>, vector<1x32xf32>
    %125 = vector.broadcast %124 : vector<1x32xf32> to vector<32x32xf32>
    %126 = arith.mulf %123, %125 : vector<32x32xf32>
    %c1320 = arith.constant 1320 : index
    %c0_51 = arith.constant 0 : index
    %127 = vector.load %arg2[%c1320, %c0_51] : memref<2432x128xf32, #tpu.memory_space<vmem>>, vector<1x32xf32>
    %128 = vector.broadcast %127 : vector<1x32xf32> to vector<32x32xf32>
    %129 = arith.addf %126, %128 : vector<32x32xf32>
    %c1328 = arith.constant 1328 : index
    %c0_52 = arith.constant 0 : index
    %130 = vector.load %arg2[%c1328, %c0_52] : memref<2432x128xf32, #tpu.memory_space<vmem>>, vector<32x16xf32>
    %cst_53 = arith.constant dense<0.000000e+00> : vector<32x16xf32>
    %131 = tpu.matmul %129, %130, %cst_53 {dimension_numbers = #tpu.dot_dimension_numbers<[1], [0], [0], [1], [0, 0, 1, 1], [], []>} : vector<32x32xf32>, vector<32x16xf32>, vector<32x16xf32> -> vector<32x16xf32>
    %c1424 = arith.constant 1424 : index
    %c0_54 = arith.constant 0 : index
    %132 = vector.load %arg2[%c1424, %c0_54] : memref<2432x128xf32, #tpu.memory_space<vmem>>, vector<1x16xf32>
    %133 = vector.broadcast %132 : vector<1x16xf32> to vector<32x16xf32>
    %134 = arith.addf %131, %133 : vector<32x16xf32>
    %135 = vector.shape_cast %134 : vector<32x16xf32> to vector<8x4x16xf32>
    %c1360 = arith.constant 1360 : index
    %c0_55 = arith.constant 0 : index
    %136 = vector.load %arg2[%c1360, %c0_55] : memref<2432x128xf32, #tpu.memory_space<vmem>>, vector<32x16xf32>
    %cst_56 = arith.constant dense<0.000000e+00> : vector<32x16xf32>
    %137 = tpu.matmul %129, %136, %cst_56 {dimension_numbers = #tpu.dot_dimension_numbers<[1], [0], [0], [1], [0, 0, 1, 1], [], []>} : vector<32x32xf32>, vector<32x16xf32>, vector<32x16xf32> -> vector<32x16xf32>
    %c1432 = arith.constant 1432 : index
    %c0_57 = arith.constant 0 : index
    %138 = vector.load %arg2[%c1432, %c0_57] : memref<2432x128xf32, #tpu.memory_space<vmem>>, vector<1x16xf32>
    %139 = vector.broadcast %138 : vector<1x16xf32> to vector<32x16xf32>
    %140 = arith.addf %137, %139 : vector<32x16xf32>
    %141 = vector.shape_cast %140 : vector<32x16xf32> to vector<8x4x16xf32>
    %c1392 = arith.constant 1392 : index
    %c0_58 = arith.constant 0 : index
    %142 = vector.load %arg2[%c1392, %c0_58] : memref<2432x128xf32, #tpu.memory_space<vmem>>, vector<32x16xf32>
    %cst_59 = arith.constant dense<0.000000e+00> : vector<32x16xf32>
    %143 = tpu.matmul %129, %142, %cst_59 {dimension_numbers = #tpu.dot_dimension_numbers<[1], [0], [0], [1], [0, 0, 1, 1], [], []>} : vector<32x32xf32>, vector<32x16xf32>, vector<32x16xf32> -> vector<32x16xf32>
    %c1440 = arith.constant 1440 : index
    %c0_60 = arith.constant 0 : index
    %144 = vector.load %arg2[%c1440, %c0_60] : memref<2432x128xf32, #tpu.memory_space<vmem>>, vector<1x16xf32>
    %145 = vector.broadcast %144 : vector<1x16xf32> to vector<32x16xf32>
    %146 = arith.addf %143, %145 : vector<32x16xf32>
    %147 = vector.shape_cast %146 : vector<32x16xf32> to vector<8x4x16xf32>
    %c1464 = arith.constant 1464 : index
    %c0_61 = arith.constant 0 : index
    %148 = vector.load %arg2[%c1464, %c0_61] : memref<2432x128xf32, #tpu.memory_space<vmem>>, vector<32x16xf32>
    %cst_62 = arith.constant dense<0.000000e+00> : vector<32x16xf32>
    %149 = tpu.matmul %129, %148, %cst_62 {dimension_numbers = #tpu.dot_dimension_numbers<[1], [0], [0], [1], [0, 0, 1, 1], [], []>} : vector<32x32xf32>, vector<32x16xf32>, vector<32x16xf32> -> vector<32x16xf32>
    %c1560 = arith.constant 1560 : index
    %c0_63 = arith.constant 0 : index
    %150 = vector.load %arg2[%c1560, %c0_63] : memref<2432x128xf32, #tpu.memory_space<vmem>>, vector<1x16xf32>
    %151 = vector.broadcast %150 : vector<1x16xf32> to vector<32x16xf32>
    %152 = arith.addf %149, %151 : vector<32x16xf32>
    %153 = vector.shape_cast %152 : vector<32x16xf32> to vector<8x4x16xf32>
    %c1496 = arith.constant 1496 : index
    %c0_64 = arith.constant 0 : index
    %154 = vector.load %arg2[%c1496, %c0_64] : memref<2432x128xf32, #tpu.memory_space<vmem>>, vector<32x16xf32>
    %cst_65 = arith.constant dense<0.000000e+00> : vector<32x16xf32>
    %155 = tpu.matmul %129, %154, %cst_65 {dimension_numbers = #tpu.dot_dimension_numbers<[1], [0], [0], [1], [0, 0, 1, 1], [], []>} : vector<32x32xf32>, vector<32x16xf32>, vector<32x16xf32> -> vector<32x16xf32>
    %c1568 = arith.constant 1568 : index
    %c0_66 = arith.constant 0 : index
    %156 = vector.load %arg2[%c1568, %c0_66] : memref<2432x128xf32, #tpu.memory_space<vmem>>, vector<1x16xf32>
    %157 = vector.broadcast %156 : vector<1x16xf32> to vector<32x16xf32>
    %158 = arith.addf %155, %157 : vector<32x16xf32>
    %159 = vector.shape_cast %158 : vector<32x16xf32> to vector<8x4x16xf32>
    %c1528 = arith.constant 1528 : index
    %c0_67 = arith.constant 0 : index
    %160 = vector.load %arg2[%c1528, %c0_67] : memref<2432x128xf32, #tpu.memory_space<vmem>>, vector<32x16xf32>
    %cst_68 = arith.constant dense<0.000000e+00> : vector<32x16xf32>
    %161 = tpu.matmul %129, %160, %cst_68 {dimension_numbers = #tpu.dot_dimension_numbers<[1], [0], [0], [1], [0, 0, 1, 1], [], []>} : vector<32x32xf32>, vector<32x16xf32>, vector<32x16xf32> -> vector<32x16xf32>
    %c1576 = arith.constant 1576 : index
    %c0_69 = arith.constant 0 : index
    %162 = vector.load %arg2[%c1576, %c0_69] : memref<2432x128xf32, #tpu.memory_space<vmem>>, vector<1x16xf32>
    %163 = vector.broadcast %162 : vector<1x16xf32> to vector<32x16xf32>
    %164 = arith.addf %161, %163 : vector<32x16xf32>
    %165 = vector.shape_cast %164 : vector<32x16xf32> to vector<8x4x16xf32>
    %166 = tpu.concatenate %135, %153 in 0 : vector<8x4x16xf32>, vector<8x4x16xf32> -> vector<16x4x16xf32>
    %167 = tpu.concatenate %141, %159 in 0 : vector<8x4x16xf32>, vector<8x4x16xf32> -> vector<16x4x16xf32>
    %168 = tpu.concatenate %147, %165 in 0 : vector<8x4x16xf32>, vector<8x4x16xf32> -> vector<16x4x16xf32>
    "tpu.trace_start"() <{level = 10 : i32, message = "bqd,bkd->bqk"}> : () -> ()
    %cst_70 = arith.constant dense<0.000000e+00> : vector<16x4x4xf32>
    %169 = tpu.matmul %166, %167, %cst_70 {dimension_numbers = #tpu.dot_dimension_numbers<[2], [2], [1], [1], [0, 0, 0, 1, 1, 1], [0], [0]>} : vector<16x4x16xf32>, vector<16x4x16xf32>, vector<16x4x4xf32> -> vector<16x4x4xf32>
    "tpu.trace_stop"() : () -> ()
    %cst_71 = arith.constant 2.500000e-01 : f32
    %170 = vector.broadcast %cst_71 : f32 to vector<16x4x4xf32>
    %171 = arith.mulf %169, %170 : vector<16x4x4xf32>
    %cst_72 = arith.constant dense<0xFF800000> : vector<16x4xf32>
    %172 = vector.multi_reduction <maximumf>, %171, %cst_72 [2] : vector<16x4x4xf32> to vector<16x4xf32>
    %173 = vector.shape_cast %172 : vector<16x4xf32> to vector<16x4x1xf32>
    %174 = vector.broadcast %173 : vector<16x4x1xf32> to vector<16x4x4xf32>
    %175 = arith.subf %171, %174 : vector<16x4x4xf32>
    %176 = math.exp %175 : vector<16x4x4xf32>
    %cst_73 = arith.constant dense<0.000000e+00> : vector<16x4xf32>
    %177 = vector.multi_reduction <add>, %176, %cst_73 [2] : vector<16x4x4xf32> to vector<16x4xf32>
    %178 = vector.shape_cast %177 : vector<16x4xf32> to vector<16x4x1xf32>
    %179 = vector.broadcast %178 : vector<16x4x1xf32> to vector<16x4x4xf32>
    %180 = arith.divf %176, %179 : vector<16x4x4xf32>
    "tpu.trace_start"() <{level = 10 : i32, message = "bqk,bkd->bqd"}> : () -> ()
    %cst_74 = arith.constant dense<0.000000e+00> : vector<16x4x16xf32>
    %181 = tpu.matmul %180, %168, %cst_74 {dimension_numbers = #tpu.dot_dimension_numbers<[2], [1], [1], [2], [0, 0, 0, 1, 1, 2], [0], [0]>} : vector<16x4x4xf32>, vector<16x4x16xf32>, vector<16x4x16xf32> -> vector<16x4x16xf32>
    "tpu.trace_stop"() : () -> ()
    %c1600 = arith.constant 1600 : index
    %c0_75 = arith.constant 0 : index
    %182 = vector.load %arg2[%c1600, %c0_75] : memref<2432x128xf32, #tpu.memory_space<vmem>>, vector<1x32xf32>
    %183 = vector.extract_strided_slice %181 {offsets = [0, 0, 0], sizes = [8, 4, 16], strides = [1, 1, 1]} : vector<16x4x16xf32> to vector<8x4x16xf32>
    %184 = vector.shape_cast %183 : vector<8x4x16xf32> to vector<32x16xf32>
    %c1448 = arith.constant 1448 : index
    %c0_76 = arith.constant 0 : index
    %185 = vector.load %arg2[%c1448, %c0_76] : memref<2432x128xf32, #tpu.memory_space<vmem>>, vector<16x32xf32>
    %cst_77 = arith.constant dense<0.000000e+00> : vector<32x32xf32>
    %186 = tpu.matmul %184, %185, %cst_77 {dimension_numbers = #tpu.dot_dimension_numbers<[1], [0], [0], [1], [0, 0, 1, 1], [], []>} : vector<32x16xf32>, vector<16x32xf32>, vector<32x32xf32> -> vector<32x32xf32>
    %187 = vector.broadcast %182 : vector<1x32xf32> to vector<32x32xf32>
    %188 = arith.addf %187, %186 : vector<32x32xf32>
    %189 = vector.extract_strided_slice %181 {offsets = [8, 0, 0], sizes = [8, 4, 16], strides = [1, 1, 1]} : vector<16x4x16xf32> to vector<8x4x16xf32>
    %190 = vector.shape_cast %189 : vector<8x4x16xf32> to vector<32x16xf32>
    %c1584 = arith.constant 1584 : index
    %c0_78 = arith.constant 0 : index
    %191 = vector.load %arg2[%c1584, %c0_78] : memref<2432x128xf32, #tpu.memory_space<vmem>>, vector<16x32xf32>
    %cst_79 = arith.constant dense<0.000000e+00> : vector<32x32xf32>
    %192 = tpu.matmul %190, %191, %cst_79 {dimension_numbers = #tpu.dot_dimension_numbers<[1], [0], [0], [1], [0, 0, 1, 1], [], []>} : vector<32x16xf32>, vector<16x32xf32>, vector<32x32xf32> -> vector<32x32xf32>
    %193 = arith.addf %188, %192 : vector<32x32xf32>
    %194 = arith.addf %129, %193 : vector<32x32xf32>
    %cst_80 = arith.constant dense<0.000000e+00> : vector<32xf32>
    %195 = vector.multi_reduction <add>, %194, %cst_80 [1] : vector<32x32xf32> to vector<32xf32>
    %196 = vector.shape_cast %195 : vector<32xf32> to vector<32x1xf32>
    %cst_81 = arith.constant 3.200000e+01 : f32
    %197 = vector.broadcast %cst_81 : f32 to vector<32x1xf32>
    %198 = arith.divf %196, %197 : vector<32x1xf32>
    %199 = vector.broadcast %198 : vector<32x1xf32> to vector<32x32xf32>
    %200 = arith.subf %194, %199 : vector<32x32xf32>
    %201 = arith.mulf %200, %200 : vector<32x32xf32>
    %cst_82 = arith.constant dense<0.000000e+00> : vector<32xf32>
    %202 = vector.multi_reduction <add>, %201, %cst_82 [1] : vector<32x32xf32> to vector<32xf32>
    %203 = vector.shape_cast %202 : vector<32xf32> to vector<32x1xf32>
    %cst_83 = arith.constant 3.200000e+01 : f32
    %204 = vector.broadcast %cst_83 : f32 to vector<32x1xf32>
    %205 = arith.divf %203, %204 : vector<32x1xf32>
    %cst_84 = arith.constant 9.99999974E-6 : f32
    %206 = vector.broadcast %cst_84 : f32 to vector<32x1xf32>
    %207 = arith.addf %205, %206 : vector<32x1xf32>
    %208 = math.rsqrt %207 : vector<32x1xf32>
    %209 = vector.broadcast %208 : vector<32x1xf32> to vector<32x32xf32>
    %210 = arith.mulf %200, %209 : vector<32x32xf32>
    %c1784 = arith.constant 1784 : index
    %c0_85 = arith.constant 0 : index
    %211 = vector.load %arg2[%c1784, %c0_85] : memref<2432x128xf32, #tpu.memory_space<vmem>>, vector<1x32xf32>
    %212 = vector.broadcast %211 : vector<1x32xf32> to vector<32x32xf32>
    %213 = arith.mulf %210, %212 : vector<32x32xf32>
    %c1792 = arith.constant 1792 : index
    %c0_86 = arith.constant 0 : index
    %214 = vector.load %arg2[%c1792, %c0_86] : memref<2432x128xf32, #tpu.memory_space<vmem>>, vector<1x32xf32>
    %215 = vector.broadcast %214 : vector<1x32xf32> to vector<32x32xf32>
    %216 = arith.addf %213, %215 : vector<32x32xf32>
    %c1608 = arith.constant 1608 : index
    %c0_87 = arith.constant 0 : index
    %217 = vector.load %arg2[%c1608, %c0_87] : memref<2432x128xf32, #tpu.memory_space<vmem>>, vector<32x128xf32>
    %cst_88 = arith.constant dense<0.000000e+00> : vector<32x128xf32>
    %218 = tpu.matmul %216, %217, %cst_88 {dimension_numbers = #tpu.dot_dimension_numbers<[1], [0], [0], [1], [0, 0, 1, 1], [], []>} : vector<32x32xf32>, vector<32x128xf32>, vector<32x128xf32> -> vector<32x128xf32>
    %c1640 = arith.constant 1640 : index
    %c0_89 = arith.constant 0 : index
    %219 = vector.load %arg2[%c1640, %c0_89] : memref<2432x128xf32, #tpu.memory_space<vmem>>, vector<1x128xf32>
    %220 = vector.broadcast %219 : vector<1x128xf32> to vector<32x128xf32>
    %221 = arith.addf %218, %220 : vector<32x128xf32>
    %cst_90 = arith.constant 0.000000e+00 : f32
    %222 = vector.broadcast %cst_90 : f32 to vector<32x128xf32>
    %223 = arith.maximumf %221, %222 : vector<32x128xf32>
    %c1648 = arith.constant 1648 : index
    %c0_91 = arith.constant 0 : index
    %224 = vector.load %arg2[%c1648, %c0_91] : memref<2432x128xf32, #tpu.memory_space<vmem>>, vector<128x32xf32>
    %cst_92 = arith.constant dense<0.000000e+00> : vector<32x32xf32>
    %225 = tpu.matmul %223, %224, %cst_92 {dimension_numbers = #tpu.dot_dimension_numbers<[1], [0], [0], [1], [0, 0, 1, 1], [], []>} : vector<32x128xf32>, vector<128x32xf32>, vector<32x32xf32> -> vector<32x32xf32>
    %c1776 = arith.constant 1776 : index
    %c0_93 = arith.constant 0 : index
    %226 = vector.load %arg2[%c1776, %c0_93] : memref<2432x128xf32, #tpu.memory_space<vmem>>, vector<1x32xf32>
    %227 = vector.broadcast %226 : vector<1x32xf32> to vector<32x32xf32>
    %228 = arith.addf %225, %227 : vector<32x32xf32>
    %229 = arith.addf %216, %228 : vector<32x32xf32>
    %cst_94 = arith.constant dense<0.000000e+00> : vector<32xf32>
    %230 = vector.multi_reduction <add>, %229, %cst_94 [1] : vector<32x32xf32> to vector<32xf32>
    %231 = vector.shape_cast %230 : vector<32xf32> to vector<32x1xf32>
    %cst_95 = arith.constant 3.200000e+01 : f32
    %232 = vector.broadcast %cst_95 : f32 to vector<32x1xf32>
    %233 = arith.divf %231, %232 : vector<32x1xf32>
    %234 = vector.broadcast %233 : vector<32x1xf32> to vector<32x32xf32>
    %235 = arith.subf %229, %234 : vector<32x32xf32>
    %236 = arith.mulf %235, %235 : vector<32x32xf32>
    %cst_96 = arith.constant dense<0.000000e+00> : vector<32xf32>
    %237 = vector.multi_reduction <add>, %236, %cst_96 [1] : vector<32x32xf32> to vector<32xf32>
    %238 = vector.shape_cast %237 : vector<32xf32> to vector<32x1xf32>
    %cst_97 = arith.constant 3.200000e+01 : f32
    %239 = vector.broadcast %cst_97 : f32 to vector<32x1xf32>
    %240 = arith.divf %238, %239 : vector<32x1xf32>
    %cst_98 = arith.constant 9.99999974E-6 : f32
    %241 = vector.broadcast %cst_98 : f32 to vector<32x1xf32>
    %242 = arith.addf %240, %241 : vector<32x1xf32>
    %243 = math.rsqrt %242 : vector<32x1xf32>
    %244 = vector.broadcast %243 : vector<32x1xf32> to vector<32x32xf32>
    %245 = arith.mulf %235, %244 : vector<32x32xf32>
    %c1800 = arith.constant 1800 : index
    %c0_99 = arith.constant 0 : index
    %246 = vector.load %arg2[%c1800, %c0_99] : memref<2432x128xf32, #tpu.memory_space<vmem>>, vector<1x32xf32>
    %247 = vector.broadcast %246 : vector<1x32xf32> to vector<32x32xf32>
    %248 = arith.mulf %245, %247 : vector<32x32xf32>
    %c1808 = arith.constant 1808 : index
    %c0_100 = arith.constant 0 : index
    %249 = vector.load %arg2[%c1808, %c0_100] : memref<2432x128xf32, #tpu.memory_space<vmem>>, vector<1x32xf32>
    %250 = vector.broadcast %249 : vector<1x32xf32> to vector<32x32xf32>
    %251 = arith.addf %248, %250 : vector<32x32xf32>
    %cst_101 = arith.constant dense<0.000000e+00> : vector<32xf32>
    %252 = vector.multi_reduction <add>, %251, %cst_101 [1] : vector<32x32xf32> to vector<32xf32>
    %253 = vector.shape_cast %252 : vector<32xf32> to vector<32x1xf32>
    %cst_102 = arith.constant 3.200000e+01 : f32
    %254 = vector.broadcast %cst_102 : f32 to vector<32x1xf32>
    %255 = arith.divf %253, %254 : vector<32x1xf32>
    %256 = vector.broadcast %255 : vector<32x1xf32> to vector<32x32xf32>
    %257 = arith.subf %251, %256 : vector<32x32xf32>
    %258 = arith.mulf %257, %257 : vector<32x32xf32>
    %cst_103 = arith.constant dense<0.000000e+00> : vector<32xf32>
    %259 = vector.multi_reduction <add>, %258, %cst_103 [1] : vector<32x32xf32> to vector<32xf32>
    %260 = vector.shape_cast %259 : vector<32xf32> to vector<32x1xf32>
    %cst_104 = arith.constant 3.200000e+01 : f32
    %261 = vector.broadcast %cst_104 : f32 to vector<32x1xf32>
    %262 = arith.divf %260, %261 : vector<32x1xf32>
    %cst_105 = arith.constant 9.99999974E-6 : f32
    %263 = vector.broadcast %cst_105 : f32 to vector<32x1xf32>
    %264 = arith.addf %262, %263 : vector<32x1xf32>
    %265 = math.rsqrt %264 : vector<32x1xf32>
    %266 = vector.broadcast %265 : vector<32x1xf32> to vector<32x32xf32>
    %267 = arith.mulf %257, %266 : vector<32x32xf32>
    %c1816 = arith.constant 1816 : index
    %c0_106 = arith.constant 0 : index
    %268 = vector.load %arg2[%c1816, %c0_106] : memref<2432x128xf32, #tpu.memory_space<vmem>>, vector<1x32xf32>
    %269 = vector.broadcast %268 : vector<1x32xf32> to vector<32x32xf32>
    %270 = arith.mulf %267, %269 : vector<32x32xf32>
    %c1824 = arith.constant 1824 : index
    %c0_107 = arith.constant 0 : index
    %271 = vector.load %arg2[%c1824, %c0_107] : memref<2432x128xf32, #tpu.memory_space<vmem>>, vector<1x32xf32>
    %272 = vector.broadcast %271 : vector<1x32xf32> to vector<32x32xf32>
    %273 = arith.addf %270, %272 : vector<32x32xf32>
    %274 = vector.shape_cast %273 : vector<32x32xf32> to vector<8x4x32xf32>
    %c0_108 = arith.constant 0 : index
    %c0_109 = arith.constant 0 : index
    %275 = vector.load %arg1[%c0_108, %c0_109] : memref<8x768xf32, #tpu.memory_space<vmem>>, vector<8x768xf32>
    %c56 = arith.constant 56 : index
    %c0_110 = arith.constant 0 : index
    %276 = vector.load %arg2[%c56, %c0_110] : memref<2432x128xf32, #tpu.memory_space<vmem>>, vector<768x64xf32>
    %cst_111 = arith.constant dense<0.000000e+00> : vector<8x64xf32>
    %277 = tpu.matmul %275, %276, %cst_111 {dimension_numbers = #tpu.dot_dimension_numbers<[1], [0], [0], [1], [0, 0, 1, 1], [], []>} : vector<8x768xf32>, vector<768x64xf32>, vector<8x64xf32> -> vector<8x64xf32>
    %c824 = arith.constant 824 : index
    %c0_112 = arith.constant 0 : index
    %278 = vector.load %arg2[%c824, %c0_112] : memref<2432x128xf32, #tpu.memory_space<vmem>>, vector<1x64xf32>
    %279 = vector.broadcast %278 : vector<1x64xf32> to vector<8x64xf32>
    %280 = arith.addf %277, %279 : vector<8x64xf32>
    %c832 = arith.constant 832 : index
    %c0_113 = arith.constant 0 : index
    %281 = vector.load %arg2[%c832, %c0_113] : memref<2432x128xf32, #tpu.memory_space<vmem>>, vector<4x8xf32>
    %cst_114 = arith.constant dense<0.000000e+00> : vector<4x64xf32>
    %282 = tpu.matmul %281, %280, %cst_114 {dimension_numbers = #tpu.dot_dimension_numbers<[1], [0], [0], [1], [0, 0, 1, 1], [], []>} : vector<4x8xf32>, vector<8x64xf32>, vector<4x64xf32> -> vector<4x64xf32>
    %c1832 = arith.constant 1832 : index
    %c0_115 = arith.constant 0 : index
    %283 = vector.load %arg2[%c1832, %c0_115] : memref<2432x128xf32, #tpu.memory_space<vmem>>, vector<32x16xf32>
    %cst_116 = arith.constant dense<0.000000e+00> : vector<32x16xf32>
    %284 = tpu.matmul %273, %283, %cst_116 {dimension_numbers = #tpu.dot_dimension_numbers<[1], [0], [0], [1], [0, 0, 1, 1], [], []>} : vector<32x32xf32>, vector<32x16xf32>, vector<32x16xf32> -> vector<32x16xf32>
    %285 = math.tanh %284 : vector<32x16xf32>
    %c1864 = arith.constant 1864 : index
    %c0_117 = arith.constant 0 : index
    %286 = vector.load %arg2[%c1864, %c0_117] : memref<2432x128xf32, #tpu.memory_space<vmem>>, vector<16x3xf32>
    %cst_118 = arith.constant dense<0.000000e+00> : vector<32x3xf32>
    %287 = tpu.matmul %285, %286, %cst_118 {dimension_numbers = #tpu.dot_dimension_numbers<[1], [0], [0], [1], [0, 0, 1, 1], [], []>} : vector<32x16xf32>, vector<16x3xf32>, vector<32x3xf32> -> vector<32x3xf32>
    %288 = vector.shape_cast %287 : vector<32x3xf32> to vector<8x4x3xf32>
    %cst_119 = arith.constant dense<0xFF800000> : vector<4x3xf32>
    %289 = vector.multi_reduction <maximumf>, %288, %cst_119 [0] : vector<8x4x3xf32> to vector<4x3xf32>
    %290 = vector.shape_cast %289 : vector<4x3xf32> to vector<1x4x3xf32>
    %291 = vector.broadcast %290 : vector<1x4x3xf32> to vector<8x4x3xf32>
    %292 = arith.subf %288, %291 : vector<8x4x3xf32>
    %293 = math.exp %292 : vector<8x4x3xf32>
    %cst_120 = arith.constant dense<0.000000e+00> : vector<4x3xf32>
    %294 = vector.multi_reduction <add>, %293, %cst_120 [0] : vector<8x4x3xf32> to vector<4x3xf32>
    %295 = vector.shape_cast %294 : vector<4x3xf32> to vector<1x4x3xf32>
    %296 = vector.broadcast %295 : vector<1x4x3xf32> to vector<8x4x3xf32>
    %297 = arith.divf %293, %296 : vector<8x4x3xf32>
    %cst_121 = arith.constant dense<0.000000e+00> : vector<8x4xf32>
    %298 = vector.multi_reduction <add>, %297, %cst_121 [2] : vector<8x4x3xf32> to vector<8x4xf32>
    %299 = vector.shape_cast %298 : vector<8x4xf32> to vector<8x4x1xf32>
    %cst_122 = arith.constant 3.000000e+00 : f32
    %300 = vector.broadcast %cst_122 : f32 to vector<8x4x1xf32>
    %301 = arith.divf %299, %300 : vector<8x4x1xf32>
    %302 = vector.broadcast %301 : vector<8x4x1xf32> to vector<8x4x32xf32>
    %303 = arith.mulf %302, %274 : vector<8x4x32xf32>
    %cst_123 = arith.constant dense<0.000000e+00> : vector<4x32xf32>
    %304 = vector.multi_reduction <add>, %303, %cst_123 [0] : vector<8x4x32xf32> to vector<4x32xf32>
    %305 = tpu.concatenate %282, %304 in 1 : vector<4x64xf32>, vector<4x32xf32> -> vector<4x96xf32>
    %c1880 = arith.constant 1880 : index
    %c0_124 = arith.constant 0 : index
    %306 = vector.load %arg2[%c1880, %c0_124] : memref<2432x128xf32, #tpu.memory_space<vmem>>, vector<96x32xf32>
    %cst_125 = arith.constant dense<0.000000e+00> : vector<4x32xf32>
    %307 = tpu.matmul %305, %306, %cst_125 {dimension_numbers = #tpu.dot_dimension_numbers<[1], [0], [0], [1], [0, 0, 1, 1], [], []>} : vector<4x96xf32>, vector<96x32xf32>, vector<4x32xf32> -> vector<4x32xf32>
    %c1976 = arith.constant 1976 : index
    %c0_126 = arith.constant 0 : index
    %308 = vector.load %arg2[%c1976, %c0_126] : memref<2432x128xf32, #tpu.memory_space<vmem>>, vector<1x32xf32>
    %309 = vector.broadcast %308 : vector<1x32xf32> to vector<4x32xf32>
    %310 = arith.addf %307, %309 : vector<4x32xf32>
    %cst_127 = arith.constant 0.000000e+00 : f32
    %311 = vector.broadcast %cst_127 : f32 to vector<4x32xf32>
    %312 = arith.maximumf %310, %311 : vector<4x32xf32>
    %c1984 = arith.constant 1984 : index
    %c0_128 = arith.constant 0 : index
    %313 = vector.load %arg2[%c1984, %c0_128] : memref<2432x128xf32, #tpu.memory_space<vmem>>, vector<32x32xf32>
    %cst_129 = arith.constant dense<0.000000e+00> : vector<4x32xf32>
    %314 = tpu.matmul %312, %313, %cst_129 {dimension_numbers = #tpu.dot_dimension_numbers<[1], [0], [0], [1], [0, 0, 1, 1], [], []>} : vector<4x32xf32>, vector<32x32xf32>, vector<4x32xf32> -> vector<4x32xf32>
    %c2016 = arith.constant 2016 : index
    %c0_130 = arith.constant 0 : index
    %315 = vector.load %arg2[%c2016, %c0_130] : memref<2432x128xf32, #tpu.memory_space<vmem>>, vector<1x32xf32>
    %316 = vector.broadcast %315 : vector<1x32xf32> to vector<4x32xf32>
    %317 = arith.addf %314, %316 : vector<4x32xf32>
    %cst_131 = arith.constant 0.000000e+00 : f32
    %318 = vector.broadcast %cst_131 : f32 to vector<4x32xf32>
    %319 = arith.maximumf %317, %318 : vector<4x32xf32>
    %c2024 = arith.constant 2024 : index
    %c0_132 = arith.constant 0 : index
    %320 = vector.load %arg2[%c2024, %c0_132] : memref<2432x128xf32, #tpu.memory_space<vmem>>, vector<32x128xf32>
    %cst_133 = arith.constant dense<0.000000e+00> : vector<4x128xf32>
    %321 = tpu.matmul %319, %320, %cst_133 {dimension_numbers = #tpu.dot_dimension_numbers<[1], [0], [0], [1], [0, 0, 1, 1], [], []>} : vector<4x32xf32>, vector<32x128xf32>, vector<4x128xf32> -> vector<4x128xf32>
    %c2056 = arith.constant 2056 : index
    %c0_134 = arith.constant 0 : index
    %322 = vector.load %arg2[%c2056, %c0_134] : memref<2432x128xf32, #tpu.memory_space<vmem>>, vector<32x16xf32>
    %cst_135 = arith.constant dense<0.000000e+00> : vector<32x16xf32>
    %323 = tpu.matmul %273, %322, %cst_135 {dimension_numbers = #tpu.dot_dimension_numbers<[1], [0], [0], [1], [0, 0, 1, 1], [], []>} : vector<32x32xf32>, vector<32x16xf32>, vector<32x16xf32> -> vector<32x16xf32>
    %324 = math.tanh %323 : vector<32x16xf32>
    %c2088 = arith.constant 2088 : index
    %c0_136 = arith.constant 0 : index
    %325 = vector.load %arg2[%c2088, %c0_136] : memref<2432x128xf32, #tpu.memory_space<vmem>>, vector<16x5xf32>
    %cst_137 = arith.constant dense<0.000000e+00> : vector<32x5xf32>
    %326 = tpu.matmul %324, %325, %cst_137 {dimension_numbers = #tpu.dot_dimension_numbers<[1], [0], [0], [1], [0, 0, 1, 1], [], []>} : vector<32x16xf32>, vector<16x5xf32>, vector<32x5xf32> -> vector<32x5xf32>
    %327 = vector.shape_cast %326 : vector<32x5xf32> to vector<8x4x5xf32>
    %cst_138 = arith.constant dense<0xFF800000> : vector<4x5xf32>
    %328 = vector.multi_reduction <maximumf>, %327, %cst_138 [0] : vector<8x4x5xf32> to vector<4x5xf32>
    %329 = vector.shape_cast %328 : vector<4x5xf32> to vector<1x4x5xf32>
    %330 = vector.broadcast %329 : vector<1x4x5xf32> to vector<8x4x5xf32>
    %331 = arith.subf %327, %330 : vector<8x4x5xf32>
    %332 = math.exp %331 : vector<8x4x5xf32>
    %cst_139 = arith.constant dense<0.000000e+00> : vector<4x5xf32>
    %333 = vector.multi_reduction <add>, %332, %cst_139 [0] : vector<8x4x5xf32> to vector<4x5xf32>
    %334 = vector.shape_cast %333 : vector<4x5xf32> to vector<1x4x5xf32>
    %335 = vector.broadcast %334 : vector<1x4x5xf32> to vector<8x4x5xf32>
    %336 = arith.divf %332, %335 : vector<8x4x5xf32>
    %cst_140 = arith.constant dense<0.000000e+00> : vector<8x4xf32>
    %337 = vector.multi_reduction <add>, %336, %cst_140 [2] : vector<8x4x5xf32> to vector<8x4xf32>
    %338 = vector.shape_cast %337 : vector<8x4xf32> to vector<8x4x1xf32>
    %cst_141 = arith.constant 5.000000e+00 : f32
    %339 = vector.broadcast %cst_141 : f32 to vector<8x4x1xf32>
    %340 = arith.divf %338, %339 : vector<8x4x1xf32>
    %341 = vector.broadcast %340 : vector<8x4x1xf32> to vector<8x4x32xf32>
    %342 = arith.mulf %341, %274 : vector<8x4x32xf32>
    %cst_142 = arith.constant dense<0.000000e+00> : vector<4x32xf32>
    %343 = vector.multi_reduction <add>, %342, %cst_142 [0] : vector<8x4x32xf32> to vector<4x32xf32>
    %344 = tpu.concatenate %282, %343, %312 in 1 : vector<4x64xf32>, vector<4x32xf32>, vector<4x32xf32> -> vector<4x128xf32>
    %c2104 = arith.constant 2104 : index
    %c0_143 = arith.constant 0 : index
    %345 = vector.load %arg2[%c2104, %c0_143] : memref<2432x128xf32, #tpu.memory_space<vmem>>, vector<128x32xf32>
    %cst_144 = arith.constant dense<0.000000e+00> : vector<4x32xf32>
    %346 = tpu.matmul %344, %345, %cst_144 {dimension_numbers = #tpu.dot_dimension_numbers<[1], [0], [0], [1], [0, 0, 1, 1], [], []>} : vector<4x128xf32>, vector<128x32xf32>, vector<4x32xf32> -> vector<4x32xf32>
    %c2232 = arith.constant 2232 : index
    %c0_145 = arith.constant 0 : index
    %347 = vector.load %arg2[%c2232, %c0_145] : memref<2432x128xf32, #tpu.memory_space<vmem>>, vector<1x32xf32>
    %348 = vector.broadcast %347 : vector<1x32xf32> to vector<4x32xf32>
    %349 = arith.addf %346, %348 : vector<4x32xf32>
    %cst_146 = arith.constant 0.000000e+00 : f32
    %350 = vector.broadcast %cst_146 : f32 to vector<4x32xf32>
    %351 = arith.maximumf %349, %350 : vector<4x32xf32>
    %c2240 = arith.constant 2240 : index
    %c0_147 = arith.constant 0 : index
    %352 = vector.load %arg2[%c2240, %c0_147] : memref<2432x128xf32, #tpu.memory_space<vmem>>, vector<32x32xf32>
    %cst_148 = arith.constant dense<0.000000e+00> : vector<4x32xf32>
    %353 = tpu.matmul %351, %352, %cst_148 {dimension_numbers = #tpu.dot_dimension_numbers<[1], [0], [0], [1], [0, 0, 1, 1], [], []>} : vector<4x32xf32>, vector<32x32xf32>, vector<4x32xf32> -> vector<4x32xf32>
    %c2272 = arith.constant 2272 : index
    %c0_149 = arith.constant 0 : index
    %354 = vector.load %arg2[%c2272, %c0_149] : memref<2432x128xf32, #tpu.memory_space<vmem>>, vector<1x32xf32>
    %355 = vector.broadcast %354 : vector<1x32xf32> to vector<4x32xf32>
    %356 = arith.addf %353, %355 : vector<4x32xf32>
    %cst_150 = arith.constant 0.000000e+00 : f32
    %357 = vector.broadcast %cst_150 : f32 to vector<4x32xf32>
    %358 = arith.maximumf %356, %357 : vector<4x32xf32>
    %c2280 = arith.constant 2280 : index
    %c0_151 = arith.constant 0 : index
    %359 = vector.load %arg2[%c2280, %c0_151] : memref<2432x128xf32, #tpu.memory_space<vmem>>, vector<32x128xf32>
    %cst_152 = arith.constant dense<0.000000e+00> : vector<4x128xf32>
    %360 = tpu.matmul %358, %359, %cst_152 {dimension_numbers = #tpu.dot_dimension_numbers<[1], [0], [0], [1], [0, 0, 1, 1], [], []>} : vector<4x32xf32>, vector<32x128xf32>, vector<4x128xf32> -> vector<4x128xf32>
    %361 = arith.addf %321, %360 : vector<4x128xf32>
    %c2312 = arith.constant 2312 : index
    %c0_153 = arith.constant 0 : index
    %362 = vector.load %arg2[%c2312, %c0_153] : memref<2432x128xf32, #tpu.memory_space<vmem>>, vector<1x128xf32>
    %363 = vector.broadcast %362 : vector<1x128xf32> to vector<4x128xf32>
    %364 = arith.addf %361, %363 : vector<4x128xf32>
    %365 = arith.negf %364 : vector<4x128xf32>
    %366 = math.exp %365 : vector<4x128xf32>
    %cst_154 = arith.constant 1.000000e+00 : f32
    %367 = vector.broadcast %cst_154 : f32 to vector<4x128xf32>
    %368 = arith.addf %367, %366 : vector<4x128xf32>
    %369 = arith.divf %367, %368 : vector<4x128xf32>
    %c2328 = arith.constant 2328 : index
    %c0_155 = arith.constant 0 : index
    %370 = vector.load %arg2[%c2328, %c0_155] : memref<2432x128xf32, #tpu.memory_space<vmem>>, vector<3x4xf32>
    %371 = vector.shape_cast %370 : vector<3x4xf32> to vector<3x4x1xf32>
    %cst_156 = arith.constant 5.000000e-01 : f32
    %372 = vector.broadcast %cst_156 : f32 to vector<3x4x1xf32>
    %373 = arith.cmpf ogt, %371, %372 : vector<3x4x1xf32>
    %374 = vector.shape_cast %369 : vector<4x128xf32> to vector<1x4x128xf32>
    %cst_157 = arith.constant -1.000000e+30 : f32
    %375 = vector.shape_cast %373 : vector<3x4x1xi1> to vector<3x4x1xi1>
    %376 = vector.broadcast %375 : vector<3x4x1xi1> to vector<3x4x128xi1>
    %377 = vector.shape_cast %374 : vector<1x4x128xf32> to vector<1x4x128xf32>
    %378 = vector.broadcast %377 : vector<1x4x128xf32> to vector<3x4x128xf32>
    %379 = vector.broadcast %cst_157 : f32 to vector<3x4x128xf32>
    %380 = arith.select %376, %378, %379 : vector<3x4x128xi1>, vector<3x4x128xf32>
    %cst_158 = arith.constant dense<0xFF800000> : vector<3x128xf32>
    %381 = vector.multi_reduction <maximumf>, %380, %cst_158 [1] : vector<3x4x128xf32> to vector<3x128xf32>
    %c2320 = arith.constant 2320 : index
    %c0_159 = arith.constant 0 : index
    %382 = vector.load %arg2[%c2320, %c0_159] : memref<2432x128xf32, #tpu.memory_space<vmem>>, vector<3x4xf32>
    %cst_160 = arith.constant dense<0.000000e+00> : vector<3x32xf32>
    %383 = tpu.matmul %382, %351, %cst_160 {dimension_numbers = #tpu.dot_dimension_numbers<[1], [0], [0], [1], [0, 0, 1, 1], [], []>} : vector<3x4xf32>, vector<4x32xf32>, vector<3x32xf32> -> vector<3x32xf32>
    %c2344 = arith.constant 2344 : index
    %c0_161 = arith.constant 0 : index
    %384 = vector.load %arg2[%c2344, %c0_161] : memref<2432x128xf32, #tpu.memory_space<vmem>>, vector<2x3xf32>
    %385 = vector.shape_cast %384 : vector<2x3xf32> to vector<2x3x1xf32>
    %cst_162 = arith.constant 5.000000e-01 : f32
    %386 = vector.broadcast %cst_162 : f32 to vector<2x3x1xf32>
    %387 = arith.cmpf ogt, %385, %386 : vector<2x3x1xf32>
    %388 = vector.shape_cast %381 : vector<3x128xf32> to vector<1x3x128xf32>
    %cst_163 = arith.constant -1.000000e+30 : f32
    %389 = vector.shape_cast %387 : vector<2x3x1xi1> to vector<2x3x1xi1>
    %390 = vector.broadcast %389 : vector<2x3x1xi1> to vector<2x3x128xi1>
    %391 = vector.shape_cast %388 : vector<1x3x128xf32> to vector<1x3x128xf32>
    %392 = vector.broadcast %391 : vector<1x3x128xf32> to vector<2x3x128xf32>
    %393 = vector.broadcast %cst_163 : f32 to vector<2x3x128xf32>
    %394 = arith.select %390, %392, %393 : vector<2x3x128xi1>, vector<2x3x128xf32>
    %cst_164 = arith.constant dense<0xFF800000> : vector<2x128xf32>
    %395 = vector.multi_reduction <maximumf>, %394, %cst_164 [1] : vector<2x3x128xf32> to vector<2x128xf32>
    %c2336 = arith.constant 2336 : index
    %c0_165 = arith.constant 0 : index
    %396 = vector.load %arg2[%c2336, %c0_165] : memref<2432x128xf32, #tpu.memory_space<vmem>>, vector<2x3xf32>
    %cst_166 = arith.constant dense<0.000000e+00> : vector<2x32xf32>
    %397 = tpu.matmul %396, %383, %cst_166 {dimension_numbers = #tpu.dot_dimension_numbers<[1], [0], [0], [1], [0, 0, 1, 1], [], []>} : vector<2x3xf32>, vector<3x32xf32>, vector<2x32xf32> -> vector<2x32xf32>
    %c2352 = arith.constant 2352 : index
    %c0_167 = arith.constant 0 : index
    %398 = vector.load %arg2[%c2352, %c0_167] : memref<2432x128xf32, #tpu.memory_space<vmem>>, vector<32x128xf32>
    %cst_168 = arith.constant dense<0.000000e+00> : vector<3x128xf32>
    %399 = tpu.matmul %383, %398, %cst_168 {dimension_numbers = #tpu.dot_dimension_numbers<[1], [0], [0], [1], [0, 0, 1, 1], [], []>} : vector<3x32xf32>, vector<32x128xf32>, vector<3x128xf32> -> vector<3x128xf32>
    %c2384 = arith.constant 2384 : index
    %c0_169 = arith.constant 0 : index
    %400 = vector.load %arg2[%c2384, %c0_169] : memref<2432x128xf32, #tpu.memory_space<vmem>>, vector<1x128xf32>
    %401 = vector.broadcast %400 : vector<1x128xf32> to vector<3x128xf32>
    %402 = arith.addf %399, %401 : vector<3x128xf32>
    %403 = arith.negf %402 : vector<3x128xf32>
    %404 = math.exp %403 : vector<3x128xf32>
    %cst_170 = arith.constant 1.000000e+00 : f32
    %405 = vector.broadcast %cst_170 : f32 to vector<3x128xf32>
    %406 = arith.addf %405, %404 : vector<3x128xf32>
    %407 = arith.divf %405, %406 : vector<3x128xf32>
    %c2392 = arith.constant 2392 : index
    %c0_171 = arith.constant 0 : index
    %408 = vector.load %arg2[%c2392, %c0_171] : memref<2432x128xf32, #tpu.memory_space<vmem>>, vector<32x128xf32>
    %cst_172 = arith.constant dense<0.000000e+00> : vector<2x128xf32>
    %409 = tpu.matmul %397, %408, %cst_172 {dimension_numbers = #tpu.dot_dimension_numbers<[1], [0], [0], [1], [0, 0, 1, 1], [], []>} : vector<2x32xf32>, vector<32x128xf32>, vector<2x128xf32> -> vector<2x128xf32>
    %c2424 = arith.constant 2424 : index
    %c0_173 = arith.constant 0 : index
    %410 = vector.load %arg2[%c2424, %c0_173] : memref<2432x128xf32, #tpu.memory_space<vmem>>, vector<1x128xf32>
    %411 = vector.broadcast %410 : vector<1x128xf32> to vector<2x128xf32>
    %412 = arith.addf %409, %411 : vector<2x128xf32>
    %413 = arith.negf %412 : vector<2x128xf32>
    %414 = math.exp %413 : vector<2x128xf32>
    %cst_174 = arith.constant 1.000000e+00 : f32
    %415 = vector.broadcast %cst_174 : f32 to vector<2x128xf32>
    %416 = arith.addf %415, %414 : vector<2x128xf32>
    %417 = arith.divf %415, %416 : vector<2x128xf32>
    %cst_175 = arith.constant 5.000000e-01 : f32
    %418 = vector.broadcast %cst_175 : f32 to vector<3x128xf32>
    %419 = arith.mulf %418, %381 : vector<3x128xf32>
    %cst_176 = arith.constant 5.000000e-01 : f32
    %420 = vector.broadcast %cst_176 : f32 to vector<3x128xf32>
    %421 = arith.mulf %420, %407 : vector<3x128xf32>
    %422 = arith.addf %419, %421 : vector<3x128xf32>
    %cst_177 = arith.constant 5.000000e-01 : f32
    %423 = vector.broadcast %cst_177 : f32 to vector<2x128xf32>
    %424 = arith.mulf %423, %395 : vector<2x128xf32>
    %cst_178 = arith.constant 5.000000e-01 : f32
    %425 = vector.broadcast %cst_178 : f32 to vector<2x128xf32>
    %426 = arith.mulf %425, %417 : vector<2x128xf32>
    %427 = arith.addf %424, %426 : vector<2x128xf32>
    %cst_179 = arith.constant 0.000000e+00 : f32
    %428 = vector.broadcast %cst_179 : f32 to vector<3x128xf32>
    %429 = tpu.concatenate %422, %427, %428 in 0 : vector<3x128xf32>, vector<2x128xf32>, vector<3x128xf32> -> vector<8x128xf32>
    %c0_180 = arith.constant 0 : index
    %c0_181 = arith.constant 0 : index
    %430 = vector.load %arg3[%c0_180, %c0_181] : memref<8x128xf32, #tpu.memory_space<vmem>>, vector<8x128xf32>
    tpu.vector_store %arg3[%c0_180, %c0_181], %429 {strides = array<i32>} : memref<8x128xf32, #tpu.memory_space<vmem>>, vector<8x128xf32>,
    return
  }
}

</mosaic_0001>

<llo_original>
// kernel: forward.1
$region0: #{forward.1}
  #allocation0 [shape = 'u32[]', space=smem, size = 0x4, offset = 0x4, fixed_abs, tag = 'smem constant byte address 0x4 - core index']
  #allocation1 [shape = 'u32[72,128]{1,0:T(1,128)}', space=vmem, size = 0x9000, scoped, tag = 'internal scratch']
  %s0 = inlined_call_operand.vmem [shape: s32[32,1], index: 0, kind: input, shape index: {}]
  %s1 = inlined_call_operand.vmem [shape: f32[8,768], index: 1, kind: input, shape index: {}]
  %s2 = inlined_call_operand.hbm [shape: f32[2432,128], index: 2, kind: input, shape index: {}]
  %s3 = inlined_call_operand.vmem [shape: f32[8,128], index: 3, kind: output, shape index: {}]
  %s4 = sld [smem:[#allocation0]]
  $region26: #{forward.1} parent=0
    _
  %s6 = ssub.s32 1, %s4
  %s7 = scalar_select 0, %s6, %s4
  $region1: #{forward.1} parent=0
    #allocation2 [shape = 'u8[1245184]{0}', space=vmem, size = 0x130000, scoped, tag = 'input window, operand 2, single buffered']
    #allocation3 [shape = 's32[1]{0}', space=sflag, size = 0x4, scoped, tag = 'scoped memory for forward.1']
    %8 = vsyncpa [#allocation3], 0
    // Predicated region
    $region2: #{forward.1} parent=1 // pred_check
      _
    $region3: #{forward.1} parent=1 // pred_check_branch
      %10 = sbr.rel (0) target = $region5
    $region4: #{forward.1} parent=1 // pred_region
      _
    $region5: #{forward.1} parent=1 // pred_fallthru
      _
    // Predicated region
    $region6: #{forward.1} parent=1 // pred_check
      _
    $region7: #{forward.1} parent=1 // pred_check_branch
      %12 = sbr.rel (0) target = $region9
    $region8: #{forward.1} parent=1 // pred_region
      _
    $region9: #{forward.1} parent=1 // pred_fallthru
      _
    // Predicated region
    $region10: #{forward.1} parent=1 // pred_check
      _
    $region11: #{forward.1} parent=1 // pred_check_branch
      %14 = sbr.rel (0) target = $region13
    $region12: #{forward.1} parent=1 // pred_region
      %16 = vsyncadd [#allocation3], 0
      %s17 = sshll.u32 %s2, 4
      %s18 = int_to_ptr.hbm [resolvable:$true] %s17
      %s19 = sshll.u32 [#allocation2], 4
      %s20 = int_to_ptr.vmem [resolvable:$true] %s19
      %25 = dma.hbm_to_vmem [thread:$0]  %s18, 38912, %s20, [#allocation3], 128, 128, 8
    $region13: #{forward.1} parent=1 // pred_fallthru
      _
    // Predicated region
    $region14: #{forward.1} parent=1 // pred_check
      _
    $region15: #{forward.1} parent=1 // pred_check_branch
      %27 = sbr.rel (0) target = $region17
    $region16: #{forward.1} parent=1 // pred_region
      %29 = dma.done [#allocation3], 38912
    $region17: #{forward.1} parent=1 // pred_fallthru
      _
    %v30 = vld [vmem:[%s0] sm:$0xff]
    %v31 = vld [vmem:[%s0 + $0x8] sm:$0xff]
    %v32 = vld [vmem:[%s0 + $0x10] sm:$0xff]
    %v33 = vld [vmem:[%s0 + $0x18] sm:$0xff]
    %v34 = vlaneseq
    %v35 = vand.u32 %v34, 127
    %36 = vset.pattern.permute.xlu0 0
    %37 = vperm.xlu0 %36, %v30
    %v38 = vpop.permute.xlu0 %37
    %39 = vset.pattern.permute.xlu0 0
    %40 = vperm.xlu0 %39, %v31
    %v41 = vpop.permute.xlu0 %40
    %42 = vset.pattern.permute.xlu0 0
    %43 = vperm.xlu0 %42, %v32
    %v44 = vpop.permute.xlu0 %43
    %45 = vset.pattern.permute.xlu0 0
    %46 = vperm.xlu0 %45, %v33
    %v47 = vpop.permute.xlu0 %46
    %vm48 = vcmp.eq.s32.totalorder %v35, %v38
    %vm49 = vcmp.eq.s32.totalorder %v35, %v41
    %vm50 = vcmp.eq.s32.totalorder %v35, %v44
    %vm51 = vcmp.eq.s32.totalorder %v35, %v47
    %v52 = vsel %vm48, 1, 0
    %v53 = vsel %vm49, 1, 0
    %v54 = vsel %vm50, 1, 0
    %v55 = vsel %vm51, 1, 0
    %v56 = vcvt.s32.f32 %v52
    %v57 = vcvt.s32.f32 %v53
    %v58 = vcvt.s32.f32 %v54
    %v59 = vcvt.s32.f32 %v55
    %v60 = vld [vmem:[#allocation2] sm:$0xff]
    %v61 = vld [vmem:[#allocation2 + $0x8] sm:$0xff]
    %v62 = vld [vmem:[#allocation2 + $0x10] sm:$0xff]
    %v63 = vld [vmem:[#allocation2 + $0x18] sm:$0xff]
    %v64 = vld [vmem:[#allocation2 + $0x20] sm:$0xff]
    %v65 = vld [vmem:[#allocation2 + $0x28] sm:$0xff]
    %v66 = vld [vmem:[#allocation2 + $0x30] sm:$0x3]
    %vm67 = vcmask 408576
    %v69 = vsel %vm67, %v56, 0
    %v72 = vsel %vm67, %v57, 0
    %v75 = vsel %vm67, %v58, 0
    %v78 = vsel %vm67, %v59, 0
    %vm80 = vcmask 1041408
    %v82 = vsel %vm80, %v66, 0
    %84 = vmatpush.msra.mxu0 0.0
    %85 = vmatpush.msra.mxu0 0.0
    %86 = vmatpush.msra.mxu0 0.0
    %87 = vmatpush.msra.mxu0 0.0
    %88 = vmatpush.msra.mxu0 0.0
    %89 = vmatpush.msra.mxu0 0.0
    %90 = vmatpush.msra.mxu0 0.0
    %91 = vmatpush.msra.mxu0 0.0
    %92 = vmatpush.msra.mxu0 0.0
    %93 = vmatpush.msra.mxu0 %v82
    %94 = vmatpush.msra.mxu0 %v65
    %95 = vmatpush.msra.mxu0 %v64
    %96 = vmatpush.msra.mxu0 %v63
    %97 = vmatpush.msra.mxu0 %v62
    %98 = vmatpush.msra.mxu0 %v61
    %99 = vmatpush.msra.mxu0 %v60
    %100 = vmatmul.f32.gmra.mxu0 %v69
    %v101 = vpop.f32.mrf.mxu0
    %v102 = vadd.f32 0.0, %v101
    %103 = vmatmul.f32.gmra.mxu0 %v72
    %v104 = vpop.f32.mrf.mxu0
    %v105 = vadd.f32 0.0, %v104
    %106 = vmatmul.f32.gmra.mxu0 %v75
    %v107 = vpop.f32.mrf.mxu0
    %v108 = vadd.f32 0.0, %v107
    %109 = vmatmul.f32.gmra.mxu0 %v78
    %v110 = vpop.f32.mrf.mxu0
    %v111 = vadd.f32 0.0, %v110
    %112 = vdwg.mxu0
    %v113 = vld [vmem:[#allocation2 + $0x348] sm:$0xff]
    %v114 = vld [vmem:[#allocation2 + $0x350] sm:$0xff]
    %v115 = vld [vmem:[#allocation2 + $0x358] sm:$0xff]
    %v116 = vld [vmem:[#allocation2 + $0x360] sm:$0xff]
    %v117 = vld [vmem:[#allocation2 + $0x3a8] sm:$0x1]
    %v118 = vperm.slane %v117, 0
    %vm119 = vcmask 261120
    %v121 = vsel %vm119, %v102, 0
    %v124 = vsel %vm119, %v105, 0
    %v127 = vsel %vm119, %v108, 0
    %v130 = vsel %vm119, %v111, 0
    %132 = vmatpush.msra.mxu0 0.0
    %133 = vmatpush.msra.mxu0 0.0
    %134 = vmatpush.msra.mxu0 0.0
    %135 = vmatpush.msra.mxu0 0.0
    %136 = vmatpush.msra.mxu0 0.0
    %137 = vmatpush.msra.mxu0 0.0
    %138 = vmatpush.msra.mxu0 0.0
    %139 = vmatpush.msra.mxu0 0.0
    %140 = vmatpush.msra.mxu0 0.0
    %141 = vmatpush.msra.mxu0 0.0
    %142 = vmatpush.msra.mxu0 0.0
    %143 = vmatpush.msra.mxu0 0.0
    %144 = vmatpush.msra.mxu0 %v116
    %145 = vmatpush.msra.mxu0 %v115
    %146 = vmatpush.msra.mxu0 %v114
    %147 = vmatpush.msra.mxu0 %v113
    %148 = vmatmul.f32.gmra.mxu0 %v121
    %v149 = vpop.f32.mrf.mxu0
    %v150 = vadd.f32 %v118, %v149
    %151 = vmatmul.f32.gmra.mxu0 %v124
    %v152 = vpop.f32.mrf.mxu0
    %v153 = vadd.f32 %v118, %v152
    %154 = vmatmul.f32.gmra.mxu0 %v127
    %v155 = vpop.f32.mrf.mxu0
    %v156 = vadd.f32 %v118, %v155
    %157 = vmatmul.f32.gmra.mxu0 %v130
    %v158 = vpop.f32.mrf.mxu0
    %v159 = vadd.f32 %v118, %v158
    %160 = vdwg.mxu0
    %v165 = vrot.slane %v150, 4
    %v166 = vrot.slane %v153, 4
    %v167 = vrot.slane %v156, 4
    %v168 = vrot.slane %v159, 4
    %v169 = vld [vmem:[#allocation2 + $0x368] sm:$0xff]
    %v170 = vld [vmem:[#allocation2 + $0x370] sm:$0xff]
    %v171 = vld [vmem:[#allocation2 + $0x378] sm:$0xff]
    %v172 = vld [vmem:[#allocation2 + $0x380] sm:$0xff]
    %v173 = vld [vmem:[#allocation2 + $0x3b0] sm:$0x1]
    %v174 = vperm.slane %v173, 0
    %175 = vmatpush.msra.mxu0 0.0
    %176 = vmatpush.msra.mxu0 0.0
    %177 = vmatpush.msra.mxu0 0.0
    %178 = vmatpush.msra.mxu0 0.0
    %179 = vmatpush.msra.mxu0 0.0
    %180 = vmatpush.msra.mxu0 0.0
    %181 = vmatpush.msra.mxu0 0.0
    %182 = vmatpush.msra.mxu0 0.0
    %183 = vmatpush.msra.mxu0 0.0
    %184 = vmatpush.msra.mxu0 0.0
    %185 = vmatpush.msra.mxu0 0.0
    %186 = vmatpush.msra.mxu0 0.0
    %187 = vmatpush.msra.mxu0 %v172
    %188 = vmatpush.msra.mxu0 %v171
    %189 = vmatpush.msra.mxu0 %v170
    %190 = vmatpush.msra.mxu0 %v169
    %191 = vmatmul.f32.gmra.mxu0 %v121
    %v192 = vpop.f32.mrf.mxu0
    %v193 = vadd.f32 %v174, %v192
    %194 = vmatmul.f32.gmra.mxu0 %v124
    %v195 = vpop.f32.mrf.mxu0
    %v196 = vadd.f32 %v174, %v195
    %197 = vmatmul.f32.gmra.mxu0 %v127
    %v198 = vpop.f32.mrf.mxu0
    %v199 = vadd.f32 %v174, %v198
    %200 = vmatmul.f32.gmra.mxu0 %v130
    %v201 = vpop.f32.mrf.mxu0
    %v202 = vadd.f32 %v174, %v201
    %203 = vdwg.mxu0
    %v208 = vrot.slane %v193, 4
    %v209 = vrot.slane %v196, 4
    %v210 = vrot.slane %v199, 4
    %v211 = vrot.slane %v202, 4
    %v212 = vld [vmem:[#allocation2 + $0x388] sm:$0xff]
    %v213 = vld [vmem:[#allocation2 + $0x390] sm:$0xff]
    %v214 = vld [vmem:[#allocation2 + $0x398] sm:$0xff]
    %v215 = vld [vmem:[#allocation2 + $0x3a0] sm:$0xff]
    %v216 = vld [vmem:[#allocation2 + $0x3b8] sm:$0x1]
    %v217 = vperm.slane %v216, 0
    %218 = vmatpush.msra.mxu0 0.0
    %219 = vmatpush.msra.mxu0 0.0
    %220 = vmatpush.msra.mxu0 0.0
    %221 = vmatpush.msra.mxu0 0.0
    %222 = vmatpush.msra.mxu0 0.0
    %223 = vmatpush.msra.mxu0 0.0
    %224 = vmatpush.msra.mxu0 0.0
    %225 = vmatpush.msra.mxu0 0.0
    %226 = vmatpush.msra.mxu0 0.0
    %227 = vmatpush.msra.mxu0 0.0
    %228 = vmatpush.msra.mxu0 0.0
    %229 = vmatpush.msra.mxu0 0.0
    %230 = vmatpush.msra.mxu0 %v215
    %231 = vmatpush.msra.mxu0 %v214
    %232 = vmatpush.msra.mxu0 %v213
    %233 = vmatpush.msra.mxu0 %v212
    %234 = vmatmul.f32.gmra.mxu0 %v121
    %v235 = vpop.f32.mrf.mxu0
    %v236 = vadd.f32 %v217, %v235
    %237 = vmatmul.f32.gmra.mxu0 %v124
    %v238 = vpop.f32.mrf.mxu0
    %v239 = vadd.f32 %v217, %v238
    %240 = vmatmul.f32.gmra.mxu0 %v127
    %v241 = vpop.f32.mrf.mxu0
    %v242 = vadd.f32 %v217, %v241
    %243 = vmatmul.f32.gmra.mxu0 %v130
    %v244 = vpop.f32.mrf.mxu0
    %v245 = vadd.f32 %v217, %v244
    %246 = vdwg.mxu0
    %v251 = vrot.slane %v236, 4
    %v252 = vrot.slane %v239, 4
    %v253 = vrot.slane %v242, 4
    %v254 = vrot.slane %v245, 4
    %v255 = vld [vmem:[#allocation2 + $0x3d0] sm:$0xff]
    %v256 = vld [vmem:[#allocation2 + $0x3d8] sm:$0xff]
    %v257 = vld [vmem:[#allocation2 + $0x3e0] sm:$0xff]
    %v258 = vld [vmem:[#allocation2 + $0x3e8] sm:$0xff]
    %v259 = vld [vmem:[#allocation2 + $0x430] sm:$0x1]
    %v260 = vperm.slane %v259, 0
    %261 = vmatpush.msra.mxu0 0.0
    %262 = vmatpush.msra.mxu0 0.0
    %263 = vmatpush.msra.mxu0 0.0
    %264 = vmatpush.msra.mxu0 0.0
    %265 = vmatpush.msra.mxu0 0.0
    %266 = vmatpush.msra.mxu0 0.0
    %267 = vmatpush.msra.mxu0 0.0
    %268 = vmatpush.msra.mxu0 0.0
    %269 = vmatpush.msra.mxu0 0.0
    %270 = vmatpush.msra.mxu0 0.0
    %271 = vmatpush.msra.mxu0 0.0
    %272 = vmatpush.msra.mxu0 0.0
    %273 = vmatpush.msra.mxu0 %v258
    %274 = vmatpush.msra.mxu0 %v257
    %275 = vmatpush.msra.mxu0 %v256
    %276 = vmatpush.msra.mxu0 %v255
    %277 = vmatmul.f32.gmra.mxu0 %v121
    %v278 = vpop.f32.mrf.mxu0
    %v279 = vadd.f32 %v260, %v278
    %280 = vmatmul.f32.gmra.mxu0 %v124
    %v281 = vpop.f32.mrf.mxu0
    %v282 = vadd.f32 %v260, %v281
    %283 = vmatmul.f32.gmra.mxu0 %v127
    %v284 = vpop.f32.mrf.mxu0
    %v285 = vadd.f32 %v260, %v284
    %286 = vmatmul.f32.gmra.mxu0 %v130
    %v287 = vpop.f32.mrf.mxu0
    %v288 = vadd.f32 %v260, %v287
    %289 = vdwg.mxu0
    %v294 = vrot.slane %v279, 4
    %v295 = vrot.slane %v282, 4
    %v296 = vrot.slane %v285, 4
    %v297 = vrot.slane %v288, 4
    %v298 = vld [vmem:[#allocation2 + $0x3f0] sm:$0xff]
    %v299 = vld [vmem:[#allocation2 + $0x3f8] sm:$0xff]
    %v300 = vld [vmem:[#allocation2 + $0x400] sm:$0xff]
    %v301 = vld [vmem:[#allocation2 + $0x408] sm:$0xff]
    %v302 = vld [vmem:[#allocation2 + $0x438] sm:$0x1]
    %v303 = vperm.slane %v302, 0
    %304 = vmatpush.msra.mxu0 0.0
    %305 = vmatpush.msra.mxu0 0.0
    %306 = vmatpush.msra.mxu0 0.0
    %307 = vmatpush.msra.mxu0 0.0
    %308 = vmatpush.msra.mxu0 0.0
    %309 = vmatpush.msra.mxu0 0.0
    %310 = vmatpush.msra.mxu0 0.0
    %311 = vmatpush.msra.mxu0 0.0
    %312 = vmatpush.msra.mxu0 0.0
    %313 = vmatpush.msra.mxu0 0.0
    %314 = vmatpush.msra.mxu0 0.0
    %315 = vmatpush.msra.mxu0 0.0
    %316 = vmatpush.msra.mxu0 %v301
    %317 = vmatpush.msra.mxu0 %v300
    %318 = vmatpush.msra.mxu0 %v299
    %319 = vmatpush.msra.mxu0 %v298
    %320 = vmatmul.f32.gmra.mxu0 %v121
    %v321 = vpop.f32.mrf.mxu0
    %v322 = vadd.f32 %v303, %v321
    %323 = vmatmul.f32.gmra.mxu0 %v124
    %v324 = vpop.f32.mrf.mxu0
    %v325 = vadd.f32 %v303, %v324
    %326 = vmatmul.f32.gmra.mxu0 %v127
    %v327 = vpop.f32.mrf.mxu0
    %v328 = vadd.f32 %v303, %v327
    %329 = vmatmul.f32.gmra.mxu0 %v130
    %v330 = vpop.f32.mrf.mxu0
    %v331 = vadd.f32 %v303, %v330
    %332 = vdwg.mxu0
    %v337 = vrot.slane %v322, 4
    %v338 = vrot.slane %v325, 4
    %v339 = vrot.slane %v328, 4
    %v340 = vrot.slane %v331, 4
    %v341 = vld [vmem:[#allocation2 + $0x410] sm:$0xff]
    %v342 = vld [vmem:[#allocation2 + $0x418] sm:$0xff]
    %v343 = vld [vmem:[#allocation2 + $0x420] sm:$0xff]
    %v344 = vld [vmem:[#allocation2 + $0x428] sm:$0xff]
    %v345 = vld [vmem:[#allocation2 + $0x440] sm:$0x1]
    %v346 = vperm.slane %v345, 0
    %347 = vmatpush.msra.mxu0 0.0
    %348 = vmatpush.msra.mxu0 0.0
    %349 = vmatpush.msra.mxu0 0.0
    %350 = vmatpush.msra.mxu0 0.0
    %351 = vmatpush.msra.mxu0 0.0
    %352 = vmatpush.msra.mxu0 0.0
    %353 = vmatpush.msra.mxu0 0.0
    %354 = vmatpush.msra.mxu0 0.0
    %355 = vmatpush.msra.mxu0 0.0
    %356 = vmatpush.msra.mxu0 0.0
    %357 = vmatpush.msra.mxu0 0.0
    %358 = vmatpush.msra.mxu0 0.0
    %359 = vmatpush.msra.mxu0 %v344
    %360 = vmatpush.msra.mxu0 %v343
    %361 = vmatpush.msra.mxu0 %v342
    %362 = vmatpush.msra.mxu0 %v341
    %363 = vmatmul.f32.gmra.mxu0 %v121
    %v364 = vpop.f32.mrf.mxu0
    %v365 = vadd.f32 %v346, %v364
    %366 = vmatmul.f32.gmra.mxu0 %v124
    %v367 = vpop.f32.mrf.mxu0
    %v368 = vadd.f32 %v346, %v367
    %369 = vmatmul.f32.gmra.mxu0 %v127
    %v370 = vpop.f32.mrf.mxu0
    %v371 = vadd.f32 %v346, %v370
    %372 = vmatmul.f32.gmra.mxu0 %v130
    %v373 = vpop.f32.mrf.mxu0
    %v374 = vadd.f32 %v346, %v373
    %375 = vdwg.mxu0
    %v380 = vrot.slane %v365, 4
    %v381 = vrot.slane %v368, 4
    %v382 = vrot.slane %v371, 4
    %v383 = vrot.slane %v374, 4
    %vm384 = vcmask 130048
    %v385 = vsel %vm384, %v150, 0
    %v387 = vsel %vm384, %v193, 0
    %389 = vmatpush.xpose.msra.mxu0 0.0
    %390 = vmatpush.xpose.msra.mxu0 0.0
    %391 = vmatpush.xpose.msra.mxu0 0.0
    %392 = vmatpush.xpose.msra.mxu0 0.0
    %393 = vmatpush.xpose.msra.mxu0 0.0
    %394 = vmatpush.xpose.msra.mxu0 0.0
    %395 = vmatpush.xpose.msra.mxu0 0.0
    %396 = vmatpush.xpose.msra.mxu0 0.0
    %397 = vmatpush.xpose.msra.mxu0 0.0
    %398 = vmatpush.xpose.msra.mxu0 0.0
    %399 = vmatpush.xpose.msra.mxu0 0.0
    %400 = vmatpush.xpose.msra.mxu0 0.0
    %401 = vmatpush.xpose.msra.mxu0 0.0
    %402 = vmatpush.xpose.msra.mxu0 0.0
    %403 = vmatpush.xpose.msra.mxu0 0.0
    %404 = vmatpush.xpose.msra.mxu0 %v387
    %405 = vmatmul.f32.gmra.mxu0 %v385
    %v406 = vpop.f32.mrf.mxu0
    %v407 = vadd.f32 0.0, %v406
    %408 = vdwg.mxu0
    %v409 = vsel %vm384, %v165, 0
    %v411 = vsel %vm384, %v208, 0
    %413 = vmatpush.xpose.msra.mxu0 0.0
    %414 = vmatpush.xpose.msra.mxu0 0.0
    %415 = vmatpush.xpose.msra.mxu0 0.0
    %416 = vmatpush.xpose.msra.mxu0 0.0
    %417 = vmatpush.xpose.msra.mxu0 0.0
    %418 = vmatpush.xpose.msra.mxu0 0.0
    %419 = vmatpush.xpose.msra.mxu0 0.0
    %420 = vmatpush.xpose.msra.mxu0 0.0
    %421 = vmatpush.xpose.msra.mxu0 0.0
    %422 = vmatpush.xpose.msra.mxu0 0.0
    %423 = vmatpush.xpose.msra.mxu0 0.0
    %424 = vmatpush.xpose.msra.mxu0 0.0
    %425 = vmatpush.xpose.msra.mxu0 0.0
    %426 = vmatpush.xpose.msra.mxu0 0.0
    %427 = vmatpush.xpose.msra.mxu0 0.0
    %428 = vmatpush.xpose.msra.mxu0 %v411
    %429 = vmatmul.f32.gmra.mxu0 %v409
    %v430 = vpop.f32.mrf.mxu0
    %v431 = vadd.f32 0.0, %v430
    %432 = vdwg.mxu0
    %v433 = vsel %vm384, %v153, 0
    %v435 = vsel %vm384, %v196, 0
    %437 = vmatpush.xpose.msra.mxu0 0.0
    %438 = vmatpush.xpose.msra.mxu0 0.0
    %439 = vmatpush.xpose.msra.mxu0 0.0
    %440 = vmatpush.xpose.msra.mxu0 0.0
    %441 = vmatpush.xpose.msra.mxu0 0.0
    %442 = vmatpush.xpose.msra.mxu0 0.0
    %443 = vmatpush.xpose.msra.mxu0 0.0
    %444 = vmatpush.xpose.msra.mxu0 0.0
    %445 = vmatpush.xpose.msra.mxu0 0.0
    %446 = vmatpush.xpose.msra.mxu0 0.0
    %447 = vmatpush.xpose.msra.mxu0 0.0
    %448 = vmatpush.xpose.msra.mxu0 0.0
    %449 = vmatpush.xpose.msra.mxu0 0.0
    %450 = vmatpush.xpose.msra.mxu0 0.0
    %451 = vmatpush.xpose.msra.mxu0 0.0
    %452 = vmatpush.xpose.msra.mxu0 %v435
    %453 = vmatmul.f32.gmra.mxu0 %v433
    %v454 = vpop.f32.mrf.mxu0
    %v455 = vadd.f32 0.0, %v454
    %456 = vdwg.mxu0
    %v457 = vsel %vm384, %v166, 0
    %v459 = vsel %vm384, %v209, 0
    %461 = vmatpush.xpose.msra.mxu0 0.0
    %462 = vmatpush.xpose.msra.mxu0 0.0
    %463 = vmatpush.xpose.msra.mxu0 0.0
    %464 = vmatpush.xpose.msra.mxu0 0.0
    %465 = vmatpush.xpose.msra.mxu0 0.0
    %466 = vmatpush.xpose.msra.mxu0 0.0
    %467 = vmatpush.xpose.msra.mxu0 0.0
    %468 = vmatpush.xpose.msra.mxu0 0.0
    %469 = vmatpush.xpose.msra.mxu0 0.0
    %470 = vmatpush.xpose.msra.mxu0 0.0
    %471 = vmatpush.xpose.msra.mxu0 0.0
    %472 = vmatpush.xpose.msra.mxu0 0.0
    %473 = vmatpush.xpose.msra.mxu0 0.0
    %474 = vmatpush.xpose.msra.mxu0 0.0
    %475 = vmatpush.xpose.msra.mxu0 0.0
    %476 = vmatpush.xpose.msra.mxu0 %v459
    %477 = vmatmul.f32.gmra.mxu0 %v457
    %v478 = vpop.f32.mrf.mxu0
    %v479 = vadd.f32 0.0, %v478
    %480 = vdwg.mxu0
    %v481 = vsel %vm384, %v156, 0
    %v483 = vsel %vm384, %v199, 0
    %485 = vmatpush.xpose.msra.mxu0 0.0
    %486 = vmatpush.xpose.msra.mxu0 0.0
    %487 = vmatpush.xpose.msra.mxu0 0.0
    %488 = vmatpush.xpose.msra.mxu0 0.0
    %489 = vmatpush.xpose.msra.mxu0 0.0
    %490 = vmatpush.xpose.msra.mxu0 0.0
    %491 = vmatpush.xpose.msra.mxu0 0.0
    %492 = vmatpush.xpose.msra.mxu0 0.0
    %493 = vmatpush.xpose.msra.mxu0 0.0
    %494 = vmatpush.xpose.msra.mxu0 0.0
    %495 = vmatpush.xpose.msra.mxu0 0.0
    %496 = vmatpush.xpose.msra.mxu0 0.0
    %497 = vmatpush.xpose.msra.mxu0 0.0
    %498 = vmatpush.xpose.msra.mxu0 0.0
    %499 = vmatpush.xpose.msra.mxu0 0.0
    %500 = vmatpush.xpose.msra.mxu0 %v483
    %501 = vmatmul.f32.gmra.mxu0 %v481
    %v502 = vpop.f32.mrf.mxu0
    %v503 = vadd.f32 0.0, %v502
    %504 = vdwg.mxu0
    %v505 = vsel %vm384, %v167, 0
    %v507 = vsel %vm384, %v210, 0
    %509 = vmatpush.xpose.msra.mxu0 0.0
    %510 = vmatpush.xpose.msra.mxu0 0.0
    %511 = vmatpush.xpose.msra.mxu0 0.0
    %512 = vmatpush.xpose.msra.mxu0 0.0
    %513 = vmatpush.xpose.msra.mxu0 0.0
    %514 = vmatpush.xpose.msra.mxu0 0.0
    %515 = vmatpush.xpose.msra.mxu0 0.0
    %516 = vmatpush.xpose.msra.mxu0 0.0
    %517 = vmatpush.xpose.msra.mxu0 0.0
    %518 = vmatpush.xpose.msra.mxu0 0.0
    %519 = vmatpush.xpose.msra.mxu0 0.0
    %520 = vmatpush.xpose.msra.mxu0 0.0
    %521 = vmatpush.xpose.msra.mxu0 0.0
    %522 = vmatpush.xpose.msra.mxu0 0.0
    %523 = vmatpush.xpose.msra.mxu0 0.0
    %524 = vmatpush.xpose.msra.mxu0 %v507
    %525 = vmatmul.f32.gmra.mxu0 %v505
    %v526 = vpop.f32.mrf.mxu0
    %v527 = vadd.f32 0.0, %v526
    %528 = vdwg.mxu0
    %v529 = vsel %vm384, %v159, 0
    %v531 = vsel %vm384, %v202, 0
    %533 = vmatpush.xpose.msra.mxu0 0.0
    %534 = vmatpush.xpose.msra.mxu0 0.0
    %535 = vmatpush.xpose.msra.mxu0 0.0
    %536 = vmatpush.xpose.msra.mxu0 0.0
    %537 = vmatpush.xpose.msra.mxu0 0.0
    %538 = vmatpush.xpose.msra.mxu0 0.0
    %539 = vmatpush.xpose.msra.mxu0 0.0
    %540 = vmatpush.xpose.msra.mxu0 0.0
    %541 = vmatpush.xpose.msra.mxu0 0.0
    %542 = vmatpush.xpose.msra.mxu0 0.0
    %543 = vmatpush.xpose.msra.mxu0 0.0
    %544 = vmatpush.xpose.msra.mxu0 0.0
    %545 = vmatpush.xpose.msra.mxu0 0.0
    %546 = vmatpush.xpose.msra.mxu0 0.0
    %547 = vmatpush.xpose.msra.mxu0 0.0
    %548 = vmatpush.xpose.msra.mxu0 %v531
    %549 = vmatmul.f32.gmra.mxu0 %v529
    %v550 = vpop.f32.mrf.mxu0
    %v551 = vadd.f32 0.0, %v550
    %552 = vdwg.mxu0
    %v553 = vsel %vm384, %v168, 0
    %v555 = vsel %vm384, %v211, 0
    %557 = vmatpush.xpose.msra.mxu0 0.0
    %558 = vmatpush.xpose.msra.mxu0 0.0
    %559 = vmatpush.xpose.msra.mxu0 0.0
    %560 = vmatpush.xpose.msra.mxu0 0.0
    %561 = vmatpush.xpose.msra.mxu0 0.0
    %562 = vmatpush.xpose.msra.mxu0 0.0
    %563 = vmatpush.xpose.msra.mxu0 0.0
    %564 = vmatpush.xpose.msra.mxu0 0.0
    %565 = vmatpush.xpose.msra.mxu0 0.0
    %566 = vmatpush.xpose.msra.mxu0 0.0
    %567 = vmatpush.xpose.msra.mxu0 0.0
    %568 = vmatpush.xpose.msra.mxu0 0.0
    %569 = vmatpush.xpose.msra.mxu0 0.0
    %570 = vmatpush.xpose.msra.mxu0 0.0
    %571 = vmatpush.xpose.msra.mxu0 0.0
    %572 = vmatpush.xpose.msra.mxu0 %v555
    %573 = vmatmul.f32.gmra.mxu0 %v553
    %v574 = vpop.f32.mrf.mxu0
    %v575 = vadd.f32 0.0, %v574
    %576 = vdwg.mxu0
    %v577 = vsel %vm384, %v279, 0
    %v579 = vsel %vm384, %v322, 0
    %581 = vmatpush.xpose.msra.mxu0 0.0
    %582 = vmatpush.xpose.msra.mxu0 0.0
    %583 = vmatpush.xpose.msra.mxu0 0.0
    %584 = vmatpush.xpose.msra.mxu0 0.0
    %585 = vmatpush.xpose.msra.mxu0 0.0
    %586 = vmatpush.xpose.msra.mxu0 0.0
    %587 = vmatpush.xpose.msra.mxu0 0.0
    %588 = vmatpush.xpose.msra.mxu0 0.0
    %589 = vmatpush.xpose.msra.mxu0 0.0
    %590 = vmatpush.xpose.msra.mxu0 0.0
    %591 = vmatpush.xpose.msra.mxu0 0.0
    %592 = vmatpush.xpose.msra.mxu0 0.0
    %593 = vmatpush.xpose.msra.mxu0 0.0
    %594 = vmatpush.xpose.msra.mxu0 0.0
    %595 = vmatpush.xpose.msra.mxu0 0.0
    %596 = vmatpush.xpose.msra.mxu0 %v579
    %597 = vmatmul.f32.gmra.mxu0 %v577
    %v598 = vpop.f32.mrf.mxu0
    %v599 = vadd.f32 0.0, %v598
    %600 = vdwg.mxu0
    %v601 = vsel %vm384, %v294, 0
    %v603 = vsel %vm384, %v337, 0
    %605 = vmatpush.xpose.msra.mxu0 0.0
    %606 = vmatpush.xpose.msra.mxu0 0.0
    %607 = vmatpush.xpose.msra.mxu0 0.0
    %608 = vmatpush.xpose.msra.mxu0 0.0
    %609 = vmatpush.xpose.msra.mxu0 0.0
    %610 = vmatpush.xpose.msra.mxu0 0.0
    %611 = vmatpush.xpose.msra.mxu0 0.0
    %612 = vmatpush.xpose.msra.mxu0 0.0
    %613 = vmatpush.xpose.msra.mxu0 0.0
    %614 = vmatpush.xpose.msra.mxu0 0.0
    %615 = vmatpush.xpose.msra.mxu0 0.0
    %616 = vmatpush.xpose.msra.mxu0 0.0
    %617 = vmatpush.xpose.msra.mxu0 0.0
    %618 = vmatpush.xpose.msra.mxu0 0.0
    %619 = vmatpush.xpose.msra.mxu0 0.0
    %620 = vmatpush.xpose.msra.mxu0 %v603
    %621 = vmatmul.f32.gmra.mxu0 %v601
    %v622 = vpop.f32.mrf.mxu0
    %v623 = vadd.f32 0.0, %v622
    %624 = vdwg.mxu0
    %v625 = vsel %vm384, %v282, 0
    %v627 = vsel %vm384, %v325, 0
    %629 = vmatpush.xpose.msra.mxu0 0.0
    %630 = vmatpush.xpose.msra.mxu0 0.0
    %631 = vmatpush.xpose.msra.mxu0 0.0
    %632 = vmatpush.xpose.msra.mxu0 0.0
    %633 = vmatpush.xpose.msra.mxu0 0.0
    %634 = vmatpush.xpose.msra.mxu0 0.0
    %635 = vmatpush.xpose.msra.mxu0 0.0
    %636 = vmatpush.xpose.msra.mxu0 0.0
    %637 = vmatpush.xpose.msra.mxu0 0.0
    %638 = vmatpush.xpose.msra.mxu0 0.0
    %639 = vmatpush.xpose.msra.mxu0 0.0
    %640 = vmatpush.xpose.msra.mxu0 0.0
    %641 = vmatpush.xpose.msra.mxu0 0.0
    %642 = vmatpush.xpose.msra.mxu0 0.0
    %643 = vmatpush.xpose.msra.mxu0 0.0
    %644 = vmatpush.xpose.msra.mxu0 %v627
    %645 = vmatmul.f32.gmra.mxu0 %v625
    %v646 = vpop.f32.mrf.mxu0
    %v647 = vadd.f32 0.0, %v646
    %648 = vdwg.mxu0
    %v649 = vsel %vm384, %v295, 0
    %v651 = vsel %vm384, %v338, 0
    %653 = vmatpush.xpose.msra.mxu0 0.0
    %654 = vmatpush.xpose.msra.mxu0 0.0
    %655 = vmatpush.xpose.msra.mxu0 0.0
    %656 = vmatpush.xpose.msra.mxu0 0.0
    %657 = vmatpush.xpose.msra.mxu0 0.0
    %658 = vmatpush.xpose.msra.mxu0 0.0
    %659 = vmatpush.xpose.msra.mxu0 0.0
    %660 = vmatpush.xpose.msra.mxu0 0.0
    %661 = vmatpush.xpose.msra.mxu0 0.0
    %662 = vmatpush.xpose.msra.mxu0 0.0
    %663 = vmatpush.xpose.msra.mxu0 0.0
    %664 = vmatpush.xpose.msra.mxu0 0.0
    %665 = vmatpush.xpose.msra.mxu0 0.0
    %666 = vmatpush.xpose.msra.mxu0 0.0
    %667 = vmatpush.xpose.msra.mxu0 0.0
    %668 = vmatpush.xpose.msra.mxu0 %v651
    %669 = vmatmul.f32.gmra.mxu0 %v649
    %v670 = vpop.f32.mrf.mxu0
    %v671 = vadd.f32 0.0, %v670
    %672 = vdwg.mxu0
    %v673 = vsel %vm384, %v285, 0
    %v675 = vsel %vm384, %v328, 0
    %677 = vmatpush.xpose.msra.mxu0 0.0
    %678 = vmatpush.xpose.msra.mxu0 0.0
    %679 = vmatpush.xpose.msra.mxu0 0.0
    %680 = vmatpush.xpose.msra.mxu0 0.0
    %681 = vmatpush.xpose.msra.mxu0 0.0
    %682 = vmatpush.xpose.msra.mxu0 0.0
    %683 = vmatpush.xpose.msra.mxu0 0.0
    %684 = vmatpush.xpose.msra.mxu0 0.0
    %685 = vmatpush.xpose.msra.mxu0 0.0
    %686 = vmatpush.xpose.msra.mxu0 0.0
    %687 = vmatpush.xpose.msra.mxu0 0.0
    %688 = vmatpush.xpose.msra.mxu0 0.0
    %689 = vmatpush.xpose.msra.mxu0 0.0
    %690 = vmatpush.xpose.msra.mxu0 0.0
    %691 = vmatpush.xpose.msra.mxu0 0.0
    %692 = vmatpush.xpose.msra.mxu0 %v675
    %693 = vmatmul.f32.gmra.mxu0 %v673
    %v694 = vpop.f32.mrf.mxu0
    %v695 = vadd.f32 0.0, %v694
    %696 = vdwg.mxu0
    %v697 = vsel %vm384, %v296, 0
    %v699 = vsel %vm384, %v339, 0
    %701 = vmatpush.xpose.msra.mxu0 0.0
    %702 = vmatpush.xpose.msra.mxu0 0.0
    %703 = vmatpush.xpose.msra.mxu0 0.0
    %704 = vmatpush.xpose.msra.mxu0 0.0
    %705 = vmatpush.xpose.msra.mxu0 0.0
    %706 = vmatpush.xpose.msra.mxu0 0.0
    %707 = vmatpush.xpose.msra.mxu0 0.0
    %708 = vmatpush.xpose.msra.mxu0 0.0
    %709 = vmatpush.xpose.msra.mxu0 0.0
    %710 = vmatpush.xpose.msra.mxu0 0.0
    %711 = vmatpush.xpose.msra.mxu0 0.0
    %712 = vmatpush.xpose.msra.mxu0 0.0
    %713 = vmatpush.xpose.msra.mxu0 0.0
    %714 = vmatpush.xpose.msra.mxu0 0.0
    %715 = vmatpush.xpose.msra.mxu0 0.0
    %716 = vmatpush.xpose.msra.mxu0 %v699
    %717 = vmatmul.f32.gmra.mxu0 %v697
    %v718 = vpop.f32.mrf.mxu0
    %v719 = vadd.f32 0.0, %v718
    %720 = vdwg.mxu0
    %v721 = vsel %vm384, %v288, 0
    %v723 = vsel %vm384, %v331, 0
    %725 = vmatpush.xpose.msra.mxu0 0.0
    %726 = vmatpush.xpose.msra.mxu0 0.0
    %727 = vmatpush.xpose.msra.mxu0 0.0
    %728 = vmatpush.xpose.msra.mxu0 0.0
    %729 = vmatpush.xpose.msra.mxu0 0.0
    %730 = vmatpush.xpose.msra.mxu0 0.0
    %731 = vmatpush.xpose.msra.mxu0 0.0
    %732 = vmatpush.xpose.msra.mxu0 0.0
    %733 = vmatpush.xpose.msra.mxu0 0.0
    %734 = vmatpush.xpose.msra.mxu0 0.0
    %735 = vmatpush.xpose.msra.mxu0 0.0
    %736 = vmatpush.xpose.msra.mxu0 0.0
    %737 = vmatpush.xpose.msra.mxu0 0.0
    %738 = vmatpush.xpose.msra.mxu0 0.0
    %739 = vmatpush.xpose.msra.mxu0 0.0
    %740 = vmatpush.xpose.msra.mxu0 %v723
    %741 = vmatmul.f32.gmra.mxu0 %v721
    %v742 = vpop.f32.mrf.mxu0
    %v743 = vadd.f32 0.0, %v742
    %744 = vdwg.mxu0
    %v745 = vsel %vm384, %v297, 0
    %v747 = vsel %vm384, %v340, 0
    %749 = vmatpush.xpose.msra.mxu0 0.0
    %750 = vmatpush.xpose.msra.mxu0 0.0
    %751 = vmatpush.xpose.msra.mxu0 0.0
    %752 = vmatpush.xpose.msra.mxu0 0.0
    %753 = vmatpush.xpose.msra.mxu0 0.0
    %754 = vmatpush.xpose.msra.mxu0 0.0
    %755 = vmatpush.xpose.msra.mxu0 0.0
    %756 = vmatpush.xpose.msra.mxu0 0.0
    %757 = vmatpush.xpose.msra.mxu0 0.0
    %758 = vmatpush.xpose.msra.mxu0 0.0
    %759 = vmatpush.xpose.msra.mxu0 0.0
    %760 = vmatpush.xpose.msra.mxu0 0.0
    %761 = vmatpush.xpose.msra.mxu0 0.0
    %762 = vmatpush.xpose.msra.mxu0 0.0
    %763 = vmatpush.xpose.msra.mxu0 0.0
    %764 = vmatpush.xpose.msra.mxu0 %v747
    %765 = vmatmul.f32.gmra.mxu0 %v745
    %v766 = vpop.f32.mrf.mxu0
    %v767 = vadd.f32 0.0, %v766
    %768 = vdwg.mxu0
    %v769 = vmul.f32 %v407, 0.25
    %v770 = vmul.f32 %v431, 0.25
    %v771 = vmul.f32 %v455, 0.25
    %v772 = vmul.f32 %v479, 0.25
    %v773 = vmul.f32 %v503, 0.25
    %v774 = vmul.f32 %v527, 0.25
    %v775 = vmul.f32 %v551, 0.25
    %v776 = vmul.f32 %v575, 0.25
    %v777 = vmul.f32 %v599, 0.25
    %v778 = vmul.f32 %v623, 0.25
    %v779 = vmul.f32 %v647, 0.25
    %v780 = vmul.f32 %v671, 0.25
    %v781 = vmul.f32 %v695, 0.25
    %v782 = vmul.f32 %v719, 0.25
    %v783 = vmul.f32 %v743, 0.25
    %v784 = vmul.f32 %v767, 0.25
    %vm785 = vcmask 27648
    %v786 = vsel %vm785, %v769, -inf
    %787 = vmax.xlane.f32.xlu0 %v786
    %v788 = vpop.xlane.xlu0 %787
    %v789 = vsel %vm785, %v770, -inf
    %790 = vmax.xlane.f32.xlu0 %v789
    %v791 = vpop.xlane.xlu0 %790
    %v792 = vsel %vm785, %v771, -inf
    %793 = vmax.xlane.f32.xlu0 %v792
    %v794 = vpop.xlane.xlu0 %793
    %v795 = vsel %vm785, %v772, -inf
    %796 = vmax.xlane.f32.xlu0 %v795
    %v797 = vpop.xlane.xlu0 %796
    %v798 = vsel %vm785, %v773, -inf
    %799 = vmax.xlane.f32.xlu0 %v798
    %v800 = vpop.xlane.xlu0 %799
    %v801 = vsel %vm785, %v774, -inf
    %802 = vmax.xlane.f32.xlu0 %v801
    %v803 = vpop.xlane.xlu0 %802
    %v804 = vsel %vm785, %v775, -inf
    %805 = vmax.xlane.f32.xlu0 %v804
    %v806 = vpop.xlane.xlu0 %805
    %v807 = vsel %vm785, %v776, -inf
    %808 = vmax.xlane.f32.xlu0 %v807
    %v809 = vpop.xlane.xlu0 %808
    %v810 = vsel %vm785, %v777, -inf
    %811 = vmax.xlane.f32.xlu0 %v810
    %v812 = vpop.xlane.xlu0 %811
    %v813 = vsel %vm785, %v778, -inf
    %814 = vmax.xlane.f32.xlu0 %v813
    %v815 = vpop.xlane.xlu0 %814
    %v816 = vsel %vm785, %v779, -inf
    %817 = vmax.xlane.f32.xlu0 %v816
    %v818 = vpop.xlane.xlu0 %817
    %v819 = vsel %vm785, %v780, -inf
    %820 = vmax.xlane.f32.xlu0 %v819
    %v821 = vpop.xlane.xlu0 %820
    %v822 = vsel %vm785, %v781, -inf
    %823 = vmax.xlane.f32.xlu0 %v822
    %v824 = vpop.xlane.xlu0 %823
    %v825 = vsel %vm785, %v782, -inf
    %826 = vmax.xlane.f32.xlu0 %v825
    %v827 = vpop.xlane.xlu0 %826
    %v828 = vsel %vm785, %v783, -inf
    %829 = vmax.xlane.f32.xlu0 %v828
    %v830 = vpop.xlane.xlu0 %829
    %v831 = vsel %vm785, %v784, -inf
    %832 = vmax.xlane.f32.xlu0 %v831
    %v833 = vpop.xlane.xlu0 %832
    %v834 = vsub.f32 %v769, %v788
    %v835 = vsub.f32 %v770, %v791
    %v836 = vsub.f32 %v771, %v794
    %v837 = vsub.f32 %v772, %v797
    %v838 = vsub.f32 %v773, %v800
    %v839 = vsub.f32 %v774, %v803
    %v840 = vsub.f32 %v775, %v806
    %v841 = vsub.f32 %v776, %v809
    %v842 = vsub.f32 %v777, %v812
    %v843 = vsub.f32 %v778, %v815
    %v844 = vsub.f32 %v779, %v818
    %v845 = vsub.f32 %v780, %v821
    %v846 = vsub.f32 %v781, %v824
    %v847 = vsub.f32 %v782, %v827
    %v848 = vsub.f32 %v783, %v830
    %v849 = vsub.f32 %v784, %v833
    %v850 = vmul.f32 %v834, 1.442695
    %v851 = vpow.pop %v850
    %v852 = vmul.f32 %v835, 1.442695
    %v853 = vpow.pop %v852
    %v854 = vmul.f32 %v836, 1.442695
    %v855 = vpow.pop %v854
    %v856 = vmul.f32 %v837, 1.442695
    %v857 = vpow.pop %v856
    %v858 = vmul.f32 %v838, 1.442695
    %v859 = vpow.pop %v858
    %v860 = vmul.f32 %v839, 1.442695
    %v861 = vpow.pop %v860
    %v862 = vmul.f32 %v840, 1.442695
    %v863 = vpow.pop %v862
    %v864 = vmul.f32 %v841, 1.442695
    %v865 = vpow.pop %v864
    %v866 = vmul.f32 %v842, 1.442695
    %v867 = vpow.pop %v866
    %v868 = vmul.f32 %v843, 1.442695
    %v869 = vpow.pop %v868
    %v870 = vmul.f32 %v844, 1.442695
    %v871 = vpow.pop %v870
    %v872 = vmul.f32 %v845, 1.442695
    %v873 = vpow.pop %v872
    %v874 = vmul.f32 %v846, 1.442695
    %v875 = vpow.pop %v874
    %v876 = vmul.f32 %v847, 1.442695
    %v877 = vpow.pop %v876
    %v878 = vmul.f32 %v848, 1.442695
    %v879 = vpow.pop %v878
    %v880 = vmul.f32 %v849, 1.442695
    %v881 = vpow.pop %v880
    %v882 = vsel %vm785, %v851, 0.0
    %883 = vadd.xlane.f32.xlu0 %v882
    %v884 = vpop.xlane.xlu0 %883
    %v885 = vsel %vm785, %v853, 0.0
    %886 = vadd.xlane.f32.xlu0 %v885
    %v887 = vpop.xlane.xlu0 %886
    %v888 = vsel %vm785, %v855, 0.0
    %889 = vadd.xlane.f32.xlu0 %v888
    %v890 = vpop.xlane.xlu0 %889
    %v891 = vsel %vm785, %v857, 0.0
    %892 = vadd.xlane.f32.xlu0 %v891
    %v893 = vpop.xlane.xlu0 %892
    %v894 = vsel %vm785, %v859, 0.0
    %895 = vadd.xlane.f32.xlu0 %v894
    %v896 = vpop.xlane.xlu0 %895
    %v897 = vsel %vm785, %v861, 0.0
    %898 = vadd.xlane.f32.xlu0 %v897
    %v899 = vpop.xlane.xlu0 %898
    %v900 = vsel %vm785, %v863, 0.0
    %901 = vadd.xlane.f32.xlu0 %v900
    %v902 = vpop.xlane.xlu0 %901
    %v903 = vsel %vm785, %v865, 0.0
    %904 = vadd.xlane.f32.xlu0 %v903
    %v905 = vpop.xlane.xlu0 %904
    %v906 = vsel %vm785, %v867, 0.0
    %907 = vadd.xlane.f32.xlu0 %v906
    %v908 = vpop.xlane.xlu0 %907
    %v909 = vsel %vm785, %v869, 0.0
    %910 = vadd.xlane.f32.xlu0 %v909
    %v911 = vpop.xlane.xlu0 %910
    %v912 = vsel %vm785, %v871, 0.0
    %913 = vadd.xlane.f32.xlu0 %v912
    %v914 = vpop.xlane.xlu0 %913
    %v915 = vsel %vm785, %v873, 0.0
    %916 = vadd.xlane.f32.xlu0 %v915
    %v917 = vpop.xlane.xlu0 %916
    %v918 = vsel %vm785, %v875, 0.0
    %919 = vadd.xlane.f32.xlu0 %v918
    %v920 = vpop.xlane.xlu0 %919
    %v921 = vsel %vm785, %v877, 0.0
    %922 = vadd.xlane.f32.xlu0 %v921
    %v923 = vpop.xlane.xlu0 %922
    %v924 = vsel %vm785, %v879, 0.0
    %925 = vadd.xlane.f32.xlu0 %v924
    %v926 = vpop.xlane.xlu0 %925
    %v927 = vsel %vm785, %v881, 0.0
    %928 = vadd.xlane.f32.xlu0 %v927
    %v929 = vpop.xlane.xlu0 %928
    %v930 = vrcp.pop %v884
    %v931 = vmul.f32 %v884, %v930
    %v932 = vsub.f32 1.0, %v931
    %v933 = vmul.f32 %v930, %v932
    %v934 = vadd.f32 %v930, %v933
    %vm935 = vweird.f32 %v884
    %vm936 = vweird.f32 %v930
    %vm937 = vmor %vm935, %vm936
    %v938 = vsel %vm937, %v930, %v934
    %v939 = vand.u32 2147483647, %v884
    %vm940 = vcmp.eq.f32.partialorder %v939, 8.507059e+37
    %v941 = vand.u32 %v884, 2147483648
    %v942 = vor.u32 1.1754944e-38, %v941
    %v943 = vsel %vm940, %v942, %v938
    %v944 = vmul.f32 %v851, %v943
    %v945 = vrcp.pop %v887
    %v946 = vmul.f32 %v887, %v945
    %v947 = vsub.f32 1.0, %v946
    %v948 = vmul.f32 %v945, %v947
    %v949 = vadd.f32 %v945, %v948
    %vm950 = vweird.f32 %v887
    %vm951 = vweird.f32 %v945
    %vm952 = vmor %vm950, %vm951
    %v953 = vsel %vm952, %v945, %v949
    %v954 = vand.u32 2147483647, %v887
    %vm955 = vcmp.eq.f32.partialorder %v954, 8.507059e+37
    %v956 = vand.u32 %v887, 2147483648
    %v957 = vor.u32 1.1754944e-38, %v956
    %v958 = vsel %vm955, %v957, %v953
    %v959 = vmul.f32 %v853, %v958
    %v960 = vrcp.pop %v890
    %v961 = vmul.f32 %v890, %v960
    %v962 = vsub.f32 1.0, %v961
    %v963 = vmul.f32 %v960, %v962
    %v964 = vadd.f32 %v960, %v963
    %vm965 = vweird.f32 %v890
    %vm966 = vweird.f32 %v960
    %vm967 = vmor %vm965, %vm966
    %v968 = vsel %vm967, %v960, %v964
    %v969 = vand.u32 2147483647, %v890
    %vm970 = vcmp.eq.f32.partialorder %v969, 8.507059e+37
    %v971 = vand.u32 %v890, 2147483648
    %v972 = vor.u32 1.1754944e-38, %v971
    %v973 = vsel %vm970, %v972, %v968
    %v974 = vmul.f32 %v855, %v973
    %v975 = vrcp.pop %v893
    %v976 = vmul.f32 %v893, %v975
    %v977 = vsub.f32 1.0, %v976
    %v978 = vmul.f32 %v975, %v977
    %v979 = vadd.f32 %v975, %v978
    %vm980 = vweird.f32 %v893
    %vm981 = vweird.f32 %v975
    %vm982 = vmor %vm980, %vm981
    %v983 = vsel %vm982, %v975, %v979
    %v984 = vand.u32 2147483647, %v893
    %vm985 = vcmp.eq.f32.partialorder %v984, 8.507059e+37
    %v986 = vand.u32 %v893, 2147483648
    %v987 = vor.u32 1.1754944e-38, %v986
    %v988 = vsel %vm985, %v987, %v983
    %v989 = vmul.f32 %v857, %v988
    %v990 = vrcp.pop %v896
    %v991 = vmul.f32 %v896, %v990
    %v992 = vsub.f32 1.0, %v991
    %v993 = vmul.f32 %v990, %v992
    %v994 = vadd.f32 %v990, %v993
    %vm995 = vweird.f32 %v896
    %vm996 = vweird.f32 %v990
    %vm997 = vmor %vm995, %vm996
    %v998 = vsel %vm997, %v990, %v994
    %v999 = vand.u32 2147483647, %v896
    %vm1000 = vcmp.eq.f32.partialorder %v999, 8.507059e+37
    %v1001 = vand.u32 %v896, 2147483648
    %v1002 = vor.u32 1.1754944e-38, %v1001
    %v1003 = vsel %vm1000, %v1002, %v998
    %v1004 = vmul.f32 %v859, %v1003
    %v1005 = vrcp.pop %v899
    %v1006 = vmul.f32 %v899, %v1005
    %v1007 = vsub.f32 1.0, %v1006
    %v1008 = vmul.f32 %v1005, %v1007
    %v1009 = vadd.f32 %v1005, %v1008
    %vm1010 = vweird.f32 %v899
    %vm1011 = vweird.f32 %v1005
    %vm1012 = vmor %vm1010, %vm1011
    %v1013 = vsel %vm1012, %v1005, %v1009
    %v1014 = vand.u32 2147483647, %v899
    %vm1015 = vcmp.eq.f32.partialorder %v1014, 8.507059e+37
    %v1016 = vand.u32 %v899, 2147483648
    %v1017 = vor.u32 1.1754944e-38, %v1016
    %v1018 = vsel %vm1015, %v1017, %v1013
    %v1019 = vmul.f32 %v861, %v1018
    %v1020 = vrcp.pop %v902
    %v1021 = vmul.f32 %v902, %v1020
    %v1022 = vsub.f32 1.0, %v1021
    %v1023 = vmul.f32 %v1020, %v1022
    %v1024 = vadd.f32 %v1020, %v1023
    %vm1025 = vweird.f32 %v902
    %vm1026 = vweird.f32 %v1020
    %vm1027 = vmor %vm1025, %vm1026
    %v1028 = vsel %vm1027, %v1020, %v1024
    %v1029 = vand.u32 2147483647, %v902
    %vm1030 = vcmp.eq.f32.partialorder %v1029, 8.507059e+37
    %v1031 = vand.u32 %v902, 2147483648
    %v1032 = vor.u32 1.1754944e-38, %v1031
    %v1033 = vsel %vm1030, %v1032, %v1028
    %v1034 = vmul.f32 %v863, %v1033
    %v1035 = vrcp.pop %v905
    %v1036 = vmul.f32 %v905, %v1035
    %v1037 = vsub.f32 1.0, %v1036
    %v1038 = vmul.f32 %v1035, %v1037
    %v1039 = vadd.f32 %v1035, %v1038
    %vm1040 = vweird.f32 %v905
    %vm1041 = vweird.f32 %v1035
    %vm1042 = vmor %vm1040, %vm1041
    %v1043 = vsel %vm1042, %v1035, %v1039
    %v1044 = vand.u32 2147483647, %v905
    %vm1045 = vcmp.eq.f32.partialorder %v1044, 8.507059e+37
    %v1046 = vand.u32 %v905, 2147483648
    %v1047 = vor.u32 1.1754944e-38, %v1046
    %v1048 = vsel %vm1045, %v1047, %v1043
    %v1049 = vmul.f32 %v865, %v1048
    %v1050 = vrcp.pop %v908
    %v1051 = vmul.f32 %v908, %v1050
    %v1052 = vsub.f32 1.0, %v1051
    %v1053 = vmul.f32 %v1050, %v1052
    %v1054 = vadd.f32 %v1050, %v1053
    %vm1055 = vweird.f32 %v908
    %vm1056 = vweird.f32 %v1050
    %vm1057 = vmor %vm1055, %vm1056
    %v1058 = vsel %vm1057, %v1050, %v1054
    %v1059 = vand.u32 2147483647, %v908
    %vm1060 = vcmp.eq.f32.partialorder %v1059, 8.507059e+37
    %v1061 = vand.u32 %v908, 2147483648
    %v1062 = vor.u32 1.1754944e-38, %v1061
    %v1063 = vsel %vm1060, %v1062, %v1058
    %v1064 = vmul.f32 %v867, %v1063
    %v1065 = vrcp.pop %v911
    %v1066 = vmul.f32 %v911, %v1065
    %v1067 = vsub.f32 1.0, %v1066
    %v1068 = vmul.f32 %v1065, %v1067
    %v1069 = vadd.f32 %v1065, %v1068
    %vm1070 = vweird.f32 %v911
    %vm1071 = vweird.f32 %v1065
    %vm1072 = vmor %vm1070, %vm1071
    %v1073 = vsel %vm1072, %v1065, %v1069
    %v1074 = vand.u32 2147483647, %v911
    %vm1075 = vcmp.eq.f32.partialorder %v1074, 8.507059e+37
    %v1076 = vand.u32 %v911, 2147483648
    %v1077 = vor.u32 1.1754944e-38, %v1076
    %v1078 = vsel %vm1075, %v1077, %v1073
    %v1079 = vmul.f32 %v869, %v1078
    %v1080 = vrcp.pop %v914
    %v1081 = vmul.f32 %v914, %v1080
    %v1082 = vsub.f32 1.0, %v1081
    %v1083 = vmul.f32 %v1080, %v1082
    %v1084 = vadd.f32 %v1080, %v1083
    %vm1085 = vweird.f32 %v914
    %vm1086 = vweird.f32 %v1080
    %vm1087 = vmor %vm1085, %vm1086
    %v1088 = vsel %vm1087, %v1080, %v1084
    %v1089 = vand.u32 2147483647, %v914
    %vm1090 = vcmp.eq.f32.partialorder %v1089, 8.507059e+37
    %v1091 = vand.u32 %v914, 2147483648
    %v1092 = vor.u32 1.1754944e-38, %v1091
    %v1093 = vsel %vm1090, %v1092, %v1088
    %v1094 = vmul.f32 %v871, %v1093
    %v1095 = vrcp.pop %v917
    %v1096 = vmul.f32 %v917, %v1095
    %v1097 = vsub.f32 1.0, %v1096
    %v1098 = vmul.f32 %v1095, %v1097
    %v1099 = vadd.f32 %v1095, %v1098
    %vm1100 = vweird.f32 %v917
    %vm1101 = vweird.f32 %v1095
    %vm1102 = vmor %vm1100, %vm1101
    %v1103 = vsel %vm1102, %v1095, %v1099
    %v1104 = vand.u32 2147483647, %v917
    %vm1105 = vcmp.eq.f32.partialorder %v1104, 8.507059e+37
    %v1106 = vand.u32 %v917, 2147483648
    %v1107 = vor.u32 1.1754944e-38, %v1106
    %v1108 = vsel %vm1105, %v1107, %v1103
    %v1109 = vmul.f32 %v873, %v1108
    %v1110 = vrcp.pop %v920
    %v1111 = vmul.f32 %v920, %v1110
    %v1112 = vsub.f32 1.0, %v1111
    %v1113 = vmul.f32 %v1110, %v1112
    %v1114 = vadd.f32 %v1110, %v1113
    %vm1115 = vweird.f32 %v920
    %vm1116 = vweird.f32 %v1110
    %vm1117 = vmor %vm1115, %vm1116
    %v1118 = vsel %vm1117, %v1110, %v1114
    %v1119 = vand.u32 2147483647, %v920
    %vm1120 = vcmp.eq.f32.partialorder %v1119, 8.507059e+37
    %v1121 = vand.u32 %v920, 2147483648
    %v1122 = vor.u32 1.1754944e-38, %v1121
    %v1123 = vsel %vm1120, %v1122, %v1118
    %v1124 = vmul.f32 %v875, %v1123
    %v1125 = vrcp.pop %v923
    %v1126 = vmul.f32 %v923, %v1125
    %v1127 = vsub.f32 1.0, %v1126
    %v1128 = vmul.f32 %v1125, %v1127
    %v1129 = vadd.f32 %v1125, %v1128
    %vm1130 = vweird.f32 %v923
    %vm1131 = vweird.f32 %v1125
    %vm1132 = vmor %vm1130, %vm1131
    %v1133 = vsel %vm1132, %v1125, %v1129
    %v1134 = vand.u32 2147483647, %v923
    %vm1135 = vcmp.eq.f32.partialorder %v1134, 8.507059e+37
    %v1136 = vand.u32 %v923, 2147483648
    %v1137 = vor.u32 1.1754944e-38, %v1136
    %v1138 = vsel %vm1135, %v1137, %v1133
    %v1139 = vmul.f32 %v877, %v1138
    %v1140 = vrcp.pop %v926
    %v1141 = vmul.f32 %v926, %v1140
    %v1142 = vsub.f32 1.0, %v1141
    %v1143 = vmul.f32 %v1140, %v1142
    %v1144 = vadd.f32 %v1140, %v1143
    %vm1145 = vweird.f32 %v926
    %vm1146 = vweird.f32 %v1140
    %vm1147 = vmor %vm1145, %vm1146
    %v1148 = vsel %vm1147, %v1140, %v1144
    %v1149 = vand.u32 2147483647, %v926
    %vm1150 = vcmp.eq.f32.partialorder %v1149, 8.507059e+37
    %v1151 = vand.u32 %v926, 2147483648
    %v1152 = vor.u32 1.1754944e-38, %v1151
    %v1153 = vsel %vm1150, %v1152, %v1148
    %v1154 = vmul.f32 %v879, %v1153
    %v1155 = vrcp.pop %v929
    %v1156 = vmul.f32 %v929, %v1155
    %v1157 = vsub.f32 1.0, %v1156
    %v1158 = vmul.f32 %v1155, %v1157
    %v1159 = vadd.f32 %v1155, %v1158
    %vm1160 = vweird.f32 %v929
    %vm1161 = vweird.f32 %v1155
    %vm1162 = vmor %vm1160, %vm1161
    %v1163 = vsel %vm1162, %v1155, %v1159
    %v1164 = vand.u32 2147483647, %v929
    %vm1165 = vcmp.eq.f32.partialorder %v1164, 8.507059e+37
    %v1166 = vand.u32 %v929, 2147483648
    %v1167 = vor.u32 1.1754944e-38, %v1166
    %v1168 = vsel %vm1165, %v1167, %v1163
    %v1169 = vmul.f32 %v881, %v1168
    %vm1170 = vcmask 31744
    %v1172 = vsel %vm1170, %v944, 0
    %vm1174 = vcmask 1043456
    %v1175 = vsel %vm1174, %v236, 0
    %1177 = vmatpush.msra.mxu0 0.0
    %1178 = vmatpush.msra.mxu0 0.0
    %1179 = vmatpush.msra.mxu0 0.0
    %1180 = vmatpush.msra.mxu0 0.0
    %1181 = vmatpush.msra.mxu0 0.0
    %1182 = vmatpush.msra.mxu0 0.0
    %1183 = vmatpush.msra.mxu0 0.0
    %1184 = vmatpush.msra.mxu0 0.0
    %1185 = vmatpush.msra.mxu0 0.0
    %1186 = vmatpush.msra.mxu0 0.0
    %1187 = vmatpush.msra.mxu0 0.0
    %1188 = vmatpush.msra.mxu0 0.0
    %1189 = vmatpush.msra.mxu0 0.0
    %1190 = vmatpush.msra.mxu0 0.0
    %1191 = vmatpush.msra.mxu0 0.0
    %1192 = vmatpush.msra.mxu0 %v1175
    %1193 = vmatmul.f32.gmra.mxu0 %v1172
    %v1194 = vpop.f32.mrf.mxu0
    %v1195 = vadd.f32 0.0, %v1194
    %1196 = vdwg.mxu0
    %v1198 = vsel %vm1170, %v959, 0
    %v1200 = vsel %vm1174, %v251, 0
    %1202 = vmatpush.msra.mxu0 0.0
    %1203 = vmatpush.msra.mxu0 0.0
    %1204 = vmatpush.msra.mxu0 0.0
    %1205 = vmatpush.msra.mxu0 0.0
    %1206 = vmatpush.msra.mxu0 0.0
    %1207 = vmatpush.msra.mxu0 0.0
    %1208 = vmatpush.msra.mxu0 0.0
    %1209 = vmatpush.msra.mxu0 0.0
    %1210 = vmatpush.msra.mxu0 0.0
    %1211 = vmatpush.msra.mxu0 0.0
    %1212 = vmatpush.msra.mxu0 0.0
    %1213 = vmatpush.msra.mxu0 0.0
    %1214 = vmatpush.msra.mxu0 0.0
    %1215 = vmatpush.msra.mxu0 0.0
    %1216 = vmatpush.msra.mxu0 0.0
    %1217 = vmatpush.msra.mxu0 %v1200
    %1218 = vmatmul.f32.gmra.mxu0 %v1198
    %v1219 = vpop.f32.mrf.mxu0
    %v1220 = vadd.f32 0.0, %v1219
    %1221 = vdwg.mxu0
    %v1223 = vsel %vm1170, %v974, 0
    %v1225 = vsel %vm1174, %v239, 0
    %1227 = vmatpush.msra.mxu0 0.0
    %1228 = vmatpush.msra.mxu0 0.0
    %1229 = vmatpush.msra.mxu0 0.0
    %1230 = vmatpush.msra.mxu0 0.0
    %1231 = vmatpush.msra.mxu0 0.0
    %1232 = vmatpush.msra.mxu0 0.0
    %1233 = vmatpush.msra.mxu0 0.0
    %1234 = vmatpush.msra.mxu0 0.0
    %1235 = vmatpush.msra.mxu0 0.0
    %1236 = vmatpush.msra.mxu0 0.0
    %1237 = vmatpush.msra.mxu0 0.0
    %1238 = vmatpush.msra.mxu0 0.0
    %1239 = vmatpush.msra.mxu0 0.0
    %1240 = vmatpush.msra.mxu0 0.0
    %1241 = vmatpush.msra.mxu0 0.0
    %1242 = vmatpush.msra.mxu0 %v1225
    %1243 = vmatmul.f32.gmra.mxu0 %v1223
    %v1244 = vpop.f32.mrf.mxu0
    %v1245 = vadd.f32 0.0, %v1244
    %1246 = vdwg.mxu0
    %v1248 = vsel %vm1170, %v989, 0
    %v1250 = vsel %vm1174, %v252, 0
    %1252 = vmatpush.msra.mxu0 0.0
    %1253 = vmatpush.msra.mxu0 0.0
    %1254 = vmatpush.msra.mxu0 0.0
    %1255 = vmatpush.msra.mxu0 0.0
    %1256 = vmatpush.msra.mxu0 0.0
    %1257 = vmatpush.msra.mxu0 0.0
    %1258 = vmatpush.msra.mxu0 0.0
    %1259 = vmatpush.msra.mxu0 0.0
    %1260 = vmatpush.msra.mxu0 0.0
    %1261 = vmatpush.msra.mxu0 0.0
    %1262 = vmatpush.msra.mxu0 0.0
    %1263 = vmatpush.msra.mxu0 0.0
    %1264 = vmatpush.msra.mxu0 0.0
    %1265 = vmatpush.msra.mxu0 0.0
    %1266 = vmatpush.msra.mxu0 0.0
    %1267 = vmatpush.msra.mxu0 %v1250
    %1268 = vmatmul.f32.gmra.mxu0 %v1248
    %v1269 = vpop.f32.mrf.mxu0
    %v1270 = vadd.f32 0.0, %v1269
    %1271 = vdwg.mxu0
    %v1273 = vsel %vm1170, %v1004, 0
    %v1275 = vsel %vm1174, %v242, 0
    %1277 = vmatpush.msra.mxu0 0.0
    %1278 = vmatpush.msra.mxu0 0.0
    %1279 = vmatpush.msra.mxu0 0.0
    %1280 = vmatpush.msra.mxu0 0.0
    %1281 = vmatpush.msra.mxu0 0.0
    %1282 = vmatpush.msra.mxu0 0.0
    %1283 = vmatpush.msra.mxu0 0.0
    %1284 = vmatpush.msra.mxu0 0.0
    %1285 = vmatpush.msra.mxu0 0.0
    %1286 = vmatpush.msra.mxu0 0.0
    %1287 = vmatpush.msra.mxu0 0.0
    %1288 = vmatpush.msra.mxu0 0.0
    %1289 = vmatpush.msra.mxu0 0.0
    %1290 = vmatpush.msra.mxu0 0.0
    %1291 = vmatpush.msra.mxu0 0.0
    %1292 = vmatpush.msra.mxu0 %v1275
    %1293 = vmatmul.f32.gmra.mxu0 %v1273
    %v1294 = vpop.f32.mrf.mxu0
    %v1295 = vadd.f32 0.0, %v1294
    %1296 = vdwg.mxu0
    %v1298 = vsel %vm1170, %v1019, 0
    %v1300 = vsel %vm1174, %v253, 0
    %1302 = vmatpush.msra.mxu0 0.0
    %1303 = vmatpush.msra.mxu0 0.0
    %1304 = vmatpush.msra.mxu0 0.0
    %1305 = vmatpush.msra.mxu0 0.0
    %1306 = vmatpush.msra.mxu0 0.0
    %1307 = vmatpush.msra.mxu0 0.0
    %1308 = vmatpush.msra.mxu0 0.0
    %1309 = vmatpush.msra.mxu0 0.0
    %1310 = vmatpush.msra.mxu0 0.0
    %1311 = vmatpush.msra.mxu0 0.0
    %1312 = vmatpush.msra.mxu0 0.0
    %1313 = vmatpush.msra.mxu0 0.0
    %1314 = vmatpush.msra.mxu0 0.0
    %1315 = vmatpush.msra.mxu0 0.0
    %1316 = vmatpush.msra.mxu0 0.0
    %1317 = vmatpush.msra.mxu0 %v1300
    %1318 = vmatmul.f32.gmra.mxu0 %v1298
    %v1319 = vpop.f32.mrf.mxu0
    %v1320 = vadd.f32 0.0, %v1319
    %1321 = vdwg.mxu0
    %v1323 = vsel %vm1170, %v1034, 0
    %v1325 = vsel %vm1174, %v245, 0
    %1327 = vmatpush.msra.mxu0 0.0
    %1328 = vmatpush.msra.mxu0 0.0
    %1329 = vmatpush.msra.mxu0 0.0
    %1330 = vmatpush.msra.mxu0 0.0
    %1331 = vmatpush.msra.mxu0 0.0
    %1332 = vmatpush.msra.mxu0 0.0
    %1333 = vmatpush.msra.mxu0 0.0
    %1334 = vmatpush.msra.mxu0 0.0
    %1335 = vmatpush.msra.mxu0 0.0
    %1336 = vmatpush.msra.mxu0 0.0
    %1337 = vmatpush.msra.mxu0 0.0
    %1338 = vmatpush.msra.mxu0 0.0
    %1339 = vmatpush.msra.mxu0 0.0
    %1340 = vmatpush.msra.mxu0 0.0
    %1341 = vmatpush.msra.mxu0 0.0
    %1342 = vmatpush.msra.mxu0 %v1325
    %1343 = vmatmul.f32.gmra.mxu0 %v1323
    %v1344 = vpop.f32.mrf.mxu0
    %v1345 = vadd.f32 0.0, %v1344
    %1346 = vdwg.mxu0
    %v1348 = vsel %vm1170, %v1049, 0
    %v1350 = vsel %vm1174, %v254, 0
    %1352 = vmatpush.msra.mxu0 0.0
    %1353 = vmatpush.msra.mxu0 0.0
    %1354 = vmatpush.msra.mxu0 0.0
    %1355 = vmatpush.msra.mxu0 0.0
    %1356 = vmatpush.msra.mxu0 0.0
    %1357 = vmatpush.msra.mxu0 0.0
    %1358 = vmatpush.msra.mxu0 0.0
    %1359 = vmatpush.msra.mxu0 0.0
    %1360 = vmatpush.msra.mxu0 0.0
    %1361 = vmatpush.msra.mxu0 0.0
    %1362 = vmatpush.msra.mxu0 0.0
    %1363 = vmatpush.msra.mxu0 0.0
    %1364 = vmatpush.msra.mxu0 0.0
    %1365 = vmatpush.msra.mxu0 0.0
    %1366 = vmatpush.msra.mxu0 0.0
    %1367 = vmatpush.msra.mxu0 %v1350
    %1368 = vmatmul.f32.gmra.mxu0 %v1348
    %v1369 = vpop.f32.mrf.mxu0
    %v1370 = vadd.f32 0.0, %v1369
    %1371 = vdwg.mxu0
    %v1373 = vsel %vm1170, %v1064, 0
    %v1375 = vsel %vm1174, %v365, 0
    %1377 = vmatpush.msra.mxu0 0.0
    %1378 = vmatpush.msra.mxu0 0.0
    %1379 = vmatpush.msra.mxu0 0.0
    %1380 = vmatpush.msra.mxu0 0.0
    %1381 = vmatpush.msra.mxu0 0.0
    %1382 = vmatpush.msra.mxu0 0.0
    %1383 = vmatpush.msra.mxu0 0.0
    %1384 = vmatpush.msra.mxu0 0.0
    %1385 = vmatpush.msra.mxu0 0.0
    %1386 = vmatpush.msra.mxu0 0.0
    %1387 = vmatpush.msra.mxu0 0.0
    %1388 = vmatpush.msra.mxu0 0.0
    %1389 = vmatpush.msra.mxu0 0.0
    %1390 = vmatpush.msra.mxu0 0.0
    %1391 = vmatpush.msra.mxu0 0.0
    %1392 = vmatpush.msra.mxu0 %v1375
    %1393 = vmatmul.f32.gmra.mxu0 %v1373
    %v1394 = vpop.f32.mrf.mxu0
    %v1395 = vadd.f32 0.0, %v1394
    %1396 = vdwg.mxu0
    %v1398 = vsel %vm1170, %v1079, 0
    %v1400 = vsel %vm1174, %v380, 0
    %1402 = vmatpush.msra.mxu0 0.0
    %1403 = vmatpush.msra.mxu0 0.0
    %1404 = vmatpush.msra.mxu0 0.0
    %1405 = vmatpush.msra.mxu0 0.0
    %1406 = vmatpush.msra.mxu0 0.0
    %1407 = vmatpush.msra.mxu0 0.0
    %1408 = vmatpush.msra.mxu0 0.0
    %1409 = vmatpush.msra.mxu0 0.0
    %1410 = vmatpush.msra.mxu0 0.0
    %1411 = vmatpush.msra.mxu0 0.0
    %1412 = vmatpush.msra.mxu0 0.0
    %1413 = vmatpush.msra.mxu0 0.0
    %1414 = vmatpush.msra.mxu0 0.0
    %1415 = vmatpush.msra.mxu0 0.0
    %1416 = vmatpush.msra.mxu0 0.0
    %1417 = vmatpush.msra.mxu0 %v1400
    %1418 = vmatmul.f32.gmra.mxu0 %v1398
    %v1419 = vpop.f32.mrf.mxu0
    %v1420 = vadd.f32 0.0, %v1419
    %1421 = vdwg.mxu0
    %v1423 = vsel %vm1170, %v1094, 0
    %v1425 = vsel %vm1174, %v368, 0
    %1427 = vmatpush.msra.mxu0 0.0
    %1428 = vmatpush.msra.mxu0 0.0
    %1429 = vmatpush.msra.mxu0 0.0
    %1430 = vmatpush.msra.mxu0 0.0
    %1431 = vmatpush.msra.mxu0 0.0
    %1432 = vmatpush.msra.mxu0 0.0
    %1433 = vmatpush.msra.mxu0 0.0
    %1434 = vmatpush.msra.mxu0 0.0
    %1435 = vmatpush.msra.mxu0 0.0
    %1436 = vmatpush.msra.mxu0 0.0
    %1437 = vmatpush.msra.mxu0 0.0
    %1438 = vmatpush.msra.mxu0 0.0
    %1439 = vmatpush.msra.mxu0 0.0
    %1440 = vmatpush.msra.mxu0 0.0
    %1441 = vmatpush.msra.mxu0 0.0
    %1442 = vmatpush.msra.mxu0 %v1425
    %1443 = vmatmul.f32.gmra.mxu0 %v1423
    %v1444 = vpop.f32.mrf.mxu0
    %v1445 = vadd.f32 0.0, %v1444
    %1446 = vdwg.mxu0
    %v1448 = vsel %vm1170, %v1109, 0
    %v1450 = vsel %vm1174, %v381, 0
    %1452 = vmatpush.msra.mxu0 0.0
    %1453 = vmatpush.msra.mxu0 0.0
    %1454 = vmatpush.msra.mxu0 0.0
    %1455 = vmatpush.msra.mxu0 0.0
    %1456 = vmatpush.msra.mxu0 0.0
    %1457 = vmatpush.msra.mxu0 0.0
    %1458 = vmatpush.msra.mxu0 0.0
    %1459 = vmatpush.msra.mxu0 0.0
    %1460 = vmatpush.msra.mxu0 0.0
    %1461 = vmatpush.msra.mxu0 0.0
    %1462 = vmatpush.msra.mxu0 0.0
    %1463 = vmatpush.msra.mxu0 0.0
    %1464 = vmatpush.msra.mxu0 0.0
    %1465 = vmatpush.msra.mxu0 0.0
    %1466 = vmatpush.msra.mxu0 0.0
    %1467 = vmatpush.msra.mxu0 %v1450
    %1468 = vmatmul.f32.gmra.mxu0 %v1448
    %v1469 = vpop.f32.mrf.mxu0
    %v1470 = vadd.f32 0.0, %v1469
    %1471 = vdwg.mxu0
    %v1473 = vsel %vm1170, %v1124, 0
    %v1475 = vsel %vm1174, %v371, 0
    %1477 = vmatpush.msra.mxu0 0.0
    %1478 = vmatpush.msra.mxu0 0.0
    %1479 = vmatpush.msra.mxu0 0.0
    %1480 = vmatpush.msra.mxu0 0.0
    %1481 = vmatpush.msra.mxu0 0.0
    %1482 = vmatpush.msra.mxu0 0.0
    %1483 = vmatpush.msra.mxu0 0.0
    %1484 = vmatpush.msra.mxu0 0.0
    %1485 = vmatpush.msra.mxu0 0.0
    %1486 = vmatpush.msra.mxu0 0.0
    %1487 = vmatpush.msra.mxu0 0.0
    %1488 = vmatpush.msra.mxu0 0.0
    %1489 = vmatpush.msra.mxu0 0.0
    %1490 = vmatpush.msra.mxu0 0.0
    %1491 = vmatpush.msra.mxu0 0.0
    %1492 = vmatpush.msra.mxu0 %v1475
    %1493 = vmatmul.f32.gmra.mxu0 %v1473
    %v1494 = vpop.f32.mrf.mxu0
    %v1495 = vadd.f32 0.0, %v1494
    %1496 = vdwg.mxu0
    %v1498 = vsel %vm1170, %v1139, 0
    %v1500 = vsel %vm1174, %v382, 0
    %1502 = vmatpush.msra.mxu0 0.0
    %1503 = vmatpush.msra.mxu0 0.0
    %1504 = vmatpush.msra.mxu0 0.0
    %1505 = vmatpush.msra.mxu0 0.0
    %1506 = vmatpush.msra.mxu0 0.0
    %1507 = vmatpush.msra.mxu0 0.0
    %1508 = vmatpush.msra.mxu0 0.0
    %1509 = vmatpush.msra.mxu0 0.0
    %1510 = vmatpush.msra.mxu0 0.0
    %1511 = vmatpush.msra.mxu0 0.0
    %1512 = vmatpush.msra.mxu0 0.0
    %1513 = vmatpush.msra.mxu0 0.0
    %1514 = vmatpush.msra.mxu0 0.0
    %1515 = vmatpush.msra.mxu0 0.0
    %1516 = vmatpush.msra.mxu0 0.0
    %1517 = vmatpush.msra.mxu0 %v1500
    %1518 = vmatmul.f32.gmra.mxu0 %v1498
    %v1519 = vpop.f32.mrf.mxu0
    %v1520 = vadd.f32 0.0, %v1519
    %1521 = vdwg.mxu0
    %v1523 = vsel %vm1170, %v1154, 0
    %v1525 = vsel %vm1174, %v374, 0
    %1527 = vmatpush.msra.mxu0 0.0
    %1528 = vmatpush.msra.mxu0 0.0
    %1529 = vmatpush.msra.mxu0 0.0
    %1530 = vmatpush.msra.mxu0 0.0
    %1531 = vmatpush.msra.mxu0 0.0
    %1532 = vmatpush.msra.mxu0 0.0
    %1533 = vmatpush.msra.mxu0 0.0
    %1534 = vmatpush.msra.mxu0 0.0
    %1535 = vmatpush.msra.mxu0 0.0
    %1536 = vmatpush.msra.mxu0 0.0
    %1537 = vmatpush.msra.mxu0 0.0
    %1538 = vmatpush.msra.mxu0 0.0
    %1539 = vmatpush.msra.mxu0 0.0
    %1540 = vmatpush.msra.mxu0 0.0
    %1541 = vmatpush.msra.mxu0 0.0
    %1542 = vmatpush.msra.mxu0 %v1525
    %1543 = vmatmul.f32.gmra.mxu0 %v1523
    %v1544 = vpop.f32.mrf.mxu0
    %v1545 = vadd.f32 0.0, %v1544
    %1546 = vdwg.mxu0
    %v1548 = vsel %vm1170, %v1169, 0
    %v1550 = vsel %vm1174, %v383, 0
    %1552 = vmatpush.msra.mxu0 0.0
    %1553 = vmatpush.msra.mxu0 0.0
    %1554 = vmatpush.msra.mxu0 0.0
    %1555 = vmatpush.msra.mxu0 0.0
    %1556 = vmatpush.msra.mxu0 0.0
    %1557 = vmatpush.msra.mxu0 0.0
    %1558 = vmatpush.msra.mxu0 0.0
    %1559 = vmatpush.msra.mxu0 0.0
    %1560 = vmatpush.msra.mxu0 0.0
    %1561 = vmatpush.msra.mxu0 0.0
    %1562 = vmatpush.msra.mxu0 0.0
    %1563 = vmatpush.msra.mxu0 0.0
    %1564 = vmatpush.msra.mxu0 0.0
    %1565 = vmatpush.msra.mxu0 0.0
    %1566 = vmatpush.msra.mxu0 0.0
    %1567 = vmatpush.msra.mxu0 %v1550
    %1568 = vmatmul.f32.gmra.mxu0 %v1548
    %v1569 = vpop.f32.mrf.mxu0
    %v1570 = vadd.f32 0.0, %v1569
    %1571 = vdwg.mxu0
    %v1572 = vld [vmem:[#allocation2 + $0x458] sm:$0x1]
    %v1573 = vld [vmem:[#allocation2 + $0x3c0] sm:$0xff]
    %v1574 = vld [vmem:[#allocation2 + $0x3c8] sm:$0xff]
    %1583 = vst [vmem:[#allocation1] ss:$2 sm:$0xff] %v1195
    %s1584 = scalar_lea.vmem [#allocation1], 1
    %1585 = vst [vmem:[%s1584] ss:$2 sm:$0xff] %v1220
    %s1586 = scalar_lea.vmem [#allocation1], 16
    %1587 = vst [vmem:[%s1586] ss:$2 sm:$0xff] %v1245
    %s1588 = scalar_lea.vmem [#allocation1], 17
    %1589 = vst [vmem:[%s1588] ss:$2 sm:$0xff] %v1270
    %s1590 = scalar_lea.vmem [#allocation1], 32
    %1591 = vst [vmem:[%s1590] ss:$2 sm:$0xff] %v1295
    %s1592 = scalar_lea.vmem [#allocation1], 33
    %1593 = vst [vmem:[%s1592] ss:$2 sm:$0xff] %v1320
    %s1594 = scalar_lea.vmem [#allocation1], 48
    %1595 = vst [vmem:[%s1594] ss:$2 sm:$0xff] %v1345
    %s1596 = scalar_lea.vmem [#allocation1], 49
    %1597 = vst [vmem:[%s1596] ss:$2 sm:$0xff] %v1370
    %v1598 = vld.sshfl [vmem:[#allocation1] sm:$0xff pattern:$0x75316420]
    %v1599 = vld.sshfl [vmem:[#allocation1 + $0x10] sm:$0xff pattern:$0x75316420]
    %v1600 = vld.sshfl [vmem:[#allocation1 + $0x20] sm:$0xff pattern:$0x75316420]
    %v1601 = vld.sshfl [vmem:[#allocation1 + $0x30] sm:$0xff pattern:$0x75316420]
    %v1602 = vsel %vm384, %v1598, 0
    %v1604 = vsel %vm384, %v1599, 0
    %v1606 = vsel %vm384, %v1600, 0
    %v1608 = vsel %vm384, %v1601, 0
    %1610 = vmatpush.msra.mxu0 0.0
    %1611 = vmatpush.msra.mxu0 0.0
    %1612 = vmatpush.msra.mxu0 0.0
    %1613 = vmatpush.msra.mxu0 0.0
    %1614 = vmatpush.msra.mxu0 0.0
    %1615 = vmatpush.msra.mxu0 0.0
    %1616 = vmatpush.msra.mxu0 0.0
    %1617 = vmatpush.msra.mxu0 0.0
    %1618 = vmatpush.msra.mxu0 0.0
    %1619 = vmatpush.msra.mxu0 0.0
    %1620 = vmatpush.msra.mxu0 0.0
    %1621 = vmatpush.msra.mxu0 0.0
    %1622 = vmatpush.msra.mxu0 0.0
    %1623 = vmatpush.msra.mxu0 0.0
    %1624 = vmatpush.msra.mxu0 %v1574
    %1625 = vmatpush.msra.mxu0 %v1573
    %1626 = vmatmul.f32.gmra.mxu0 %v1602
    %v1627 = vpop.f32.mrf.mxu0
    %v1628 = vadd.f32 0.0, %v1627
    %1629 = vmatmul.f32.gmra.mxu0 %v1604
    %v1630 = vpop.f32.mrf.mxu0
    %v1631 = vadd.f32 0.0, %v1630
    %1632 = vmatmul.f32.gmra.mxu0 %v1606
    %v1633 = vpop.f32.mrf.mxu0
    %v1634 = vadd.f32 0.0, %v1633
    %1635 = vmatmul.f32.gmra.mxu0 %v1608
    %v1636 = vpop.f32.mrf.mxu0
    %v1637 = vadd.f32 0.0, %v1636
    %1638 = vdwg.mxu0
    %v1639 = vperm.slane %v1572, 0
    %v1640 = vadd.f32 %v1639, %v1628
    %v1641 = vadd.f32 %v1639, %v1631
    %v1642 = vadd.f32 %v1639, %v1634
    %v1643 = vadd.f32 %v1639, %v1637
    %v1644 = vld [vmem:[#allocation2 + $0x448] sm:$0xff]
    %v1645 = vld [vmem:[#allocation2 + $0x450] sm:$0xff]
    %1654 = vst [vmem:[#allocation1] ss:$2 sm:$0xff] %v1395
    %s1655 = scalar_lea.vmem [#allocation1], 1
    %1656 = vst [vmem:[%s1655] ss:$2 sm:$0xff] %v1420
    %s1657 = scalar_lea.vmem [#allocation1], 16
    %1658 = vst [vmem:[%s1657] ss:$2 sm:$0xff] %v1445
    %s1659 = scalar_lea.vmem [#allocation1], 17
    %1660 = vst [vmem:[%s1659] ss:$2 sm:$0xff] %v1470
    %s1661 = scalar_lea.vmem [#allocation1], 32
    %1662 = vst [vmem:[%s1661] ss:$2 sm:$0xff] %v1495
    %s1663 = scalar_lea.vmem [#allocation1], 33
    %1664 = vst [vmem:[%s1663] ss:$2 sm:$0xff] %v1520
    %s1665 = scalar_lea.vmem [#allocation1], 48
    %1666 = vst [vmem:[%s1665] ss:$2 sm:$0xff] %v1545
    %s1667 = scalar_lea.vmem [#allocation1], 49
    %1668 = vst [vmem:[%s1667] ss:$2 sm:$0xff] %v1570
    %v1669 = vld.sshfl [vmem:[#allocation1] sm:$0xff pattern:$0x75316420]
    %v1670 = vld.sshfl [vmem:[#allocation1 + $0x10] sm:$0xff pattern:$0x75316420]
    %v1671 = vld.sshfl [vmem:[#allocation1 + $0x20] sm:$0xff pattern:$0x75316420]
    %v1672 = vld.sshfl [vmem:[#allocation1 + $0x30] sm:$0xff pattern:$0x75316420]
    %v1673 = vsel %vm384, %v1669, 0
    %v1675 = vsel %vm384, %v1670, 0
    %v1677 = vsel %vm384, %v1671, 0
    %v1679 = vsel %vm384, %v1672, 0
    %1681 = vmatpush.msra.mxu0 0.0
    %1682 = vmatpush.msra.mxu0 0.0
    %1683 = vmatpush.msra.mxu0 0.0
    %1684 = vmatpush.msra.mxu0 0.0
    %1685 = vmatpush.msra.mxu0 0.0
    %1686 = vmatpush.msra.mxu0 0.0
    %1687 = vmatpush.msra.mxu0 0.0
    %1688 = vmatpush.msra.mxu0 0.0
    %1689 = vmatpush.msra.mxu0 0.0
    %1690 = vmatpush.msra.mxu0 0.0
    %1691 = vmatpush.msra.mxu0 0.0
    %1692 = vmatpush.msra.mxu0 0.0
    %1693 = vmatpush.msra.mxu0 0.0
    %1694 = vmatpush.msra.mxu0 0.0
    %1695 = vmatpush.msra.mxu0 %v1645
    %1696 = vmatpush.msra.mxu0 %v1644
    %1697 = vmatmul.f32.gmra.mxu0 %v1673
    %v1698 = vpop.f32.mrf.mxu0
    %v1699 = vadd.f32 0.0, %v1698
    %1700 = vmatmul.f32.gmra.mxu0 %v1675
    %v1701 = vpop.f32.mrf.mxu0
    %v1702 = vadd.f32 0.0, %v1701
    %1703 = vmatmul.f32.gmra.mxu0 %v1677
    %v1704 = vpop.f32.mrf.mxu0
    %v1705 = vadd.f32 0.0, %v1704
    %1706 = vmatmul.f32.gmra.mxu0 %v1679
    %v1707 = vpop.f32.mrf.mxu0
    %v1708 = vadd.f32 0.0, %v1707
    %1709 = vdwg.mxu0
    %v1710 = vadd.f32 %v1640, %v1699
    %v1711 = vadd.f32 %v1641, %v1702
    %v1712 = vadd.f32 %v1642, %v1705
    %v1713 = vadd.f32 %v1643, %v1708
    %v1714 = vadd.f32 %v102, %v1710
    %v1715 = vadd.f32 %v105, %v1711
    %v1716 = vadd.f32 %v108, %v1712
    %v1717 = vadd.f32 %v111, %v1713
    %v1718 = vsel %vm119, %v1714, 0.0
    %1719 = vadd.xlane.f32.xlu0 %v1718
    %v1720 = vpop.xlane.xlu0 %1719
    %v1721 = vsel %vm119, %v1715, 0.0
    %1722 = vadd.xlane.f32.xlu0 %v1721
    %v1723 = vpop.xlane.xlu0 %1722
    %v1724 = vsel %vm119, %v1716, 0.0
    %1725 = vadd.xlane.f32.xlu0 %v1724
    %v1726 = vpop.xlane.xlu0 %1725
    %v1727 = vsel %vm119, %v1717, 0.0
    %1728 = vadd.xlane.f32.xlu0 %v1727
    %v1729 = vpop.xlane.xlu0 %1728
    %v1730 = vrcp.pop 32.0
    %v1731 = vmul.f32 32.0, %v1730
    %v1732 = vsub.f32 1.0, %v1731
    %v1733 = vmul.f32 %v1730, %v1732
    %v1734 = vadd.f32 %v1730, %v1733
    %vm1735 = vweird.f32 %v1730
    %v1736 = vsel %vm1735, %v1730, %v1734
    %v1737 = vmul.f32 %v1720, %v1736
    %v1738 = vmul.f32 %v1723, %v1736
    %v1739 = vmul.f32 %v1726, %v1736
    %v1740 = vmul.f32 %v1729, %v1736
    %v1741 = vsub.f32 %v1714, %v1737
    %v1742 = vsub.f32 %v1715, %v1738
    %v1743 = vsub.f32 %v1716, %v1739
    %v1744 = vsub.f32 %v1717, %v1740
    %v1745 = vmul.f32 %v1741, %v1741
    %v1746 = vmul.f32 %v1742, %v1742
    %v1747 = vmul.f32 %v1743, %v1743
    %v1748 = vmul.f32 %v1744, %v1744
    %v1749 = vsel %vm119, %v1745, 0.0
    %1750 = vadd.xlane.f32.xlu0 %v1749
    %v1751 = vpop.xlane.xlu0 %1750
    %v1752 = vsel %vm119, %v1746, 0.0
    %1753 = vadd.xlane.f32.xlu0 %v1752
    %v1754 = vpop.xlane.xlu0 %1753
    %v1755 = vsel %vm119, %v1747, 0.0
    %1756 = vadd.xlane.f32.xlu0 %v1755
    %v1757 = vpop.xlane.xlu0 %1756
    %v1758 = vsel %vm119, %v1748, 0.0
    %1759 = vadd.xlane.f32.xlu0 %v1758
    %v1760 = vpop.xlane.xlu0 %1759
    %v1761 = vmul.f32 %v1751, %v1736
    %v1762 = vmul.f32 %v1754, %v1736
    %v1763 = vmul.f32 %v1757, %v1736
    %v1764 = vmul.f32 %v1760, %v1736
    %v1765 = vadd.f32 %v1761, 1e-05
    %v1766 = vadd.f32 %v1762, 1e-05
    %v1767 = vadd.f32 %v1763, 1e-05
    %v1768 = vadd.f32 %v1764, 1e-05
    %v1769 = vrsqrt.pop %v1765
    %v1770 = vmul.f32 %v1769, %v1765
    %v1771 = vmul.f32 %v1770, %v1769
    %v1772 = vmul.f32 0.5, %v1771
    %v1773 = vsub.f32 1.5, %v1772
    %v1774 = vmul.f32 %v1769, %v1773
    %vm1775 = vweird.f32 %v1765
    %vm1776 = vweird.f32 %v1769
    %vm1777 = vmor %vm1775, %vm1776
    %v1778 = vsel %vm1777, %v1769, %v1774
    %v1779 = vrsqrt.pop %v1766
    %v1780 = vmul.f32 %v1779, %v1766
    %v1781 = vmul.f32 %v1780, %v1779
    %v1782 = vmul.f32 0.5, %v1781
    %v1783 = vsub.f32 1.5, %v1782
    %v1784 = vmul.f32 %v1779, %v1783
    %vm1785 = vweird.f32 %v1766
    %vm1786 = vweird.f32 %v1779
    %vm1787 = vmor %vm1785, %vm1786
    %v1788 = vsel %vm1787, %v1779, %v1784
    %v1789 = vrsqrt.pop %v1767
    %v1790 = vmul.f32 %v1789, %v1767
    %v1791 = vmul.f32 %v1790, %v1789
    %v1792 = vmul.f32 0.5, %v1791
    %v1793 = vsub.f32 1.5, %v1792
    %v1794 = vmul.f32 %v1789, %v1793
    %vm1795 = vweird.f32 %v1767
    %vm1796 = vweird.f32 %v1789
    %vm1797 = vmor %vm1795, %vm1796
    %v1798 = vsel %vm1797, %v1789, %v1794
    %v1799 = vrsqrt.pop %v1768
    %v1800 = vmul.f32 %v1799, %v1768
    %v1801 = vmul.f32 %v1800, %v1799
    %v1802 = vmul.f32 0.5, %v1801
    %v1803 = vsub.f32 1.5, %v1802
    %v1804 = vmul.f32 %v1799, %v1803
    %vm1805 = vweird.f32 %v1768
    %vm1806 = vweird.f32 %v1799
    %vm1807 = vmor %vm1805, %vm1806
    %v1808 = vsel %vm1807, %v1799, %v1804
    %v1809 = vmul.f32 %v1741, %v1778
    %v1810 = vmul.f32 %v1742, %v1788
    %v1811 = vmul.f32 %v1743, %v1798
    %v1812 = vmul.f32 %v1744, %v1808
    %v1813 = vld [vmem:[#allocation2 + $0x510] sm:$0x1]
    %v1814 = vperm.slane %v1813, 0
    %v1815 = vmul.f32 %v1809, %v1814
    %v1816 = vmul.f32 %v1810, %v1814
    %v1817 = vmul.f32 %v1811, %v1814
    %v1818 = vmul.f32 %v1812, %v1814
    %v1819 = vld [vmem:[#allocation2 + $0x518] sm:$0x1]
    %v1820 = vperm.slane %v1819, 0
    %v1821 = vadd.f32 %v1815, %v1820
    %v1822 = vadd.f32 %v1816, %v1820
    %v1823 = vadd.f32 %v1817, %v1820
    %v1824 = vadd.f32 %v1818, %v1820
    %v1825 = vld [vmem:[#allocation2 + $0x460] sm:$0xff]
    %v1826 = vld [vmem:[#allocation2 + $0x468] sm:$0xff]
    %v1827 = vld [vmem:[#allocation2 + $0x470] sm:$0xff]
    %v1828 = vld [vmem:[#allocation2 + $0x478] sm:$0xff]
    %v1829 = vld [vmem:[#allocation2 + $0x480] sm:$0x1]
    %v1830 = vperm.slane %v1829, 0
    %v1832 = vsel %vm119, %v1821, 0
    %v1835 = vsel %vm119, %v1822, 0
    %v1838 = vsel %vm119, %v1823, 0
    %v1841 = vsel %vm119, %v1824, 0
    %1843 = vmatpush.msra.mxu0 0.0
    %1844 = vmatpush.msra.mxu0 0.0
    %1845 = vmatpush.msra.mxu0 0.0
    %1846 = vmatpush.msra.mxu0 0.0
    %1847 = vmatpush.msra.mxu0 0.0
    %1848 = vmatpush.msra.mxu0 0.0
    %1849 = vmatpush.msra.mxu0 0.0
    %1850 = vmatpush.msra.mxu0 0.0
    %1851 = vmatpush.msra.mxu0 0.0
    %1852 = vmatpush.msra.mxu0 0.0
    %1853 = vmatpush.msra.mxu0 0.0
    %1854 = vmatpush.msra.mxu0 0.0
    %1855 = vmatpush.msra.mxu0 %v1828
    %1856 = vmatpush.msra.mxu0 %v1827
    %1857 = vmatpush.msra.mxu0 %v1826
    %1858 = vmatpush.msra.mxu0 %v1825
    %1859 = vmatmul.f32.gmra.mxu0 %v1832
    %v1860 = vpop.f32.mrf.mxu0
    %v1861 = vadd.f32 %v1830, %v1860
    %1862 = vmatmul.f32.gmra.mxu0 %v1835
    %v1863 = vpop.f32.mrf.mxu0
    %v1864 = vadd.f32 %v1830, %v1863
    %1865 = vmatmul.f32.gmra.mxu0 %v1838
    %v1866 = vpop.f32.mrf.mxu0
    %v1867 = vadd.f32 %v1830, %v1866
    %1868 = vmatmul.f32.gmra.mxu0 %v1841
    %v1869 = vpop.f32.mrf.mxu0
    %v1870 = vadd.f32 %v1830, %v1869
    %1871 = vdwg.mxu0
    %v1872 = vmax.f32 %v1861, 0.0
    %v1873 = vmax.f32 %v1864, 0.0
    %v1874 = vmax.f32 %v1867, 0.0
    %v1875 = vmax.f32 %v1870, 0.0
    %v1876 = vld [vmem:[#allocation2 + $0x488] sm:$0xff]
    %v1877 = vld [vmem:[#allocation2 + $0x490] sm:$0xff]
    %v1878 = vld [vmem:[#allocation2 + $0x498] sm:$0xff]
    %v1879 = vld [vmem:[#allocation2 + $0x4a0] sm:$0xff]
    %v1880 = vld [vmem:[#allocation2 + $0x4a8] sm:$0xff]
    %v1881 = vld [vmem:[#allocation2 + $0x4b0] sm:$0xff]
    %v1882 = vld [vmem:[#allocation2 + $0x4b8] sm:$0xff]
    %v1883 = vld [vmem:[#allocation2 + $0x4c0] sm:$0xff]
    %v1884 = vld [vmem:[#allocation2 + $0x4c8] sm:$0xff]
    %v1885 = vld [vmem:[#allocation2 + $0x4d0] sm:$0xff]
    %v1886 = vld [vmem:[#allocation2 + $0x4d8] sm:$0xff]
    %v1887 = vld [vmem:[#allocation2 + $0x4e0] sm:$0xff]
    %v1888 = vld [vmem:[#allocation2 + $0x4e8] sm:$0xff]
    %v1889 = vld [vmem:[#allocation2 + $0x4f0] sm:$0xff]
    %v1890 = vld [vmem:[#allocation2 + $0x4f8] sm:$0xff]
    %v1891 = vld [vmem:[#allocation2 + $0x500] sm:$0xff]
    %v1892 = vld [vmem:[#allocation2 + $0x508] sm:$0x1]
    %v1893 = vperm.slane %v1892, 0
    %1894 = vmatpush.msra.mxu0 %v1891
    %1895 = vmatpush.msra.mxu0 %v1890
    %1896 = vmatpush.msra.mxu0 %v1889
    %1897 = vmatpush.msra.mxu0 %v1888
    %1898 = vmatpush.msra.mxu0 %v1887
    %1899 = vmatpush.msra.mxu0 %v1886
    %1900 = vmatpush.msra.mxu0 %v1885
    %1901 = vmatpush.msra.mxu0 %v1884
    %1902 = vmatpush.msra.mxu0 %v1883
    %1903 = vmatpush.msra.mxu0 %v1882
    %1904 = vmatpush.msra.mxu0 %v1881
    %1905 = vmatpush.msra.mxu0 %v1880
    %1906 = vmatpush.msra.mxu0 %v1879
    %1907 = vmatpush.msra.mxu0 %v1878
    %1908 = vmatpush.msra.mxu0 %v1877
    %1909 = vmatpush.msra.mxu0 %v1876
    %1910 = vmatmul.f32.gmra.mxu0 %v1872
    %v1911 = vpop.f32.mrf.mxu0
    %v1912 = vadd.f32 %v1893, %v1911
    %1913 = vmatmul.f32.gmra.mxu0 %v1873
    %v1914 = vpop.f32.mrf.mxu0
    %v1915 = vadd.f32 %v1893, %v1914
    %1916 = vmatmul.f32.gmra.mxu0 %v1874
    %v1917 = vpop.f32.mrf.mxu0
    %v1918 = vadd.f32 %v1893, %v1917
    %1919 = vmatmul.f32.gmra.mxu0 %v1875
    %v1920 = vpop.f32.mrf.mxu0
    %v1921 = vadd.f32 %v1893, %v1920
    %1922 = vdwg.mxu0
    %v1923 = vadd.f32 %v1821, %v1912
    %v1924 = vadd.f32 %v1822, %v1915
    %v1925 = vadd.f32 %v1823, %v1918
    %v1926 = vadd.f32 %v1824, %v1921
    %v1927 = vsel %vm119, %v1923, 0.0
    %1928 = vadd.xlane.f32.xlu0 %v1927
    %v1929 = vpop.xlane.xlu0 %1928
    %v1930 = vsel %vm119, %v1924, 0.0
    %1931 = vadd.xlane.f32.xlu0 %v1930
    %v1932 = vpop.xlane.xlu0 %1931
    %v1933 = vsel %vm119, %v1925, 0.0
    %1934 = vadd.xlane.f32.xlu0 %v1933
    %v1935 = vpop.xlane.xlu0 %1934
    %v1936 = vsel %vm119, %v1926, 0.0
    %1937 = vadd.xlane.f32.xlu0 %v1936
    %v1938 = vpop.xlane.xlu0 %1937
    %v1939 = vmul.f32 %v1929, %v1736
    %v1940 = vmul.f32 %v1932, %v1736
    %v1941 = vmul.f32 %v1935, %v1736
    %v1942 = vmul.f32 %v1938, %v1736
    %v1943 = vsub.f32 %v1923, %v1939
    %v1944 = vsub.f32 %v1924, %v1940
    %v1945 = vsub.f32 %v1925, %v1941
    %v1946 = vsub.f32 %v1926, %v1942
    %v1947 = vmul.f32 %v1943, %v1943
    %v1948 = vmul.f32 %v1944, %v1944
    %v1949 = vmul.f32 %v1945, %v1945
    %v1950 = vmul.f32 %v1946, %v1946
    %v1951 = vsel %vm119, %v1947, 0.0
    %1952 = vadd.xlane.f32.xlu0 %v1951
    %v1953 = vpop.xlane.xlu0 %1952
    %v1954 = vsel %vm119, %v1948, 0.0
    %1955 = vadd.xlane.f32.xlu0 %v1954
    %v1956 = vpop.xlane.xlu0 %1955
    %v1957 = vsel %vm119, %v1949, 0.0
    %1958 = vadd.xlane.f32.xlu0 %v1957
    %v1959 = vpop.xlane.xlu0 %1958
    %v1960 = vsel %vm119, %v1950, 0.0
    %1961 = vadd.xlane.f32.xlu0 %v1960
    %v1962 = vpop.xlane.xlu0 %1961
    %v1963 = vmul.f32 %v1953, %v1736
    %v1964 = vmul.f32 %v1956, %v1736
    %v1965 = vmul.f32 %v1959, %v1736
    %v1966 = vmul.f32 %v1962, %v1736
    %v1967 = vadd.f32 %v1963, 1e-05
    %v1968 = vadd.f32 %v1964, 1e-05
    %v1969 = vadd.f32 %v1965, 1e-05
    %v1970 = vadd.f32 %v1966, 1e-05
    %v1971 = vrsqrt.pop %v1967
    %v1972 = vmul.f32 %v1971, %v1967
    %v1973 = vmul.f32 %v1972, %v1971
    %v1974 = vmul.f32 0.5, %v1973
    %v1975 = vsub.f32 1.5, %v1974
    %v1976 = vmul.f32 %v1971, %v1975
    %vm1977 = vweird.f32 %v1967
    %vm1978 = vweird.f32 %v1971
    %vm1979 = vmor %vm1977, %vm1978
    %v1980 = vsel %vm1979, %v1971, %v1976
    %v1981 = vrsqrt.pop %v1968
    %v1982 = vmul.f32 %v1981, %v1968
    %v1983 = vmul.f32 %v1982, %v1981
    %v1984 = vmul.f32 0.5, %v1983
    %v1985 = vsub.f32 1.5, %v1984
    %v1986 = vmul.f32 %v1981, %v1985
    %vm1987 = vweird.f32 %v1968
    %vm1988 = vweird.f32 %v1981
    %vm1989 = vmor %vm1987, %vm1988
    %v1990 = vsel %vm1989, %v1981, %v1986
    %v1991 = vrsqrt.pop %v1969
    %v1992 = vmul.f32 %v1991, %v1969
    %v1993 = vmul.f32 %v1992, %v1991
    %v1994 = vmul.f32 0.5, %v1993
    %v1995 = vsub.f32 1.5, %v1994
    %v1996 = vmul.f32 %v1991, %v1995
    %vm1997 = vweird.f32 %v1969
    %vm1998 = vweird.f32 %v1991
    %vm1999 = vmor %vm1997, %vm1998
    %v2000 = vsel %vm1999, %v1991, %v1996
    %v2001 = vrsqrt.pop %v1970
    %v2002 = vmul.f32 %v2001, %v1970
    %v2003 = vmul.f32 %v2002, %v2001
    %v2004 = vmul.f32 0.5, %v2003
    %v2005 = vsub.f32 1.5, %v2004
    %v2006 = vmul.f32 %v2001, %v2005
    %vm2007 = vweird.f32 %v1970
    %vm2008 = vweird.f32 %v2001
    %vm2009 = vmor %vm2007, %vm2008
    %v2010 = vsel %vm2009, %v2001, %v2006
    %v2011 = vmul.f32 %v1943, %v1980
    %v2012 = vmul.f32 %v1944, %v1990
    %v2013 = vmul.f32 %v1945, %v2000
    %v2014 = vmul.f32 %v1946, %v2010
    %v2015 = vld [vmem:[#allocation2 + $0x520] sm:$0x1]
    %v2016 = vperm.slane %v2015, 0
    %v2017 = vmul.f32 %v2011, %v2016
    %v2018 = vmul.f32 %v2012, %v2016
    %v2019 = vmul.f32 %v2013, %v2016
    %v2020 = vmul.f32 %v2014, %v2016
    %v2021 = vld [vmem:[#allocation2 + $0x528] sm:$0x1]
    %v2022 = vperm.slane %v2021, 0
    %v2023 = vadd.f32 %v2017, %v2022
    %v2024 = vadd.f32 %v2018, %v2022
    %v2025 = vadd.f32 %v2019, %v2022
    %v2026 = vadd.f32 %v2020, %v2022
    %v2027 = vld [vmem:[#allocation2 + $0x530] sm:$0xff]
    %v2028 = vld [vmem:[#allocation2 + $0x538] sm:$0xff]
    %v2029 = vld [vmem:[#allocation2 + $0x540] sm:$0xff]
    %v2030 = vld [vmem:[#allocation2 + $0x548] sm:$0xff]
    %v2031 = vld [vmem:[#allocation2 + $0x590] sm:$0x1]
    %v2032 = vperm.slane %v2031, 0
    %v2034 = vsel %vm119, %v2023, 0
    %v2037 = vsel %vm119, %v2024, 0
    %v2040 = vsel %vm119, %v2025, 0
    %v2043 = vsel %vm119, %v2026, 0
    %2045 = vmatpush.msra.mxu0 0.0
    %2046 = vmatpush.msra.mxu0 0.0
    %2047 = vmatpush.msra.mxu0 0.0
    %2048 = vmatpush.msra.mxu0 0.0
    %2049 = vmatpush.msra.mxu0 0.0
    %2050 = vmatpush.msra.mxu0 0.0
    %2051 = vmatpush.msra.mxu0 0.0
    %2052 = vmatpush.msra.mxu0 0.0
    %2053 = vmatpush.msra.mxu0 0.0
    %2054 = vmatpush.msra.mxu0 0.0
    %2055 = vmatpush.msra.mxu0 0.0
    %2056 = vmatpush.msra.mxu0 0.0
    %2057 = vmatpush.msra.mxu0 %v2030
    %2058 = vmatpush.msra.mxu0 %v2029
    %2059 = vmatpush.msra.mxu0 %v2028
    %2060 = vmatpush.msra.mxu0 %v2027
    %2061 = vmatmul.f32.gmra.mxu0 %v2034
    %v2062 = vpop.f32.mrf.mxu0
    %v2063 = vadd.f32 %v2032, %v2062
    %2064 = vmatmul.f32.gmra.mxu0 %v2037
    %v2065 = vpop.f32.mrf.mxu0
    %v2066 = vadd.f32 %v2032, %v2065
    %2067 = vmatmul.f32.gmra.mxu0 %v2040
    %v2068 = vpop.f32.mrf.mxu0
    %v2069 = vadd.f32 %v2032, %v2068
    %2070 = vmatmul.f32.gmra.mxu0 %v2043
    %v2071 = vpop.f32.mrf.mxu0
    %v2072 = vadd.f32 %v2032, %v2071
    %2073 = vdwg.mxu0
    %v2078 = vrot.slane %v2063, 4
    %v2079 = vrot.slane %v2066, 4
    %v2080 = vrot.slane %v2069, 4
    %v2081 = vrot.slane %v2072, 4
    %v2082 = vld [vmem:[#allocation2 + $0x550] sm:$0xff]
    %v2083 = vld [vmem:[#allocation2 + $0x558] sm:$0xff]
    %v2084 = vld [vmem:[#allocation2 + $0x560] sm:$0xff]
    %v2085 = vld [vmem:[#allocation2 + $0x568] sm:$0xff]
    %v2086 = vld [vmem:[#allocation2 + $0x598] sm:$0x1]
    %v2087 = vperm.slane %v2086, 0
    %2088 = vmatpush.msra.mxu0 0.0
    %2089 = vmatpush.msra.mxu0 0.0
    %2090 = vmatpush.msra.mxu0 0.0
    %2091 = vmatpush.msra.mxu0 0.0
    %2092 = vmatpush.msra.mxu0 0.0
    %2093 = vmatpush.msra.mxu0 0.0
    %2094 = vmatpush.msra.mxu0 0.0
    %2095 = vmatpush.msra.mxu0 0.0
    %2096 = vmatpush.msra.mxu0 0.0
    %2097 = vmatpush.msra.mxu0 0.0
    %2098 = vmatpush.msra.mxu0 0.0
    %2099 = vmatpush.msra.mxu0 0.0
    %2100 = vmatpush.msra.mxu0 %v2085
    %2101 = vmatpush.msra.mxu0 %v2084
    %2102 = vmatpush.msra.mxu0 %v2083
    %2103 = vmatpush.msra.mxu0 %v2082
    %2104 = vmatmul.f32.gmra.mxu0 %v2034
    %v2105 = vpop.f32.mrf.mxu0
    %v2106 = vadd.f32 %v2087, %v2105
    %2107 = vmatmul.f32.gmra.mxu0 %v2037
    %v2108 = vpop.f32.mrf.mxu0
    %v2109 = vadd.f32 %v2087, %v2108
    %2110 = vmatmul.f32.gmra.mxu0 %v2040
    %v2111 = vpop.f32.mrf.mxu0
    %v2112 = vadd.f32 %v2087, %v2111
    %2113 = vmatmul.f32.gmra.mxu0 %v2043
    %v2114 = vpop.f32.mrf.mxu0
    %v2115 = vadd.f32 %v2087, %v2114
    %2116 = vdwg.mxu0
    %v2121 = vrot.slane %v2106, 4
    %v2122 = vrot.slane %v2109, 4
    %v2123 = vrot.slane %v2112, 4
    %v2124 = vrot.slane %v2115, 4
    %v2125 = vld [vmem:[#allocation2 + $0x570] sm:$0xff]
    %v2126 = vld [vmem:[#allocation2 + $0x578] sm:$0xff]
    %v2127 = vld [vmem:[#allocation2 + $0x580] sm:$0xff]
    %v2128 = vld [vmem:[#allocation2 + $0x588] sm:$0xff]
    %v2129 = vld [vmem:[#allocation2 + $0x5a0] sm:$0x1]
    %v2130 = vperm.slane %v2129, 0
    %2131 = vmatpush.msra.mxu0 0.0
    %2132 = vmatpush.msra.mxu0 0.0
    %2133 = vmatpush.msra.mxu0 0.0
    %2134 = vmatpush.msra.mxu0 0.0
    %2135 = vmatpush.msra.mxu0 0.0
    %2136 = vmatpush.msra.mxu0 0.0
    %2137 = vmatpush.msra.mxu0 0.0
    %2138 = vmatpush.msra.mxu0 0.0
    %2139 = vmatpush.msra.mxu0 0.0
    %2140 = vmatpush.msra.mxu0 0.0
    %2141 = vmatpush.msra.mxu0 0.0
    %2142 = vmatpush.msra.mxu0 0.0
    %2143 = vmatpush.msra.mxu0 %v2128
    %2144 = vmatpush.msra.mxu0 %v2127
    %2145 = vmatpush.msra.mxu0 %v2126
    %2146 = vmatpush.msra.mxu0 %v2125
    %2147 = vmatmul.f32.gmra.mxu0 %v2034
    %v2148 = vpop.f32.mrf.mxu0
    %v2149 = vadd.f32 %v2130, %v2148
    %2150 = vmatmul.f32.gmra.mxu0 %v2037
    %v2151 = vpop.f32.mrf.mxu0
    %v2152 = vadd.f32 %v2130, %v2151
    %2153 = vmatmul.f32.gmra.mxu0 %v2040
    %v2154 = vpop.f32.mrf.mxu0
    %v2155 = vadd.f32 %v2130, %v2154
    %2156 = vmatmul.f32.gmra.mxu0 %v2043
    %v2157 = vpop.f32.mrf.mxu0
    %v2158 = vadd.f32 %v2130, %v2157
    %2159 = vdwg.mxu0
    %v2164 = vrot.slane %v2149, 4
    %v2165 = vrot.slane %v2152, 4
    %v2166 = vrot.slane %v2155, 4
    %v2167 = vrot.slane %v2158, 4
    %v2168 = vld [vmem:[#allocation2 + $0x5b8] sm:$0xff]
    %v2169 = vld [vmem:[#allocation2 + $0x5c0] sm:$0xff]
    %v2170 = vld [vmem:[#allocation2 + $0x5c8] sm:$0xff]
    %v2171 = vld [vmem:[#allocation2 + $0x5d0] sm:$0xff]
    %v2172 = vld [vmem:[#allocation2 + $0x618] sm:$0x1]
    %v2173 = vperm.slane %v2172, 0
    %2174 = vmatpush.msra.mxu0 0.0
    %2175 = vmatpush.msra.mxu0 0.0
    %2176 = vmatpush.msra.mxu0 0.0
    %2177 = vmatpush.msra.mxu0 0.0
    %2178 = vmatpush.msra.mxu0 0.0
    %2179 = vmatpush.msra.mxu0 0.0
    %2180 = vmatpush.msra.mxu0 0.0
    %2181 = vmatpush.msra.mxu0 0.0
    %2182 = vmatpush.msra.mxu0 0.0
    %2183 = vmatpush.msra.mxu0 0.0
    %2184 = vmatpush.msra.mxu0 0.0
    %2185 = vmatpush.msra.mxu0 0.0
    %2186 = vmatpush.msra.mxu0 %v2171
    %2187 = vmatpush.msra.mxu0 %v2170
    %2188 = vmatpush.msra.mxu0 %v2169
    %2189 = vmatpush.msra.mxu0 %v2168
    %2190 = vmatmul.f32.gmra.mxu0 %v2034
    %v2191 = vpop.f32.mrf.mxu0
    %v2192 = vadd.f32 %v2173, %v2191
    %2193 = vmatmul.f32.gmra.mxu0 %v2037
    %v2194 = vpop.f32.mrf.mxu0
    %v2195 = vadd.f32 %v2173, %v2194
    %2196 = vmatmul.f32.gmra.mxu0 %v2040
    %v2197 = vpop.f32.mrf.mxu0
    %v2198 = vadd.f32 %v2173, %v2197
    %2199 = vmatmul.f32.gmra.mxu0 %v2043
    %v2200 = vpop.f32.mrf.mxu0
    %v2201 = vadd.f32 %v2173, %v2200
    %2202 = vdwg.mxu0
    %v2207 = vrot.slane %v2192, 4
    %v2208 = vrot.slane %v2195, 4
    %v2209 = vrot.slane %v2198, 4
    %v2210 = vrot.slane %v2201, 4
    %v2211 = vld [vmem:[#allocation2 + $0x5d8] sm:$0xff]
    %v2212 = vld [vmem:[#allocation2 + $0x5e0] sm:$0xff]
    %v2213 = vld [vmem:[#allocation2 + $0x5e8] sm:$0xff]
    %v2214 = vld [vmem:[#allocation2 + $0x5f0] sm:$0xff]
    %v2215 = vld [vmem:[#allocation2 + $0x620] sm:$0x1]
    %v2216 = vperm.slane %v2215, 0
    %2217 = vmatpush.msra.mxu0 0.0
    %2218 = vmatpush.msra.mxu0 0.0
    %2219 = vmatpush.msra.mxu0 0.0
    %2220 = vmatpush.msra.mxu0 0.0
    %2221 = vmatpush.msra.mxu0 0.0
    %2222 = vmatpush.msra.mxu0 0.0
    %2223 = vmatpush.msra.mxu0 0.0
    %2224 = vmatpush.msra.mxu0 0.0
    %2225 = vmatpush.msra.mxu0 0.0
    %2226 = vmatpush.msra.mxu0 0.0
    %2227 = vmatpush.msra.mxu0 0.0
    %2228 = vmatpush.msra.mxu0 0.0
    %2229 = vmatpush.msra.mxu0 %v2214
    %2230 = vmatpush.msra.mxu0 %v2213
    %2231 = vmatpush.msra.mxu0 %v2212
    %2232 = vmatpush.msra.mxu0 %v2211
    %2233 = vmatmul.f32.gmra.mxu0 %v2034
    %v2234 = vpop.f32.mrf.mxu0
    %v2235 = vadd.f32 %v2216, %v2234
    %2236 = vmatmul.f32.gmra.mxu0 %v2037
    %v2237 = vpop.f32.mrf.mxu0
    %v2238 = vadd.f32 %v2216, %v2237
    %2239 = vmatmul.f32.gmra.mxu0 %v2040
    %v2240 = vpop.f32.mrf.mxu0
    %v2241 = vadd.f32 %v2216, %v2240
    %2242 = vmatmul.f32.gmra.mxu0 %v2043
    %v2243 = vpop.f32.mrf.mxu0
    %v2244 = vadd.f32 %v2216, %v2243
    %2245 = vdwg.mxu0
    %v2250 = vrot.slane %v2235, 4
    %v2251 = vrot.slane %v2238, 4
    %v2252 = vrot.slane %v2241, 4
    %v2253 = vrot.slane %v2244, 4
    %v2254 = vld [vmem:[#allocation2 + $0x5f8] sm:$0xff]
    %v2255 = vld [vmem:[#allocation2 + $0x600] sm:$0xff]
    %v2256 = vld [vmem:[#allocation2 + $0x608] sm:$0xff]
    %v2257 = vld [vmem:[#allocation2 + $0x610] sm:$0xff]
    %v2258 = vld [vmem:[#allocation2 + $0x628] sm:$0x1]
    %v2259 = vperm.slane %v2258, 0
    %2260 = vmatpush.msra.mxu0 0.0
    %2261 = vmatpush.msra.mxu0 0.0
    %2262 = vmatpush.msra.mxu0 0.0
    %2263 = vmatpush.msra.mxu0 0.0
    %2264 = vmatpush.msra.mxu0 0.0
    %2265 = vmatpush.msra.mxu0 0.0
    %2266 = vmatpush.msra.mxu0 0.0
    %2267 = vmatpush.msra.mxu0 0.0
    %2268 = vmatpush.msra.mxu0 0.0
    %2269 = vmatpush.msra.mxu0 0.0
    %2270 = vmatpush.msra.mxu0 0.0
    %2271 = vmatpush.msra.mxu0 0.0
    %2272 = vmatpush.msra.mxu0 %v2257
    %2273 = vmatpush.msra.mxu0 %v2256
    %2274 = vmatpush.msra.mxu0 %v2255
    %2275 = vmatpush.msra.mxu0 %v2254
    %2276 = vmatmul.f32.gmra.mxu0 %v2034
    %v2277 = vpop.f32.mrf.mxu0
    %v2278 = vadd.f32 %v2259, %v2277
    %2279 = vmatmul.f32.gmra.mxu0 %v2037
    %v2280 = vpop.f32.mrf.mxu0
    %v2281 = vadd.f32 %v2259, %v2280
    %2282 = vmatmul.f32.gmra.mxu0 %v2040
    %v2283 = vpop.f32.mrf.mxu0
    %v2284 = vadd.f32 %v2259, %v2283
    %2285 = vmatmul.f32.gmra.mxu0 %v2043
    %v2286 = vpop.f32.mrf.mxu0
    %v2287 = vadd.f32 %v2259, %v2286
    %2288 = vdwg.mxu0
    %v2293 = vrot.slane %v2278, 4
    %v2294 = vrot.slane %v2281, 4
    %v2295 = vrot.slane %v2284, 4
    %v2296 = vrot.slane %v2287, 4
    %v2297 = vsel %vm384, %v2063, 0
    %v2299 = vsel %vm384, %v2106, 0
    %2301 = vmatpush.xpose.msra.mxu0 0.0
    %2302 = vmatpush.xpose.msra.mxu0 0.0
    %2303 = vmatpush.xpose.msra.mxu0 0.0
    %2304 = vmatpush.xpose.msra.mxu0 0.0
    %2305 = vmatpush.xpose.msra.mxu0 0.0
    %2306 = vmatpush.xpose.msra.mxu0 0.0
    %2307 = vmatpush.xpose.msra.mxu0 0.0
    %2308 = vmatpush.xpose.msra.mxu0 0.0
    %2309 = vmatpush.xpose.msra.mxu0 0.0
    %2310 = vmatpush.xpose.msra.mxu0 0.0
    %2311 = vmatpush.xpose.msra.mxu0 0.0
    %2312 = vmatpush.xpose.msra.mxu0 0.0
    %2313 = vmatpush.xpose.msra.mxu0 0.0
    %2314 = vmatpush.xpose.msra.mxu0 0.0
    %2315 = vmatpush.xpose.msra.mxu0 0.0
    %2316 = vmatpush.xpose.msra.mxu0 %v2299
    %2317 = vmatmul.f32.gmra.mxu0 %v2297
    %v2318 = vpop.f32.mrf.mxu0
    %v2319 = vadd.f32 0.0, %v2318
    %2320 = vdwg.mxu0
    %v2321 = vsel %vm384, %v2078, 0
    %v2323 = vsel %vm384, %v2121, 0
    %2325 = vmatpush.xpose.msra.mxu0 0.0
    %2326 = vmatpush.xpose.msra.mxu0 0.0
    %2327 = vmatpush.xpose.msra.mxu0 0.0
    %2328 = vmatpush.xpose.msra.mxu0 0.0
    %2329 = vmatpush.xpose.msra.mxu0 0.0
    %2330 = vmatpush.xpose.msra.mxu0 0.0
    %2331 = vmatpush.xpose.msra.mxu0 0.0
    %2332 = vmatpush.xpose.msra.mxu0 0.0
    %2333 = vmatpush.xpose.msra.mxu0 0.0
    %2334 = vmatpush.xpose.msra.mxu0 0.0
    %2335 = vmatpush.xpose.msra.mxu0 0.0
    %2336 = vmatpush.xpose.msra.mxu0 0.0
    %2337 = vmatpush.xpose.msra.mxu0 0.0
    %2338 = vmatpush.xpose.msra.mxu0 0.0
    %2339 = vmatpush.xpose.msra.mxu0 0.0
    %2340 = vmatpush.xpose.msra.mxu0 %v2323
    %2341 = vmatmul.f32.gmra.mxu0 %v2321
    %v2342 = vpop.f32.mrf.mxu0
    %v2343 = vadd.f32 0.0, %v2342
    %2344 = vdwg.mxu0
    %v2345 = vsel %vm384, %v2066, 0
    %v2347 = vsel %vm384, %v2109, 0
    %2349 = vmatpush.xpose.msra.mxu0 0.0
    %2350 = vmatpush.xpose.msra.mxu0 0.0
    %2351 = vmatpush.xpose.msra.mxu0 0.0
    %2352 = vmatpush.xpose.msra.mxu0 0.0
    %2353 = vmatpush.xpose.msra.mxu0 0.0
    %2354 = vmatpush.xpose.msra.mxu0 0.0
    %2355 = vmatpush.xpose.msra.mxu0 0.0
    %2356 = vmatpush.xpose.msra.mxu0 0.0
    %2357 = vmatpush.xpose.msra.mxu0 0.0
    %2358 = vmatpush.xpose.msra.mxu0 0.0
    %2359 = vmatpush.xpose.msra.mxu0 0.0
    %2360 = vmatpush.xpose.msra.mxu0 0.0
    %2361 = vmatpush.xpose.msra.mxu0 0.0
    %2362 = vmatpush.xpose.msra.mxu0 0.0
    %2363 = vmatpush.xpose.msra.mxu0 0.0
    %2364 = vmatpush.xpose.msra.mxu0 %v2347
    %2365 = vmatmul.f32.gmra.mxu0 %v2345
    %v2366 = vpop.f32.mrf.mxu0
    %v2367 = vadd.f32 0.0, %v2366
    %2368 = vdwg.mxu0
    %v2369 = vsel %vm384, %v2079, 0
    %v2371 = vsel %vm384, %v2122, 0
    %2373 = vmatpush.xpose.msra.mxu0 0.0
    %2374 = vmatpush.xpose.msra.mxu0 0.0
    %2375 = vmatpush.xpose.msra.mxu0 0.0
    %2376 = vmatpush.xpose.msra.mxu0 0.0
    %2377 = vmatpush.xpose.msra.mxu0 0.0
    %2378 = vmatpush.xpose.msra.mxu0 0.0
    %2379 = vmatpush.xpose.msra.mxu0 0.0
    %2380 = vmatpush.xpose.msra.mxu0 0.0
    %2381 = vmatpush.xpose.msra.mxu0 0.0
    %2382 = vmatpush.xpose.msra.mxu0 0.0
    %2383 = vmatpush.xpose.msra.mxu0 0.0
    %2384 = vmatpush.xpose.msra.mxu0 0.0
    %2385 = vmatpush.xpose.msra.mxu0 0.0
    %2386 = vmatpush.xpose.msra.mxu0 0.0
    %2387 = vmatpush.xpose.msra.mxu0 0.0
    %2388 = vmatpush.xpose.msra.mxu0 %v2371
    %2389 = vmatmul.f32.gmra.mxu0 %v2369
    %v2390 = vpop.f32.mrf.mxu0
    %v2391 = vadd.f32 0.0, %v2390
    %2392 = vdwg.mxu0
    %v2393 = vsel %vm384, %v2069, 0
    %v2395 = vsel %vm384, %v2112, 0
    %2397 = vmatpush.xpose.msra.mxu0 0.0
    %2398 = vmatpush.xpose.msra.mxu0 0.0
    %2399 = vmatpush.xpose.msra.mxu0 0.0
    %2400 = vmatpush.xpose.msra.mxu0 0.0
    %2401 = vmatpush.xpose.msra.mxu0 0.0
    %2402 = vmatpush.xpose.msra.mxu0 0.0
    %2403 = vmatpush.xpose.msra.mxu0 0.0
    %2404 = vmatpush.xpose.msra.mxu0 0.0
    %2405 = vmatpush.xpose.msra.mxu0 0.0
    %2406 = vmatpush.xpose.msra.mxu0 0.0
    %2407 = vmatpush.xpose.msra.mxu0 0.0
    %2408 = vmatpush.xpose.msra.mxu0 0.0
    %2409 = vmatpush.xpose.msra.mxu0 0.0
    %2410 = vmatpush.xpose.msra.mxu0 0.0
    %2411 = vmatpush.xpose.msra.mxu0 0.0
    %2412 = vmatpush.xpose.msra.mxu0 %v2395
    %2413 = vmatmul.f32.gmra.mxu0 %v2393
    %v2414 = vpop.f32.mrf.mxu0
    %v2415 = vadd.f32 0.0, %v2414
    %2416 = vdwg.mxu0
    %v2417 = vsel %vm384, %v2080, 0
    %v2419 = vsel %vm384, %v2123, 0
    %2421 = vmatpush.xpose.msra.mxu0 0.0
    %2422 = vmatpush.xpose.msra.mxu0 0.0
    %2423 = vmatpush.xpose.msra.mxu0 0.0
    %2424 = vmatpush.xpose.msra.mxu0 0.0
    %2425 = vmatpush.xpose.msra.mxu0 0.0
    %2426 = vmatpush.xpose.msra.mxu0 0.0
    %2427 = vmatpush.xpose.msra.mxu0 0.0
    %2428 = vmatpush.xpose.msra.mxu0 0.0
    %2429 = vmatpush.xpose.msra.mxu0 0.0
    %2430 = vmatpush.xpose.msra.mxu0 0.0
    %2431 = vmatpush.xpose.msra.mxu0 0.0
    %2432 = vmatpush.xpose.msra.mxu0 0.0
    %2433 = vmatpush.xpose.msra.mxu0 0.0
    %2434 = vmatpush.xpose.msra.mxu0 0.0
    %2435 = vmatpush.xpose.msra.mxu0 0.0
    %2436 = vmatpush.xpose.msra.mxu0 %v2419
    %2437 = vmatmul.f32.gmra.mxu0 %v2417
    %v2438 = vpop.f32.mrf.mxu0
    %v2439 = vadd.f32 0.0, %v2438
    %2440 = vdwg.mxu0
    %v2441 = vsel %vm384, %v2072, 0
    %v2443 = vsel %vm384, %v2115, 0
    %2445 = vmatpush.xpose.msra.mxu0 0.0
    %2446 = vmatpush.xpose.msra.mxu0 0.0
    %2447 = vmatpush.xpose.msra.mxu0 0.0
    %2448 = vmatpush.xpose.msra.mxu0 0.0
    %2449 = vmatpush.xpose.msra.mxu0 0.0
    %2450 = vmatpush.xpose.msra.mxu0 0.0
    %2451 = vmatpush.xpose.msra.mxu0 0.0
    %2452 = vmatpush.xpose.msra.mxu0 0.0
    %2453 = vmatpush.xpose.msra.mxu0 0.0
    %2454 = vmatpush.xpose.msra.mxu0 0.0
    %2455 = vmatpush.xpose.msra.mxu0 0.0
    %2456 = vmatpush.xpose.msra.mxu0 0.0
    %2457 = vmatpush.xpose.msra.mxu0 0.0
    %2458 = vmatpush.xpose.msra.mxu0 0.0
    %2459 = vmatpush.xpose.msra.mxu0 0.0
    %2460 = vmatpush.xpose.msra.mxu0 %v2443
    %2461 = vmatmul.f32.gmra.mxu0 %v2441
    %v2462 = vpop.f32.mrf.mxu0
    %v2463 = vadd.f32 0.0, %v2462
    %2464 = vdwg.mxu0
    %v2465 = vsel %vm384, %v2081, 0
    %v2467 = vsel %vm384, %v2124, 0
    %2469 = vmatpush.xpose.msra.mxu0 0.0
    %2470 = vmatpush.xpose.msra.mxu0 0.0
    %2471 = vmatpush.xpose.msra.mxu0 0.0
    %2472 = vmatpush.xpose.msra.mxu0 0.0
    %2473 = vmatpush.xpose.msra.mxu0 0.0
    %2474 = vmatpush.xpose.msra.mxu0 0.0
    %2475 = vmatpush.xpose.msra.mxu0 0.0
    %2476 = vmatpush.xpose.msra.mxu0 0.0
    %2477 = vmatpush.xpose.msra.mxu0 0.0
    %2478 = vmatpush.xpose.msra.mxu0 0.0
    %2479 = vmatpush.xpose.msra.mxu0 0.0
    %2480 = vmatpush.xpose.msra.mxu0 0.0
    %2481 = vmatpush.xpose.msra.mxu0 0.0
    %2482 = vmatpush.xpose.msra.mxu0 0.0
    %2483 = vmatpush.xpose.msra.mxu0 0.0
    %2484 = vmatpush.xpose.msra.mxu0 %v2467
    %2485 = vmatmul.f32.gmra.mxu0 %v2465
    %v2486 = vpop.f32.mrf.mxu0
    %v2487 = vadd.f32 0.0, %v2486
    %2488 = vdwg.mxu0
    %v2489 = vsel %vm384, %v2192, 0
    %v2491 = vsel %vm384, %v2235, 0
    %2493 = vmatpush.xpose.msra.mxu0 0.0
    %2494 = vmatpush.xpose.msra.mxu0 0.0
    %2495 = vmatpush.xpose.msra.mxu0 0.0
    %2496 = vmatpush.xpose.msra.mxu0 0.0
    %2497 = vmatpush.xpose.msra.mxu0 0.0
    %2498 = vmatpush.xpose.msra.mxu0 0.0
    %2499 = vmatpush.xpose.msra.mxu0 0.0
    %2500 = vmatpush.xpose.msra.mxu0 0.0
    %2501 = vmatpush.xpose.msra.mxu0 0.0
    %2502 = vmatpush.xpose.msra.mxu0 0.0
    %2503 = vmatpush.xpose.msra.mxu0 0.0
    %2504 = vmatpush.xpose.msra.mxu0 0.0
    %2505 = vmatpush.xpose.msra.mxu0 0.0
    %2506 = vmatpush.xpose.msra.mxu0 0.0
    %2507 = vmatpush.xpose.msra.mxu0 0.0
    %2508 = vmatpush.xpose.msra.mxu0 %v2491
    %2509 = vmatmul.f32.gmra.mxu0 %v2489
    %v2510 = vpop.f32.mrf.mxu0
    %v2511 = vadd.f32 0.0, %v2510
    %2512 = vdwg.mxu0
    %v2513 = vsel %vm384, %v2207, 0
    %v2515 = vsel %vm384, %v2250, 0
    %2517 = vmatpush.xpose.msra.mxu0 0.0
    %2518 = vmatpush.xpose.msra.mxu0 0.0
    %2519 = vmatpush.xpose.msra.mxu0 0.0
    %2520 = vmatpush.xpose.msra.mxu0 0.0
    %2521 = vmatpush.xpose.msra.mxu0 0.0
    %2522 = vmatpush.xpose.msra.mxu0 0.0
    %2523 = vmatpush.xpose.msra.mxu0 0.0
    %2524 = vmatpush.xpose.msra.mxu0 0.0
    %2525 = vmatpush.xpose.msra.mxu0 0.0
    %2526 = vmatpush.xpose.msra.mxu0 0.0
    %2527 = vmatpush.xpose.msra.mxu0 0.0
    %2528 = vmatpush.xpose.msra.mxu0 0.0
    %2529 = vmatpush.xpose.msra.mxu0 0.0
    %2530 = vmatpush.xpose.msra.mxu0 0.0
    %2531 = vmatpush.xpose.msra.mxu0 0.0
    %2532 = vmatpush.xpose.msra.mxu0 %v2515
    %2533 = vmatmul.f32.gmra.mxu0 %v2513
    %v2534 = vpop.f32.mrf.mxu0
    %v2535 = vadd.f32 0.0, %v2534
    %2536 = vdwg.mxu0
    %v2537 = vsel %vm384, %v2195, 0
    %v2539 = vsel %vm384, %v2238, 0
    %2541 = vmatpush.xpose.msra.mxu0 0.0
    %2542 = vmatpush.xpose.msra.mxu0 0.0
    %2543 = vmatpush.xpose.msra.mxu0 0.0
    %2544 = vmatpush.xpose.msra.mxu0 0.0
    %2545 = vmatpush.xpose.msra.mxu0 0.0
    %2546 = vmatpush.xpose.msra.mxu0 0.0
    %2547 = vmatpush.xpose.msra.mxu0 0.0
    %2548 = vmatpush.xpose.msra.mxu0 0.0
    %2549 = vmatpush.xpose.msra.mxu0 0.0
    %2550 = vmatpush.xpose.msra.mxu0 0.0
    %2551 = vmatpush.xpose.msra.mxu0 0.0
    %2552 = vmatpush.xpose.msra.mxu0 0.0
    %2553 = vmatpush.xpose.msra.mxu0 0.0
    %2554 = vmatpush.xpose.msra.mxu0 0.0
    %2555 = vmatpush.xpose.msra.mxu0 0.0
    %2556 = vmatpush.xpose.msra.mxu0 %v2539
    %2557 = vmatmul.f32.gmra.mxu0 %v2537
    %v2558 = vpop.f32.mrf.mxu0
    %v2559 = vadd.f32 0.0, %v2558
    %2560 = vdwg.mxu0
    %v2561 = vsel %vm384, %v2208, 0
    %v2563 = vsel %vm384, %v2251, 0
    %2565 = vmatpush.xpose.msra.mxu0 0.0
    %2566 = vmatpush.xpose.msra.mxu0 0.0
    %2567 = vmatpush.xpose.msra.mxu0 0.0
    %2568 = vmatpush.xpose.msra.mxu0 0.0
    %2569 = vmatpush.xpose.msra.mxu0 0.0
    %2570 = vmatpush.xpose.msra.mxu0 0.0
    %2571 = vmatpush.xpose.msra.mxu0 0.0
    %2572 = vmatpush.xpose.msra.mxu0 0.0
    %2573 = vmatpush.xpose.msra.mxu0 0.0
    %2574 = vmatpush.xpose.msra.mxu0 0.0
    %2575 = vmatpush.xpose.msra.mxu0 0.0
    %2576 = vmatpush.xpose.msra.mxu0 0.0
    %2577 = vmatpush.xpose.msra.mxu0 0.0
    %2578 = vmatpush.xpose.msra.mxu0 0.0
    %2579 = vmatpush.xpose.msra.mxu0 0.0
    %2580 = vmatpush.xpose.msra.mxu0 %v2563
    %2581 = vmatmul.f32.gmra.mxu0 %v2561
    %v2582 = vpop.f32.mrf.mxu0
    %v2583 = vadd.f32 0.0, %v2582
    %2584 = vdwg.mxu0
    %v2585 = vsel %vm384, %v2198, 0
    %v2587 = vsel %vm384, %v2241, 0
    %2589 = vmatpush.xpose.msra.mxu0 0.0
    %2590 = vmatpush.xpose.msra.mxu0 0.0
    %2591 = vmatpush.xpose.msra.mxu0 0.0
    %2592 = vmatpush.xpose.msra.mxu0 0.0
    %2593 = vmatpush.xpose.msra.mxu0 0.0
    %2594 = vmatpush.xpose.msra.mxu0 0.0
    %2595 = vmatpush.xpose.msra.mxu0 0.0
    %2596 = vmatpush.xpose.msra.mxu0 0.0
    %2597 = vmatpush.xpose.msra.mxu0 0.0
    %2598 = vmatpush.xpose.msra.mxu0 0.0
    %2599 = vmatpush.xpose.msra.mxu0 0.0
    %2600 = vmatpush.xpose.msra.mxu0 0.0
    %2601 = vmatpush.xpose.msra.mxu0 0.0
    %2602 = vmatpush.xpose.msra.mxu0 0.0
    %2603 = vmatpush.xpose.msra.mxu0 0.0
    %2604 = vmatpush.xpose.msra.mxu0 %v2587
    %2605 = vmatmul.f32.gmra.mxu0 %v2585
    %v2606 = vpop.f32.mrf.mxu0
    %v2607 = vadd.f32 0.0, %v2606
    %2608 = vdwg.mxu0
    %v2609 = vsel %vm384, %v2209, 0
    %v2611 = vsel %vm384, %v2252, 0
    %2613 = vmatpush.xpose.msra.mxu0 0.0
    %2614 = vmatpush.xpose.msra.mxu0 0.0
    %2615 = vmatpush.xpose.msra.mxu0 0.0
    %2616 = vmatpush.xpose.msra.mxu0 0.0
    %2617 = vmatpush.xpose.msra.mxu0 0.0
    %2618 = vmatpush.xpose.msra.mxu0 0.0
    %2619 = vmatpush.xpose.msra.mxu0 0.0
    %2620 = vmatpush.xpose.msra.mxu0 0.0
    %2621 = vmatpush.xpose.msra.mxu0 0.0
    %2622 = vmatpush.xpose.msra.mxu0 0.0
    %2623 = vmatpush.xpose.msra.mxu0 0.0
    %2624 = vmatpush.xpose.msra.mxu0 0.0
    %2625 = vmatpush.xpose.msra.mxu0 0.0
    %2626 = vmatpush.xpose.msra.mxu0 0.0
    %2627 = vmatpush.xpose.msra.mxu0 0.0
    %2628 = vmatpush.xpose.msra.mxu0 %v2611
    %2629 = vmatmul.f32.gmra.mxu0 %v2609
    %v2630 = vpop.f32.mrf.mxu0
    %v2631 = vadd.f32 0.0, %v2630
    %2632 = vdwg.mxu0
    %v2633 = vsel %vm384, %v2201, 0
    %v2635 = vsel %vm384, %v2244, 0
    %2637 = vmatpush.xpose.msra.mxu0 0.0
    %2638 = vmatpush.xpose.msra.mxu0 0.0
    %2639 = vmatpush.xpose.msra.mxu0 0.0
    %2640 = vmatpush.xpose.msra.mxu0 0.0
    %2641 = vmatpush.xpose.msra.mxu0 0.0
    %2642 = vmatpush.xpose.msra.mxu0 0.0
    %2643 = vmatpush.xpose.msra.mxu0 0.0
    %2644 = vmatpush.xpose.msra.mxu0 0.0
    %2645 = vmatpush.xpose.msra.mxu0 0.0
    %2646 = vmatpush.xpose.msra.mxu0 0.0
    %2647 = vmatpush.xpose.msra.mxu0 0.0
    %2648 = vmatpush.xpose.msra.mxu0 0.0
    %2649 = vmatpush.xpose.msra.mxu0 0.0
    %2650 = vmatpush.xpose.msra.mxu0 0.0
    %2651 = vmatpush.xpose.msra.mxu0 0.0
    %2652 = vmatpush.xpose.msra.mxu0 %v2635
    %2653 = vmatmul.f32.gmra.mxu0 %v2633
    %v2654 = vpop.f32.mrf.mxu0
    %v2655 = vadd.f32 0.0, %v2654
    %2656 = vdwg.mxu0
    %v2657 = vsel %vm384, %v2210, 0
    %v2659 = vsel %vm384, %v2253, 0
    %2661 = vmatpush.xpose.msra.mxu0 0.0
    %2662 = vmatpush.xpose.msra.mxu0 0.0
    %2663 = vmatpush.xpose.msra.mxu0 0.0
    %2664 = vmatpush.xpose.msra.mxu0 0.0
    %2665 = vmatpush.xpose.msra.mxu0 0.0
    %2666 = vmatpush.xpose.msra.mxu0 0.0
    %2667 = vmatpush.xpose.msra.mxu0 0.0
    %2668 = vmatpush.xpose.msra.mxu0 0.0
    %2669 = vmatpush.xpose.msra.mxu0 0.0
    %2670 = vmatpush.xpose.msra.mxu0 0.0
    %2671 = vmatpush.xpose.msra.mxu0 0.0
    %2672 = vmatpush.xpose.msra.mxu0 0.0
    %2673 = vmatpush.xpose.msra.mxu0 0.0
    %2674 = vmatpush.xpose.msra.mxu0 0.0
    %2675 = vmatpush.xpose.msra.mxu0 0.0
    %2676 = vmatpush.xpose.msra.mxu0 %v2659
    %2677 = vmatmul.f32.gmra.mxu0 %v2657
    %v2678 = vpop.f32.mrf.mxu0
    %v2679 = vadd.f32 0.0, %v2678
    %2680 = vdwg.mxu0
    %v2681 = vmul.f32 %v2319, 0.25
    %v2682 = vmul.f32 %v2343, 0.25
    %v2683 = vmul.f32 %v2367, 0.25
    %v2684 = vmul.f32 %v2391, 0.25
    %v2685 = vmul.f32 %v2415, 0.25
    %v2686 = vmul.f32 %v2439, 0.25
    %v2687 = vmul.f32 %v2463, 0.25
    %v2688 = vmul.f32 %v2487, 0.25
    %v2689 = vmul.f32 %v2511, 0.25
    %v2690 = vmul.f32 %v2535, 0.25
    %v2691 = vmul.f32 %v2559, 0.25
    %v2692 = vmul.f32 %v2583, 0.25
    %v2693 = vmul.f32 %v2607, 0.25
    %v2694 = vmul.f32 %v2631, 0.25
    %v2695 = vmul.f32 %v2655, 0.25
    %v2696 = vmul.f32 %v2679, 0.25
    %v2697 = vsel %vm785, %v2681, -inf
    %2698 = vmax.xlane.f32.xlu0 %v2697
    %v2699 = vpop.xlane.xlu0 %2698
    %v2700 = vsel %vm785, %v2682, -inf
    %2701 = vmax.xlane.f32.xlu0 %v2700
    %v2702 = vpop.xlane.xlu0 %2701
    %v2703 = vsel %vm785, %v2683, -inf
    %2704 = vmax.xlane.f32.xlu0 %v2703
    %v2705 = vpop.xlane.xlu0 %2704
    %v2706 = vsel %vm785, %v2684, -inf
    %2707 = vmax.xlane.f32.xlu0 %v2706
    %v2708 = vpop.xlane.xlu0 %2707
    %v2709 = vsel %vm785, %v2685, -inf
    %2710 = vmax.xlane.f32.xlu0 %v2709
    %v2711 = vpop.xlane.xlu0 %2710
    %v2712 = vsel %vm785, %v2686, -inf
    %2713 = vmax.xlane.f32.xlu0 %v2712
    %v2714 = vpop.xlane.xlu0 %2713
    %v2715 = vsel %vm785, %v2687, -inf
    %2716 = vmax.xlane.f32.xlu0 %v2715
    %v2717 = vpop.xlane.xlu0 %2716
    %v2718 = vsel %vm785, %v2688, -inf
    %2719 = vmax.xlane.f32.xlu0 %v2718
    %v2720 = vpop.xlane.xlu0 %2719
    %v2721 = vsel %vm785, %v2689, -inf
    %2722 = vmax.xlane.f32.xlu0 %v2721
    %v2723 = vpop.xlane.xlu0 %2722
    %v2724 = vsel %vm785, %v2690, -inf
    %2725 = vmax.xlane.f32.xlu0 %v2724
    %v2726 = vpop.xlane.xlu0 %2725
    %v2727 = vsel %vm785, %v2691, -inf
    %2728 = vmax.xlane.f32.xlu0 %v2727
    %v2729 = vpop.xlane.xlu0 %2728
    %v2730 = vsel %vm785, %v2692, -inf
    %2731 = vmax.xlane.f32.xlu0 %v2730
    %v2732 = vpop.xlane.xlu0 %2731
    %v2733 = vsel %vm785, %v2693, -inf
    %2734 = vmax.xlane.f32.xlu0 %v2733
    %v2735 = vpop.xlane.xlu0 %2734
    %v2736 = vsel %vm785, %v2694, -inf
    %2737 = vmax.xlane.f32.xlu0 %v2736
    %v2738 = vpop.xlane.xlu0 %2737
    %v2739 = vsel %vm785, %v2695, -inf
    %2740 = vmax.xlane.f32.xlu0 %v2739
    %v2741 = vpop.xlane.xlu0 %2740
    %v2742 = vsel %vm785, %v2696, -inf
    %2743 = vmax.xlane.f32.xlu0 %v2742
    %v2744 = vpop.xlane.xlu0 %2743
    %v2745 = vsub.f32 %v2681, %v2699
    %v2746 = vsub.f32 %v2682, %v2702
    %v2747 = vsub.f32 %v2683, %v2705
    %v2748 = vsub.f32 %v2684, %v2708
    %v2749 = vsub.f32 %v2685, %v2711
    %v2750 = vsub.f32 %v2686, %v2714
    %v2751 = vsub.f32 %v2687, %v2717
    %v2752 = vsub.f32 %v2688, %v2720
    %v2753 = vsub.f32 %v2689, %v2723
    %v2754 = vsub.f32 %v2690, %v2726
    %v2755 = vsub.f32 %v2691, %v2729
    %v2756 = vsub.f32 %v2692, %v2732
    %v2757 = vsub.f32 %v2693, %v2735
    %v2758 = vsub.f32 %v2694, %v2738
    %v2759 = vsub.f32 %v2695, %v2741
    %v2760 = vsub.f32 %v2696, %v2744
    %v2761 = vmul.f32 %v2745, 1.442695
    %v2762 = vpow.pop %v2761
    %v2763 = vmul.f32 %v2746, 1.442695
    %v2764 = vpow.pop %v2763
    %v2765 = vmul.f32 %v2747, 1.442695
    %v2766 = vpow.pop %v2765
    %v2767 = vmul.f32 %v2748, 1.442695
    %v2768 = vpow.pop %v2767
    %v2769 = vmul.f32 %v2749, 1.442695
    %v2770 = vpow.pop %v2769
    %v2771 = vmul.f32 %v2750, 1.442695
    %v2772 = vpow.pop %v2771
    %v2773 = vmul.f32 %v2751, 1.442695
    %v2774 = vpow.pop %v2773
    %v2775 = vmul.f32 %v2752, 1.442695
    %v2776 = vpow.pop %v2775
    %v2777 = vmul.f32 %v2753, 1.442695
    %v2778 = vpow.pop %v2777
    %v2779 = vmul.f32 %v2754, 1.442695
    %v2780 = vpow.pop %v2779
    %v2781 = vmul.f32 %v2755, 1.442695
    %v2782 = vpow.pop %v2781
    %v2783 = vmul.f32 %v2756, 1.442695
    %v2784 = vpow.pop %v2783
    %v2785 = vmul.f32 %v2757, 1.442695
    %v2786 = vpow.pop %v2785
    %v2787 = vmul.f32 %v2758, 1.442695
    %v2788 = vpow.pop %v2787
    %v2789 = vmul.f32 %v2759, 1.442695
    %v2790 = vpow.pop %v2789
    %v2791 = vmul.f32 %v2760, 1.442695
    %v2792 = vpow.pop %v2791
    %v2793 = vsel %vm785, %v2762, 0.0
    %2794 = vadd.xlane.f32.xlu0 %v2793
    %v2795 = vpop.xlane.xlu0 %2794
    %v2796 = vsel %vm785, %v2764, 0.0
    %2797 = vadd.xlane.f32.xlu0 %v2796
    %v2798 = vpop.xlane.xlu0 %2797
    %v2799 = vsel %vm785, %v2766, 0.0
    %2800 = vadd.xlane.f32.xlu0 %v2799
    %v2801 = vpop.xlane.xlu0 %2800
    %v2802 = vsel %vm785, %v2768, 0.0
    %2803 = vadd.xlane.f32.xlu0 %v2802
    %v2804 = vpop.xlane.xlu0 %2803
    %v2805 = vsel %vm785, %v2770, 0.0
    %2806 = vadd.xlane.f32.xlu0 %v2805
    %v2807 = vpop.xlane.xlu0 %2806
    %v2808 = vsel %vm785, %v2772, 0.0
    %2809 = vadd.xlane.f32.xlu0 %v2808
    %v2810 = vpop.xlane.xlu0 %2809
    %v2811 = vsel %vm785, %v2774, 0.0
    %2812 = vadd.xlane.f32.xlu0 %v2811
    %v2813 = vpop.xlane.xlu0 %2812
    %v2814 = vsel %vm785, %v2776, 0.0
    %2815 = vadd.xlane.f32.xlu0 %v2814
    %v2816 = vpop.xlane.xlu0 %2815
    %v2817 = vsel %vm785, %v2778, 0.0
    %2818 = vadd.xlane.f32.xlu0 %v2817
    %v2819 = vpop.xlane.xlu0 %2818
    %v2820 = vsel %vm785, %v2780, 0.0
    %2821 = vadd.xlane.f32.xlu0 %v2820
    %v2822 = vpop.xlane.xlu0 %2821
    %v2823 = vsel %vm785, %v2782, 0.0
    %2824 = vadd.xlane.f32.xlu0 %v2823
    %v2825 = vpop.xlane.xlu0 %2824
    %v2826 = vsel %vm785, %v2784, 0.0
    %2827 = vadd.xlane.f32.xlu0 %v2826
    %v2828 = vpop.xlane.xlu0 %2827
    %v2829 = vsel %vm785, %v2786, 0.0
    %2830 = vadd.xlane.f32.xlu0 %v2829
    %v2831 = vpop.xlane.xlu0 %2830
    %v2832 = vsel %vm785, %v2788, 0.0
    %2833 = vadd.xlane.f32.xlu0 %v2832
    %v2834 = vpop.xlane.xlu0 %2833
    %v2835 = vsel %vm785, %v2790, 0.0
    %2836 = vadd.xlane.f32.xlu0 %v2835
    %v2837 = vpop.xlane.xlu0 %2836
    %v2838 = vsel %vm785, %v2792, 0.0
    %2839 = vadd.xlane.f32.xlu0 %v2838
    %v2840 = vpop.xlane.xlu0 %2839
    %v2841 = vrcp.pop %v2795
    %v2842 = vmul.f32 %v2795, %v2841
    %v2843 = vsub.f32 1.0, %v2842
    %v2844 = vmul.f32 %v2841, %v2843
    %v2845 = vadd.f32 %v2841, %v2844
    %vm2846 = vweird.f32 %v2795
    %vm2847 = vweird.f32 %v2841
    %vm2848 = vmor %vm2846, %vm2847
    %v2849 = vsel %vm2848, %v2841, %v2845
    %v2850 = vand.u32 2147483647, %v2795
    %vm2851 = vcmp.eq.f32.partialorder %v2850, 8.507059e+37
    %v2852 = vand.u32 %v2795, 2147483648
    %v2853 = vor.u32 1.1754944e-38, %v2852
    %v2854 = vsel %vm2851, %v2853, %v2849
    %v2855 = vmul.f32 %v2762, %v2854
    %v2856 = vrcp.pop %v2798
    %v2857 = vmul.f32 %v2798, %v2856
    %v2858 = vsub.f32 1.0, %v2857
    %v2859 = vmul.f32 %v2856, %v2858
    %v2860 = vadd.f32 %v2856, %v2859
    %vm2861 = vweird.f32 %v2798
    %vm2862 = vweird.f32 %v2856
    %vm2863 = vmor %vm2861, %vm2862
    %v2864 = vsel %vm2863, %v2856, %v2860
    %v2865 = vand.u32 2147483647, %v2798
    %vm2866 = vcmp.eq.f32.partialorder %v2865, 8.507059e+37
    %v2867 = vand.u32 %v2798, 2147483648
    %v2868 = vor.u32 1.1754944e-38, %v2867
    %v2869 = vsel %vm2866, %v2868, %v2864
    %v2870 = vmul.f32 %v2764, %v2869
    %v2871 = vrcp.pop %v2801
    %v2872 = vmul.f32 %v2801, %v2871
    %v2873 = vsub.f32 1.0, %v2872
    %v2874 = vmul.f32 %v2871, %v2873
    %v2875 = vadd.f32 %v2871, %v2874
    %vm2876 = vweird.f32 %v2801
    %vm2877 = vweird.f32 %v2871
    %vm2878 = vmor %vm2876, %vm2877
    %v2879 = vsel %vm2878, %v2871, %v2875
    %v2880 = vand.u32 2147483647, %v2801
    %vm2881 = vcmp.eq.f32.partialorder %v2880, 8.507059e+37
    %v2882 = vand.u32 %v2801, 2147483648
    %v2883 = vor.u32 1.1754944e-38, %v2882
    %v2884 = vsel %vm2881, %v2883, %v2879
    %v2885 = vmul.f32 %v2766, %v2884
    %v2886 = vrcp.pop %v2804
    %v2887 = vmul.f32 %v2804, %v2886
    %v2888 = vsub.f32 1.0, %v2887
    %v2889 = vmul.f32 %v2886, %v2888
    %v2890 = vadd.f32 %v2886, %v2889
    %vm2891 = vweird.f32 %v2804
    %vm2892 = vweird.f32 %v2886
    %vm2893 = vmor %vm2891, %vm2892
    %v2894 = vsel %vm2893, %v2886, %v2890
    %v2895 = vand.u32 2147483647, %v2804
    %vm2896 = vcmp.eq.f32.partialorder %v2895, 8.507059e+37
    %v2897 = vand.u32 %v2804, 2147483648
    %v2898 = vor.u32 1.1754944e-38, %v2897
    %v2899 = vsel %vm2896, %v2898, %v2894
    %v2900 = vmul.f32 %v2768, %v2899
    %v2901 = vrcp.pop %v2807
    %v2902 = vmul.f32 %v2807, %v2901
    %v2903 = vsub.f32 1.0, %v2902
    %v2904 = vmul.f32 %v2901, %v2903
    %v2905 = vadd.f32 %v2901, %v2904
    %vm2906 = vweird.f32 %v2807
    %vm2907 = vweird.f32 %v2901
    %vm2908 = vmor %vm2906, %vm2907
    %v2909 = vsel %vm2908, %v2901, %v2905
    %v2910 = vand.u32 2147483647, %v2807
    %vm2911 = vcmp.eq.f32.partialorder %v2910, 8.507059e+37
    %v2912 = vand.u32 %v2807, 2147483648
    %v2913 = vor.u32 1.1754944e-38, %v2912
    %v2914 = vsel %vm2911, %v2913, %v2909
    %v2915 = vmul.f32 %v2770, %v2914
    %v2916 = vrcp.pop %v2810
    %v2917 = vmul.f32 %v2810, %v2916
    %v2918 = vsub.f32 1.0, %v2917
    %v2919 = vmul.f32 %v2916, %v2918
    %v2920 = vadd.f32 %v2916, %v2919
    %vm2921 = vweird.f32 %v2810
    %vm2922 = vweird.f32 %v2916
    %vm2923 = vmor %vm2921, %vm2922
    %v2924 = vsel %vm2923, %v2916, %v2920
    %v2925 = vand.u32 2147483647, %v2810
    %vm2926 = vcmp.eq.f32.partialorder %v2925, 8.507059e+37
    %v2927 = vand.u32 %v2810, 2147483648
    %v2928 = vor.u32 1.1754944e-38, %v2927
    %v2929 = vsel %vm2926, %v2928, %v2924
    %v2930 = vmul.f32 %v2772, %v2929
    %v2931 = vrcp.pop %v2813
    %v2932 = vmul.f32 %v2813, %v2931
    %v2933 = vsub.f32 1.0, %v2932
    %v2934 = vmul.f32 %v2931, %v2933
    %v2935 = vadd.f32 %v2931, %v2934
    %vm2936 = vweird.f32 %v2813
    %vm2937 = vweird.f32 %v2931
    %vm2938 = vmor %vm2936, %vm2937
    %v2939 = vsel %vm2938, %v2931, %v2935
    %v2940 = vand.u32 2147483647, %v2813
    %vm2941 = vcmp.eq.f32.partialorder %v2940, 8.507059e+37
    %v2942 = vand.u32 %v2813, 2147483648
    %v2943 = vor.u32 1.1754944e-38, %v2942
    %v2944 = vsel %vm2941, %v2943, %v2939
    %v2945 = vmul.f32 %v2774, %v2944
    %v2946 = vrcp.pop %v2816
    %v2947 = vmul.f32 %v2816, %v2946
    %v2948 = vsub.f32 1.0, %v2947
    %v2949 = vmul.f32 %v2946, %v2948
    %v2950 = vadd.f32 %v2946, %v2949
    %vm2951 = vweird.f32 %v2816
    %vm2952 = vweird.f32 %v2946
    %vm2953 = vmor %vm2951, %vm2952
    %v2954 = vsel %vm2953, %v2946, %v2950
    %v2955 = vand.u32 2147483647, %v2816
    %vm2956 = vcmp.eq.f32.partialorder %v2955, 8.507059e+37
    %v2957 = vand.u32 %v2816, 2147483648
    %v2958 = vor.u32 1.1754944e-38, %v2957
    %v2959 = vsel %vm2956, %v2958, %v2954
    %v2960 = vmul.f32 %v2776, %v2959
    %v2961 = vrcp.pop %v2819
    %v2962 = vmul.f32 %v2819, %v2961
    %v2963 = vsub.f32 1.0, %v2962
    %v2964 = vmul.f32 %v2961, %v2963
    %v2965 = vadd.f32 %v2961, %v2964
    %vm2966 = vweird.f32 %v2819
    %vm2967 = vweird.f32 %v2961
    %vm2968 = vmor %vm2966, %vm2967
    %v2969 = vsel %vm2968, %v2961, %v2965
    %v2970 = vand.u32 2147483647, %v2819
    %vm2971 = vcmp.eq.f32.partialorder %v2970, 8.507059e+37
    %v2972 = vand.u32 %v2819, 2147483648
    %v2973 = vor.u32 1.1754944e-38, %v2972
    %v2974 = vsel %vm2971, %v2973, %v2969
    %v2975 = vmul.f32 %v2778, %v2974
    %v2976 = vrcp.pop %v2822
    %v2977 = vmul.f32 %v2822, %v2976
    %v2978 = vsub.f32 1.0, %v2977
    %v2979 = vmul.f32 %v2976, %v2978
    %v2980 = vadd.f32 %v2976, %v2979
    %vm2981 = vweird.f32 %v2822
    %vm2982 = vweird.f32 %v2976
    %vm2983 = vmor %vm2981, %vm2982
    %v2984 = vsel %vm2983, %v2976, %v2980
    %v2985 = vand.u32 2147483647, %v2822
    %vm2986 = vcmp.eq.f32.partialorder %v2985, 8.507059e+37
    %v2987 = vand.u32 %v2822, 2147483648
    %v2988 = vor.u32 1.1754944e-38, %v2987
    %v2989 = vsel %vm2986, %v2988, %v2984
    %v2990 = vmul.f32 %v2780, %v2989
    %v2991 = vrcp.pop %v2825
    %v2992 = vmul.f32 %v2825, %v2991
    %v2993 = vsub.f32 1.0, %v2992
    %v2994 = vmul.f32 %v2991, %v2993
    %v2995 = vadd.f32 %v2991, %v2994
    %vm2996 = vweird.f32 %v2825
    %vm2997 = vweird.f32 %v2991
    %vm2998 = vmor %vm2996, %vm2997
    %v2999 = vsel %vm2998, %v2991, %v2995
    %v3000 = vand.u32 2147483647, %v2825
    %vm3001 = vcmp.eq.f32.partialorder %v3000, 8.507059e+37
    %v3002 = vand.u32 %v2825, 2147483648
    %v3003 = vor.u32 1.1754944e-38, %v3002
    %v3004 = vsel %vm3001, %v3003, %v2999
    %v3005 = vmul.f32 %v2782, %v3004
    %v3006 = vrcp.pop %v2828
    %v3007 = vmul.f32 %v2828, %v3006
    %v3008 = vsub.f32 1.0, %v3007
    %v3009 = vmul.f32 %v3006, %v3008
    %v3010 = vadd.f32 %v3006, %v3009
    %vm3011 = vweird.f32 %v2828
    %vm3012 = vweird.f32 %v3006
    %vm3013 = vmor %vm3011, %vm3012
    %v3014 = vsel %vm3013, %v3006, %v3010
    %v3015 = vand.u32 2147483647, %v2828
    %vm3016 = vcmp.eq.f32.partialorder %v3015, 8.507059e+37
    %v3017 = vand.u32 %v2828, 2147483648
    %v3018 = vor.u32 1.1754944e-38, %v3017
    %v3019 = vsel %vm3016, %v3018, %v3014
    %v3020 = vmul.f32 %v2784, %v3019
    %v3021 = vrcp.pop %v2831
    %v3022 = vmul.f32 %v2831, %v3021
    %v3023 = vsub.f32 1.0, %v3022
    %v3024 = vmul.f32 %v3021, %v3023
    %v3025 = vadd.f32 %v3021, %v3024
    %vm3026 = vweird.f32 %v2831
    %vm3027 = vweird.f32 %v3021
    %vm3028 = vmor %vm3026, %vm3027
    %v3029 = vsel %vm3028, %v3021, %v3025
    %v3030 = vand.u32 2147483647, %v2831
    %vm3031 = vcmp.eq.f32.partialorder %v3030, 8.507059e+37
    %v3032 = vand.u32 %v2831, 2147483648
    %v3033 = vor.u32 1.1754944e-38, %v3032
    %v3034 = vsel %vm3031, %v3033, %v3029
    %v3035 = vmul.f32 %v2786, %v3034
    %v3036 = vrcp.pop %v2834
    %v3037 = vmul.f32 %v2834, %v3036
    %v3038 = vsub.f32 1.0, %v3037
    %v3039 = vmul.f32 %v3036, %v3038
    %v3040 = vadd.f32 %v3036, %v3039
    %vm3041 = vweird.f32 %v2834
    %vm3042 = vweird.f32 %v3036
    %vm3043 = vmor %vm3041, %vm3042
    %v3044 = vsel %vm3043, %v3036, %v3040
    %v3045 = vand.u32 2147483647, %v2834
    %vm3046 = vcmp.eq.f32.partialorder %v3045, 8.507059e+37
    %v3047 = vand.u32 %v2834, 2147483648
    %v3048 = vor.u32 1.1754944e-38, %v3047
    %v3049 = vsel %vm3046, %v3048, %v3044
    %v3050 = vmul.f32 %v2788, %v3049
    %v3051 = vrcp.pop %v2837
    %v3052 = vmul.f32 %v2837, %v3051
    %v3053 = vsub.f32 1.0, %v3052
    %v3054 = vmul.f32 %v3051, %v3053
    %v3055 = vadd.f32 %v3051, %v3054
    %vm3056 = vweird.f32 %v2837
    %vm3057 = vweird.f32 %v3051
    %vm3058 = vmor %vm3056, %vm3057
    %v3059 = vsel %vm3058, %v3051, %v3055
    %v3060 = vand.u32 2147483647, %v2837
    %vm3061 = vcmp.eq.f32.partialorder %v3060, 8.507059e+37
    %v3062 = vand.u32 %v2837, 2147483648
    %v3063 = vor.u32 1.1754944e-38, %v3062
    %v3064 = vsel %vm3061, %v3063, %v3059
    %v3065 = vmul.f32 %v2790, %v3064
    %v3066 = vrcp.pop %v2840
    %v3067 = vmul.f32 %v2840, %v3066
    %v3068 = vsub.f32 1.0, %v3067
    %v3069 = vmul.f32 %v3066, %v3068
    %v3070 = vadd.f32 %v3066, %v3069
    %vm3071 = vweird.f32 %v2840
    %vm3072 = vweird.f32 %v3066
    %vm3073 = vmor %vm3071, %vm3072
    %v3074 = vsel %vm3073, %v3066, %v3070
    %v3075 = vand.u32 2147483647, %v2840
    %vm3076 = vcmp.eq.f32.partialorder %v3075, 8.507059e+37
    %v3077 = vand.u32 %v2840, 2147483648
    %v3078 = vor.u32 1.1754944e-38, %v3077
    %v3079 = vsel %vm3076, %v3078, %v3074
    %v3080 = vmul.f32 %v2792, %v3079
    %v3082 = vsel %vm1170, %v2855, 0
    %v3084 = vsel %vm1174, %v2149, 0
    %3086 = vmatpush.msra.mxu0 0.0
    %3087 = vmatpush.msra.mxu0 0.0
    %3088 = vmatpush.msra.mxu0 0.0
    %3089 = vmatpush.msra.mxu0 0.0
    %3090 = vmatpush.msra.mxu0 0.0
    %3091 = vmatpush.msra.mxu0 0.0
    %3092 = vmatpush.msra.mxu0 0.0
    %3093 = vmatpush.msra.mxu0 0.0
    %3094 = vmatpush.msra.mxu0 0.0
    %3095 = vmatpush.msra.mxu0 0.0
    %3096 = vmatpush.msra.mxu0 0.0
    %3097 = vmatpush.msra.mxu0 0.0
    %3098 = vmatpush.msra.mxu0 0.0
    %3099 = vmatpush.msra.mxu0 0.0
    %3100 = vmatpush.msra.mxu0 0.0
    %3101 = vmatpush.msra.mxu0 %v3084
    %3102 = vmatmul.f32.gmra.mxu0 %v3082
    %v3103 = vpop.f32.mrf.mxu0
    %v3104 = vadd.f32 0.0, %v3103
    %3105 = vdwg.mxu0
    %v3107 = vsel %vm1170, %v2870, 0
    %v3109 = vsel %vm1174, %v2164, 0
    %3111 = vmatpush.msra.mxu0 0.0
    %3112 = vmatpush.msra.mxu0 0.0
    %3113 = vmatpush.msra.mxu0 0.0
    %3114 = vmatpush.msra.mxu0 0.0
    %3115 = vmatpush.msra.mxu0 0.0
    %3116 = vmatpush.msra.mxu0 0.0
    %3117 = vmatpush.msra.mxu0 0.0
    %3118 = vmatpush.msra.mxu0 0.0
    %3119 = vmatpush.msra.mxu0 0.0
    %3120 = vmatpush.msra.mxu0 0.0
    %3121 = vmatpush.msra.mxu0 0.0
    %3122 = vmatpush.msra.mxu0 0.0
    %3123 = vmatpush.msra.mxu0 0.0
    %3124 = vmatpush.msra.mxu0 0.0
    %3125 = vmatpush.msra.mxu0 0.0
    %3126 = vmatpush.msra.mxu0 %v3109
    %3127 = vmatmul.f32.gmra.mxu0 %v3107
    %v3128 = vpop.f32.mrf.mxu0
    %v3129 = vadd.f32 0.0, %v3128
    %3130 = vdwg.mxu0
    %v3132 = vsel %vm1170, %v2885, 0
    %v3134 = vsel %vm1174, %v2152, 0
    %3136 = vmatpush.msra.mxu0 0.0
    %3137 = vmatpush.msra.mxu0 0.0
    %3138 = vmatpush.msra.mxu0 0.0
    %3139 = vmatpush.msra.mxu0 0.0
    %3140 = vmatpush.msra.mxu0 0.0
    %3141 = vmatpush.msra.mxu0 0.0
    %3142 = vmatpush.msra.mxu0 0.0
    %3143 = vmatpush.msra.mxu0 0.0
    %3144 = vmatpush.msra.mxu0 0.0
    %3145 = vmatpush.msra.mxu0 0.0
    %3146 = vmatpush.msra.mxu0 0.0
    %3147 = vmatpush.msra.mxu0 0.0
    %3148 = vmatpush.msra.mxu0 0.0
    %3149 = vmatpush.msra.mxu0 0.0
    %3150 = vmatpush.msra.mxu0 0.0
    %3151 = vmatpush.msra.mxu0 %v3134
    %3152 = vmatmul.f32.gmra.mxu0 %v3132
    %v3153 = vpop.f32.mrf.mxu0
    %v3154 = vadd.f32 0.0, %v3153
    %3155 = vdwg.mxu0
    %v3157 = vsel %vm1170, %v2900, 0
    %v3159 = vsel %vm1174, %v2165, 0
    %3161 = vmatpush.msra.mxu0 0.0
    %3162 = vmatpush.msra.mxu0 0.0
    %3163 = vmatpush.msra.mxu0 0.0
    %3164 = vmatpush.msra.mxu0 0.0
    %3165 = vmatpush.msra.mxu0 0.0
    %3166 = vmatpush.msra.mxu0 0.0
    %3167 = vmatpush.msra.mxu0 0.0
    %3168 = vmatpush.msra.mxu0 0.0
    %3169 = vmatpush.msra.mxu0 0.0
    %3170 = vmatpush.msra.mxu0 0.0
    %3171 = vmatpush.msra.mxu0 0.0
    %3172 = vmatpush.msra.mxu0 0.0
    %3173 = vmatpush.msra.mxu0 0.0
    %3174 = vmatpush.msra.mxu0 0.0
    %3175 = vmatpush.msra.mxu0 0.0
    %3176 = vmatpush.msra.mxu0 %v3159
    %3177 = vmatmul.f32.gmra.mxu0 %v3157
    %v3178 = vpop.f32.mrf.mxu0
    %v3179 = vadd.f32 0.0, %v3178
    %3180 = vdwg.mxu0
    %v3182 = vsel %vm1170, %v2915, 0
    %v3184 = vsel %vm1174, %v2155, 0
    %3186 = vmatpush.msra.mxu0 0.0
    %3187 = vmatpush.msra.mxu0 0.0
    %3188 = vmatpush.msra.mxu0 0.0
    %3189 = vmatpush.msra.mxu0 0.0
    %3190 = vmatpush.msra.mxu0 0.0
    %3191 = vmatpush.msra.mxu0 0.0
    %3192 = vmatpush.msra.mxu0 0.0
    %3193 = vmatpush.msra.mxu0 0.0
    %3194 = vmatpush.msra.mxu0 0.0
    %3195 = vmatpush.msra.mxu0 0.0
    %3196 = vmatpush.msra.mxu0 0.0
    %3197 = vmatpush.msra.mxu0 0.0
    %3198 = vmatpush.msra.mxu0 0.0
    %3199 = vmatpush.msra.mxu0 0.0
    %3200 = vmatpush.msra.mxu0 0.0
    %3201 = vmatpush.msra.mxu0 %v3184
    %3202 = vmatmul.f32.gmra.mxu0 %v3182
    %v3203 = vpop.f32.mrf.mxu0
    %v3204 = vadd.f32 0.0, %v3203
    %3205 = vdwg.mxu0
    %v3207 = vsel %vm1170, %v2930, 0
    %v3209 = vsel %vm1174, %v2166, 0
    %3211 = vmatpush.msra.mxu0 0.0
    %3212 = vmatpush.msra.mxu0 0.0
    %3213 = vmatpush.msra.mxu0 0.0
    %3214 = vmatpush.msra.mxu0 0.0
    %3215 = vmatpush.msra.mxu0 0.0
    %3216 = vmatpush.msra.mxu0 0.0
    %3217 = vmatpush.msra.mxu0 0.0
    %3218 = vmatpush.msra.mxu0 0.0
    %3219 = vmatpush.msra.mxu0 0.0
    %3220 = vmatpush.msra.mxu0 0.0
    %3221 = vmatpush.msra.mxu0 0.0
    %3222 = vmatpush.msra.mxu0 0.0
    %3223 = vmatpush.msra.mxu0 0.0
    %3224 = vmatpush.msra.mxu0 0.0
    %3225 = vmatpush.msra.mxu0 0.0
    %3226 = vmatpush.msra.mxu0 %v3209
    %3227 = vmatmul.f32.gmra.mxu0 %v3207
    %v3228 = vpop.f32.mrf.mxu0
    %v3229 = vadd.f32 0.0, %v3228
    %3230 = vdwg.mxu0
    %v3232 = vsel %vm1170, %v2945, 0
    %v3234 = vsel %vm1174, %v2158, 0
    %3236 = vmatpush.msra.mxu0 0.0
    %3237 = vmatpush.msra.mxu0 0.0
    %3238 = vmatpush.msra.mxu0 0.0
    %3239 = vmatpush.msra.mxu0 0.0
    %3240 = vmatpush.msra.mxu0 0.0
    %3241 = vmatpush.msra.mxu0 0.0
    %3242 = vmatpush.msra.mxu0 0.0
    %3243 = vmatpush.msra.mxu0 0.0
    %3244 = vmatpush.msra.mxu0 0.0
    %3245 = vmatpush.msra.mxu0 0.0
    %3246 = vmatpush.msra.mxu0 0.0
    %3247 = vmatpush.msra.mxu0 0.0
    %3248 = vmatpush.msra.mxu0 0.0
    %3249 = vmatpush.msra.mxu0 0.0
    %3250 = vmatpush.msra.mxu0 0.0
    %3251 = vmatpush.msra.mxu0 %v3234
    %3252 = vmatmul.f32.gmra.mxu0 %v3232
    %v3253 = vpop.f32.mrf.mxu0
    %v3254 = vadd.f32 0.0, %v3253
    %3255 = vdwg.mxu0
    %v3257 = vsel %vm1170, %v2960, 0
    %v3259 = vsel %vm1174, %v2167, 0
    %3261 = vmatpush.msra.mxu0 0.0
    %3262 = vmatpush.msra.mxu0 0.0
    %3263 = vmatpush.msra.mxu0 0.0
    %3264 = vmatpush.msra.mxu0 0.0
    %3265 = vmatpush.msra.mxu0 0.0
    %3266 = vmatpush.msra.mxu0 0.0
    %3267 = vmatpush.msra.mxu0 0.0
    %3268 = vmatpush.msra.mxu0 0.0
    %3269 = vmatpush.msra.mxu0 0.0
    %3270 = vmatpush.msra.mxu0 0.0
    %3271 = vmatpush.msra.mxu0 0.0
    %3272 = vmatpush.msra.mxu0 0.0
    %3273 = vmatpush.msra.mxu0 0.0
    %3274 = vmatpush.msra.mxu0 0.0
    %3275 = vmatpush.msra.mxu0 0.0
    %3276 = vmatpush.msra.mxu0 %v3259
    %3277 = vmatmul.f32.gmra.mxu0 %v3257
    %v3278 = vpop.f32.mrf.mxu0
    %v3279 = vadd.f32 0.0, %v3278
    %3280 = vdwg.mxu0
    %v3282 = vsel %vm1170, %v2975, 0
    %v3284 = vsel %vm1174, %v2278, 0
    %3286 = vmatpush.msra.mxu0 0.0
    %3287 = vmatpush.msra.mxu0 0.0
    %3288 = vmatpush.msra.mxu0 0.0
    %3289 = vmatpush.msra.mxu0 0.0
    %3290 = vmatpush.msra.mxu0 0.0
    %3291 = vmatpush.msra.mxu0 0.0
    %3292 = vmatpush.msra.mxu0 0.0
    %3293 = vmatpush.msra.mxu0 0.0
    %3294 = vmatpush.msra.mxu0 0.0
    %3295 = vmatpush.msra.mxu0 0.0
    %3296 = vmatpush.msra.mxu0 0.0
    %3297 = vmatpush.msra.mxu0 0.0
    %3298 = vmatpush.msra.mxu0 0.0
    %3299 = vmatpush.msra.mxu0 0.0
    %3300 = vmatpush.msra.mxu0 0.0
    %3301 = vmatpush.msra.mxu0 %v3284
    %3302 = vmatmul.f32.gmra.mxu0 %v3282
    %v3303 = vpop.f32.mrf.mxu0
    %v3304 = vadd.f32 0.0, %v3303
    %3305 = vdwg.mxu0
    %v3307 = vsel %vm1170, %v2990, 0
    %v3309 = vsel %vm1174, %v2293, 0
    %3311 = vmatpush.msra.mxu0 0.0
    %3312 = vmatpush.msra.mxu0 0.0
    %3313 = vmatpush.msra.mxu0 0.0
    %3314 = vmatpush.msra.mxu0 0.0
    %3315 = vmatpush.msra.mxu0 0.0
    %3316 = vmatpush.msra.mxu0 0.0
    %3317 = vmatpush.msra.mxu0 0.0
    %3318 = vmatpush.msra.mxu0 0.0
    %3319 = vmatpush.msra.mxu0 0.0
    %3320 = vmatpush.msra.mxu0 0.0
    %3321 = vmatpush.msra.mxu0 0.0
    %3322 = vmatpush.msra.mxu0 0.0
    %3323 = vmatpush.msra.mxu0 0.0
    %3324 = vmatpush.msra.mxu0 0.0
    %3325 = vmatpush.msra.mxu0 0.0
    %3326 = vmatpush.msra.mxu0 %v3309
    %3327 = vmatmul.f32.gmra.mxu0 %v3307
    %v3328 = vpop.f32.mrf.mxu0
    %v3329 = vadd.f32 0.0, %v3328
    %3330 = vdwg.mxu0
    %v3332 = vsel %vm1170, %v3005, 0
    %v3334 = vsel %vm1174, %v2281, 0
    %3336 = vmatpush.msra.mxu0 0.0
    %3337 = vmatpush.msra.mxu0 0.0
    %3338 = vmatpush.msra.mxu0 0.0
    %3339 = vmatpush.msra.mxu0 0.0
    %3340 = vmatpush.msra.mxu0 0.0
    %3341 = vmatpush.msra.mxu0 0.0
    %3342 = vmatpush.msra.mxu0 0.0
    %3343 = vmatpush.msra.mxu0 0.0
    %3344 = vmatpush.msra.mxu0 0.0
    %3345 = vmatpush.msra.mxu0 0.0
    %3346 = vmatpush.msra.mxu0 0.0
    %3347 = vmatpush.msra.mxu0 0.0
    %3348 = vmatpush.msra.mxu0 0.0
    %3349 = vmatpush.msra.mxu0 0.0
    %3350 = vmatpush.msra.mxu0 0.0
    %3351 = vmatpush.msra.mxu0 %v3334
    %3352 = vmatmul.f32.gmra.mxu0 %v3332
    %v3353 = vpop.f32.mrf.mxu0
    %v3354 = vadd.f32 0.0, %v3353
    %3355 = vdwg.mxu0
    %v3357 = vsel %vm1170, %v3020, 0
    %v3359 = vsel %vm1174, %v2294, 0
    %3361 = vmatpush.msra.mxu0 0.0
    %3362 = vmatpush.msra.mxu0 0.0
    %3363 = vmatpush.msra.mxu0 0.0
    %3364 = vmatpush.msra.mxu0 0.0
    %3365 = vmatpush.msra.mxu0 0.0
    %3366 = vmatpush.msra.mxu0 0.0
    %3367 = vmatpush.msra.mxu0 0.0
    %3368 = vmatpush.msra.mxu0 0.0
    %3369 = vmatpush.msra.mxu0 0.0
    %3370 = vmatpush.msra.mxu0 0.0
    %3371 = vmatpush.msra.mxu0 0.0
    %3372 = vmatpush.msra.mxu0 0.0
    %3373 = vmatpush.msra.mxu0 0.0
    %3374 = vmatpush.msra.mxu0 0.0
    %3375 = vmatpush.msra.mxu0 0.0
    %3376 = vmatpush.msra.mxu0 %v3359
    %3377 = vmatmul.f32.gmra.mxu0 %v3357
    %v3378 = vpop.f32.mrf.mxu0
    %v3379 = vadd.f32 0.0, %v3378
    %3380 = vdwg.mxu0
    %v3382 = vsel %vm1170, %v3035, 0
    %v3384 = vsel %vm1174, %v2284, 0
    %3386 = vmatpush.msra.mxu0 0.0
    %3387 = vmatpush.msra.mxu0 0.0
    %3388 = vmatpush.msra.mxu0 0.0
    %3389 = vmatpush.msra.mxu0 0.0
    %3390 = vmatpush.msra.mxu0 0.0
    %3391 = vmatpush.msra.mxu0 0.0
    %3392 = vmatpush.msra.mxu0 0.0
    %3393 = vmatpush.msra.mxu0 0.0
    %3394 = vmatpush.msra.mxu0 0.0
    %3395 = vmatpush.msra.mxu0 0.0
    %3396 = vmatpush.msra.mxu0 0.0
    %3397 = vmatpush.msra.mxu0 0.0
    %3398 = vmatpush.msra.mxu0 0.0
    %3399 = vmatpush.msra.mxu0 0.0
    %3400 = vmatpush.msra.mxu0 0.0
    %3401 = vmatpush.msra.mxu0 %v3384
    %3402 = vmatmul.f32.gmra.mxu0 %v3382
    %v3403 = vpop.f32.mrf.mxu0
    %v3404 = vadd.f32 0.0, %v3403
    %3405 = vdwg.mxu0
    %v3407 = vsel %vm1170, %v3050, 0
    %v3409 = vsel %vm1174, %v2295, 0
    %3411 = vmatpush.msra.mxu0 0.0
    %3412 = vmatpush.msra.mxu0 0.0
    %3413 = vmatpush.msra.mxu0 0.0
    %3414 = vmatpush.msra.mxu0 0.0
    %3415 = vmatpush.msra.mxu0 0.0
    %3416 = vmatpush.msra.mxu0 0.0
    %3417 = vmatpush.msra.mxu0 0.0
    %3418 = vmatpush.msra.mxu0 0.0
    %3419 = vmatpush.msra.mxu0 0.0
    %3420 = vmatpush.msra.mxu0 0.0
    %3421 = vmatpush.msra.mxu0 0.0
    %3422 = vmatpush.msra.mxu0 0.0
    %3423 = vmatpush.msra.mxu0 0.0
    %3424 = vmatpush.msra.mxu0 0.0
    %3425 = vmatpush.msra.mxu0 0.0
    %3426 = vmatpush.msra.mxu0 %v3409
    %3427 = vmatmul.f32.gmra.mxu0 %v3407
    %v3428 = vpop.f32.mrf.mxu0
    %v3429 = vadd.f32 0.0, %v3428
    %3430 = vdwg.mxu0
    %v3432 = vsel %vm1170, %v3065, 0
    %v3434 = vsel %vm1174, %v2287, 0
    %3436 = vmatpush.msra.mxu0 0.0
    %3437 = vmatpush.msra.mxu0 0.0
    %3438 = vmatpush.msra.mxu0 0.0
    %3439 = vmatpush.msra.mxu0 0.0
    %3440 = vmatpush.msra.mxu0 0.0
    %3441 = vmatpush.msra.mxu0 0.0
    %3442 = vmatpush.msra.mxu0 0.0
    %3443 = vmatpush.msra.mxu0 0.0
    %3444 = vmatpush.msra.mxu0 0.0
    %3445 = vmatpush.msra.mxu0 0.0
    %3446 = vmatpush.msra.mxu0 0.0
    %3447 = vmatpush.msra.mxu0 0.0
    %3448 = vmatpush.msra.mxu0 0.0
    %3449 = vmatpush.msra.mxu0 0.0
    %3450 = vmatpush.msra.mxu0 0.0
    %3451 = vmatpush.msra.mxu0 %v3434
    %3452 = vmatmul.f32.gmra.mxu0 %v3432
    %v3453 = vpop.f32.mrf.mxu0
    %v3454 = vadd.f32 0.0, %v3453
    %3455 = vdwg.mxu0
    %v3457 = vsel %vm1170, %v3080, 0
    %v3459 = vsel %vm1174, %v2296, 0
    %3461 = vmatpush.msra.mxu0 0.0
    %3462 = vmatpush.msra.mxu0 0.0
    %3463 = vmatpush.msra.mxu0 0.0
    %3464 = vmatpush.msra.mxu0 0.0
    %3465 = vmatpush.msra.mxu0 0.0
    %3466 = vmatpush.msra.mxu0 0.0
    %3467 = vmatpush.msra.mxu0 0.0
    %3468 = vmatpush.msra.mxu0 0.0
    %3469 = vmatpush.msra.mxu0 0.0
    %3470 = vmatpush.msra.mxu0 0.0
    %3471 = vmatpush.msra.mxu0 0.0
    %3472 = vmatpush.msra.mxu0 0.0
    %3473 = vmatpush.msra.mxu0 0.0
    %3474 = vmatpush.msra.mxu0 0.0
    %3475 = vmatpush.msra.mxu0 0.0
    %3476 = vmatpush.msra.mxu0 %v3459
    %3477 = vmatmul.f32.gmra.mxu0 %v3457
    %v3478 = vpop.f32.mrf.mxu0
    %v3479 = vadd.f32 0.0, %v3478
    %3480 = vdwg.mxu0
    %v3481 = vld [vmem:[#allocation2 + $0x640] sm:$0x1]
    %v3482 = vld [vmem:[#allocation2 + $0x5a8] sm:$0xff]
    %v3483 = vld [vmem:[#allocation2 + $0x5b0] sm:$0xff]
    %3492 = vst [vmem:[#allocation1] ss:$2 sm:$0xff] %v3104
    %s3493 = scalar_lea.vmem [#allocation1], 1
    %3494 = vst [vmem:[%s3493] ss:$2 sm:$0xff] %v3129
    %s3495 = scalar_lea.vmem [#allocation1], 16
    %3496 = vst [vmem:[%s3495] ss:$2 sm:$0xff] %v3154
    %s3497 = scalar_lea.vmem [#allocation1], 17
    %3498 = vst [vmem:[%s3497] ss:$2 sm:$0xff] %v3179
    %s3499 = scalar_lea.vmem [#allocation1], 32
    %3500 = vst [vmem:[%s3499] ss:$2 sm:$0xff] %v3204
    %s3501 = scalar_lea.vmem [#allocation1], 33
    %3502 = vst [vmem:[%s3501] ss:$2 sm:$0xff] %v3229
    %s3503 = scalar_lea.vmem [#allocation1], 48
    %3504 = vst [vmem:[%s3503] ss:$2 sm:$0xff] %v3254
    %s3505 = scalar_lea.vmem [#allocation1], 49
    %3506 = vst [vmem:[%s3505] ss:$2 sm:$0xff] %v3279
    %v3507 = vld.sshfl [vmem:[#allocation1] sm:$0xff pattern:$0x75316420]
    %v3508 = vld.sshfl [vmem:[#allocation1 + $0x10] sm:$0xff pattern:$0x75316420]
    %v3509 = vld.sshfl [vmem:[#allocation1 + $0x20] sm:$0xff pattern:$0x75316420]
    %v3510 = vld.sshfl [vmem:[#allocation1 + $0x30] sm:$0xff pattern:$0x75316420]
    %v3511 = vsel %vm384, %v3507, 0
    %v3513 = vsel %vm384, %v3508, 0
    %v3515 = vsel %vm384, %v3509, 0
    %v3517 = vsel %vm384, %v3510, 0
    %3519 = vmatpush.msra.mxu0 0.0
    %3520 = vmatpush.msra.mxu0 0.0
    %3521 = vmatpush.msra.mxu0 0.0
    %3522 = vmatpush.msra.mxu0 0.0
    %3523 = vmatpush.msra.mxu0 0.0
    %3524 = vmatpush.msra.mxu0 0.0
    %3525 = vmatpush.msra.mxu0 0.0
    %3526 = vmatpush.msra.mxu0 0.0
    %3527 = vmatpush.msra.mxu0 0.0
    %3528 = vmatpush.msra.mxu0 0.0
    %3529 = vmatpush.msra.mxu0 0.0
    %3530 = vmatpush.msra.mxu0 0.0
    %3531 = vmatpush.msra.mxu0 0.0
    %3532 = vmatpush.msra.mxu0 0.0
    %3533 = vmatpush.msra.mxu0 %v3483
    %3534 = vmatpush.msra.mxu0 %v3482
    %3535 = vmatmul.f32.gmra.mxu0 %v3511
    %v3536 = vpop.f32.mrf.mxu0
    %v3537 = vadd.f32 0.0, %v3536
    %3538 = vmatmul.f32.gmra.mxu0 %v3513
    %v3539 = vpop.f32.mrf.mxu0
    %v3540 = vadd.f32 0.0, %v3539
    %3541 = vmatmul.f32.gmra.mxu0 %v3515
    %v3542 = vpop.f32.mrf.mxu0
    %v3543 = vadd.f32 0.0, %v3542
    %3544 = vmatmul.f32.gmra.mxu0 %v3517
    %v3545 = vpop.f32.mrf.mxu0
    %v3546 = vadd.f32 0.0, %v3545
    %3547 = vdwg.mxu0
    %v3548 = vperm.slane %v3481, 0
    %v3549 = vadd.f32 %v3548, %v3537
    %v3550 = vadd.f32 %v3548, %v3540
    %v3551 = vadd.f32 %v3548, %v3543
    %v3552 = vadd.f32 %v3548, %v3546
    %v3553 = vld [vmem:[#allocation2 + $0x630] sm:$0xff]
    %v3554 = vld [vmem:[#allocation2 + $0x638] sm:$0xff]
    %3563 = vst [vmem:[#allocation1] ss:$2 sm:$0xff] %v3304
    %s3564 = scalar_lea.vmem [#allocation1], 1
    %3565 = vst [vmem:[%s3564] ss:$2 sm:$0xff] %v3329
    %s3566 = scalar_lea.vmem [#allocation1], 16
    %3567 = vst [vmem:[%s3566] ss:$2 sm:$0xff] %v3354
    %s3568 = scalar_lea.vmem [#allocation1], 17
    %3569 = vst [vmem:[%s3568] ss:$2 sm:$0xff] %v3379
    %s3570 = scalar_lea.vmem [#allocation1], 32
    %3571 = vst [vmem:[%s3570] ss:$2 sm:$0xff] %v3404
    %s3572 = scalar_lea.vmem [#allocation1], 33
    %3573 = vst [vmem:[%s3572] ss:$2 sm:$0xff] %v3429
    %s3574 = scalar_lea.vmem [#allocation1], 48
    %3575 = vst [vmem:[%s3574] ss:$2 sm:$0xff] %v3454
    %s3576 = scalar_lea.vmem [#allocation1], 49
    %3577 = vst [vmem:[%s3576] ss:$2 sm:$0xff] %v3479
    %v3578 = vld.sshfl [vmem:[#allocation1] sm:$0xff pattern:$0x75316420]
    %v3579 = vld.sshfl [vmem:[#allocation1 + $0x10] sm:$0xff pattern:$0x75316420]
    %v3580 = vld.sshfl [vmem:[#allocation1 + $0x20] sm:$0xff pattern:$0x75316420]
    %v3581 = vld.sshfl [vmem:[#allocation1 + $0x30] sm:$0xff pattern:$0x75316420]
    %v3582 = vsel %vm384, %v3578, 0
    %v3584 = vsel %vm384, %v3579, 0
    %v3586 = vsel %vm384, %v3580, 0
    %v3588 = vsel %vm384, %v3581, 0
    %3590 = vmatpush.msra.mxu0 0.0
    %3591 = vmatpush.msra.mxu0 0.0
    %3592 = vmatpush.msra.mxu0 0.0
    %3593 = vmatpush.msra.mxu0 0.0
    %3594 = vmatpush.msra.mxu0 0.0
    %3595 = vmatpush.msra.mxu0 0.0
    %3596 = vmatpush.msra.mxu0 0.0
    %3597 = vmatpush.msra.mxu0 0.0
    %3598 = vmatpush.msra.mxu0 0.0
    %3599 = vmatpush.msra.mxu0 0.0
    %3600 = vmatpush.msra.mxu0 0.0
    %3601 = vmatpush.msra.mxu0 0.0
    %3602 = vmatpush.msra.mxu0 0.0
    %3603 = vmatpush.msra.mxu0 0.0
    %3604 = vmatpush.msra.mxu0 %v3554
    %3605 = vmatpush.msra.mxu0 %v3553
    %3606 = vmatmul.f32.gmra.mxu0 %v3582
    %v3607 = vpop.f32.mrf.mxu0
    %v3608 = vadd.f32 0.0, %v3607
    %3609 = vmatmul.f32.gmra.mxu0 %v3584
    %v3610 = vpop.f32.mrf.mxu0
    %v3611 = vadd.f32 0.0, %v3610
    %3612 = vmatmul.f32.gmra.mxu0 %v3586
    %v3613 = vpop.f32.mrf.mxu0
    %v3614 = vadd.f32 0.0, %v3613
    %3615 = vmatmul.f32.gmra.mxu0 %v3588
    %v3616 = vpop.f32.mrf.mxu0
    %v3617 = vadd.f32 0.0, %v3616
    %3618 = vdwg.mxu0
    %v3619 = vadd.f32 %v3549, %v3608
    %v3620 = vadd.f32 %v3550, %v3611
    %v3621 = vadd.f32 %v3551, %v3614
    %v3622 = vadd.f32 %v3552, %v3617
    %v3623 = vadd.f32 %v2023, %v3619
    %v3624 = vadd.f32 %v2024, %v3620
    %v3625 = vadd.f32 %v2025, %v3621
    %v3626 = vadd.f32 %v2026, %v3622
    %v3627 = vsel %vm119, %v3623, 0.0
    %3628 = vadd.xlane.f32.xlu0 %v3627
    %v3629 = vpop.xlane.xlu0 %3628
    %v3630 = vsel %vm119, %v3624, 0.0
    %3631 = vadd.xlane.f32.xlu0 %v3630
    %v3632 = vpop.xlane.xlu0 %3631
    %v3633 = vsel %vm119, %v3625, 0.0
    %3634 = vadd.xlane.f32.xlu0 %v3633
    %v3635 = vpop.xlane.xlu0 %3634
    %v3636 = vsel %vm119, %v3626, 0.0
    %3637 = vadd.xlane.f32.xlu0 %v3636
    %v3638 = vpop.xlane.xlu0 %3637
    %v3639 = vmul.f32 %v3629, %v1736
    %v3640 = vmul.f32 %v3632, %v1736
    %v3641 = vmul.f32 %v3635, %v1736
    %v3642 = vmul.f32 %v3638, %v1736
    %v3643 = vsub.f32 %v3623, %v3639
    %v3644 = vsub.f32 %v3624, %v3640
    %v3645 = vsub.f32 %v3625, %v3641
    %v3646 = vsub.f32 %v3626, %v3642
    %v3647 = vmul.f32 %v3643, %v3643
    %v3648 = vmul.f32 %v3644, %v3644
    %v3649 = vmul.f32 %v3645, %v3645
    %v3650 = vmul.f32 %v3646, %v3646
    %v3651 = vsel %vm119, %v3647, 0.0
    %3652 = vadd.xlane.f32.xlu0 %v3651
    %v3653 = vpop.xlane.xlu0 %3652
    %v3654 = vsel %vm119, %v3648, 0.0
    %3655 = vadd.xlane.f32.xlu0 %v3654
    %v3656 = vpop.xlane.xlu0 %3655
    %v3657 = vsel %vm119, %v3649, 0.0
    %3658 = vadd.xlane.f32.xlu0 %v3657
    %v3659 = vpop.xlane.xlu0 %3658
    %v3660 = vsel %vm119, %v3650, 0.0
    %3661 = vadd.xlane.f32.xlu0 %v3660
    %v3662 = vpop.xlane.xlu0 %3661
    %v3663 = vmul.f32 %v3653, %v1736
    %v3664 = vmul.f32 %v3656, %v1736
    %v3665 = vmul.f32 %v3659, %v1736
    %v3666 = vmul.f32 %v3662, %v1736
    %v3667 = vadd.f32 %v3663, 1e-05
    %v3668 = vadd.f32 %v3664, 1e-05
    %v3669 = vadd.f32 %v3665, 1e-05
    %v3670 = vadd.f32 %v3666, 1e-05
    %v3671 = vrsqrt.pop %v3667
    %v3672 = vmul.f32 %v3671, %v3667
    %v3673 = vmul.f32 %v3672, %v3671
    %v3674 = vmul.f32 0.5, %v3673
    %v3675 = vsub.f32 1.5, %v3674
    %v3676 = vmul.f32 %v3671, %v3675
    %vm3677 = vweird.f32 %v3667
    %vm3678 = vweird.f32 %v3671
    %vm3679 = vmor %vm3677, %vm3678
    %v3680 = vsel %vm3679, %v3671, %v3676
    %v3681 = vrsqrt.pop %v3668
    %v3682 = vmul.f32 %v3681, %v3668
    %v3683 = vmul.f32 %v3682, %v3681
    %v3684 = vmul.f32 0.5, %v3683
    %v3685 = vsub.f32 1.5, %v3684
    %v3686 = vmul.f32 %v3681, %v3685
    %vm3687 = vweird.f32 %v3668
    %vm3688 = vweird.f32 %v3681
    %vm3689 = vmor %vm3687, %vm3688
    %v3690 = vsel %vm3689, %v3681, %v3686
    %v3691 = vrsqrt.pop %v3669
    %v3692 = vmul.f32 %v3691, %v3669
    %v3693 = vmul.f32 %v3692, %v3691
    %v3694 = vmul.f32 0.5, %v3693
    %v3695 = vsub.f32 1.5, %v3694
    %v3696 = vmul.f32 %v3691, %v3695
    %vm3697 = vweird.f32 %v3669
    %vm3698 = vweird.f32 %v3691
    %vm3699 = vmor %vm3697, %vm3698
    %v3700 = vsel %vm3699, %v3691, %v3696
    %v3701 = vrsqrt.pop %v3670
    %v3702 = vmul.f32 %v3701, %v3670
    %v3703 = vmul.f32 %v3702, %v3701
    %v3704 = vmul.f32 0.5, %v3703
    %v3705 = vsub.f32 1.5, %v3704
    %v3706 = vmul.f32 %v3701, %v3705
    %vm3707 = vweird.f32 %v3670
    %vm3708 = vweird.f32 %v3701
    %vm3709 = vmor %vm3707, %vm3708
    %v3710 = vsel %vm3709, %v3701, %v3706
    %v3711 = vmul.f32 %v3643, %v3680
    %v3712 = vmul.f32 %v3644, %v3690
    %v3713 = vmul.f32 %v3645, %v3700
    %v3714 = vmul.f32 %v3646, %v3710
    %v3715 = vld [vmem:[#allocation2 + $0x6f8] sm:$0x1]
    %v3716 = vperm.slane %v3715, 0
    %v3717 = vmul.f32 %v3711, %v3716
    %v3718 = vmul.f32 %v3712, %v3716
    %v3719 = vmul.f32 %v3713, %v3716
    %v3720 = vmul.f32 %v3714, %v3716
    %v3721 = vld [vmem:[#allocation2 + $0x700] sm:$0x1]
    %v3722 = vperm.slane %v3721, 0
    %v3723 = vadd.f32 %v3717, %v3722
    %v3724 = vadd.f32 %v3718, %v3722
    %v3725 = vadd.f32 %v3719, %v3722
    %v3726 = vadd.f32 %v3720, %v3722
    %v3727 = vld [vmem:[#allocation2 + $0x648] sm:$0xff]
    %v3728 = vld [vmem:[#allocation2 + $0x650] sm:$0xff]
    %v3729 = vld [vmem:[#allocation2 + $0x658] sm:$0xff]
    %v3730 = vld [vmem:[#allocation2 + $0x660] sm:$0xff]
    %v3731 = vld [vmem:[#allocation2 + $0x668] sm:$0x1]
    %v3732 = vperm.slane %v3731, 0
    %v3734 = vsel %vm119, %v3723, 0
    %v3737 = vsel %vm119, %v3724, 0
    %v3740 = vsel %vm119, %v3725, 0
    %v3743 = vsel %vm119, %v3726, 0
    %3745 = vmatpush.msra.mxu0 0.0
    %3746 = vmatpush.msra.mxu0 0.0
    %3747 = vmatpush.msra.mxu0 0.0
    %3748 = vmatpush.msra.mxu0 0.0
    %3749 = vmatpush.msra.mxu0 0.0
    %3750 = vmatpush.msra.mxu0 0.0
    %3751 = vmatpush.msra.mxu0 0.0
    %3752 = vmatpush.msra.mxu0 0.0
    %3753 = vmatpush.msra.mxu0 0.0
    %3754 = vmatpush.msra.mxu0 0.0
    %3755 = vmatpush.msra.mxu0 0.0
    %3756 = vmatpush.msra.mxu0 0.0
    %3757 = vmatpush.msra.mxu0 %v3730
    %3758 = vmatpush.msra.mxu0 %v3729
    %3759 = vmatpush.msra.mxu0 %v3728
    %3760 = vmatpush.msra.mxu0 %v3727
    %3761 = vmatmul.f32.gmra.mxu0 %v3734
    %v3762 = vpop.f32.mrf.mxu0
    %v3763 = vadd.f32 %v3732, %v3762
    %3764 = vmatmul.f32.gmra.mxu0 %v3737
    %v3765 = vpop.f32.mrf.mxu0
    %v3766 = vadd.f32 %v3732, %v3765
    %3767 = vmatmul.f32.gmra.mxu0 %v3740
    %v3768 = vpop.f32.mrf.mxu0
    %v3769 = vadd.f32 %v3732, %v3768
    %3770 = vmatmul.f32.gmra.mxu0 %v3743
    %v3771 = vpop.f32.mrf.mxu0
    %v3772 = vadd.f32 %v3732, %v3771
    %3773 = vdwg.mxu0
    %v3774 = vmax.f32 %v3763, 0.0
    %v3775 = vmax.f32 %v3766, 0.0
    %v3776 = vmax.f32 %v3769, 0.0
    %v3777 = vmax.f32 %v3772, 0.0
    %v3778 = vld [vmem:[#allocation2 + $0x670] sm:$0xff]
    %v3779 = vld [vmem:[#allocation2 + $0x678] sm:$0xff]
    %v3780 = vld [vmem:[#allocation2 + $0x680] sm:$0xff]
    %v3781 = vld [vmem:[#allocation2 + $0x688] sm:$0xff]
    %v3782 = vld [vmem:[#allocation2 + $0x690] sm:$0xff]
    %v3783 = vld [vmem:[#allocation2 + $0x698] sm:$0xff]
    %v3784 = vld [vmem:[#allocation2 + $0x6a0] sm:$0xff]
    %v3785 = vld [vmem:[#allocation2 + $0x6a8] sm:$0xff]
    %v3786 = vld [vmem:[#allocation2 + $0x6b0] sm:$0xff]
    %v3787 = vld [vmem:[#allocation2 + $0x6b8] sm:$0xff]
    %v3788 = vld [vmem:[#allocation2 + $0x6c0] sm:$0xff]
    %v3789 = vld [vmem:[#allocation2 + $0x6c8] sm:$0xff]
    %v3790 = vld [vmem:[#allocation2 + $0x6d0] sm:$0xff]
    %v3791 = vld [vmem:[#allocation2 + $0x6d8] sm:$0xff]
    %v3792 = vld [vmem:[#allocation2 + $0x6e0] sm:$0xff]
    %v3793 = vld [vmem:[#allocation2 + $0x6e8] sm:$0xff]
    %v3794 = vld [vmem:[#allocation2 + $0x6f0] sm:$0x1]
    %v3795 = vperm.slane %v3794, 0
    %3796 = vmatpush.msra.mxu0 %v3793
    %3797 = vmatpush.msra.mxu0 %v3792
    %3798 = vmatpush.msra.mxu0 %v3791
    %3799 = vmatpush.msra.mxu0 %v3790
    %3800 = vmatpush.msra.mxu0 %v3789
    %3801 = vmatpush.msra.mxu0 %v3788
    %3802 = vmatpush.msra.mxu0 %v3787
    %3803 = vmatpush.msra.mxu0 %v3786
    %3804 = vmatpush.msra.mxu0 %v3785
    %3805 = vmatpush.msra.mxu0 %v3784
    %3806 = vmatpush.msra.mxu0 %v3783
    %3807 = vmatpush.msra.mxu0 %v3782
    %3808 = vmatpush.msra.mxu0 %v3781
    %3809 = vmatpush.msra.mxu0 %v3780
    %3810 = vmatpush.msra.mxu0 %v3779
    %3811 = vmatpush.msra.mxu0 %v3778
    %3812 = vmatmul.f32.gmra.mxu0 %v3774
    %v3813 = vpop.f32.mrf.mxu0
    %v3814 = vadd.f32 %v3795, %v3813
    %3815 = vmatmul.f32.gmra.mxu0 %v3775
    %v3816 = vpop.f32.mrf.mxu0
    %v3817 = vadd.f32 %v3795, %v3816
    %3818 = vmatmul.f32.gmra.mxu0 %v3776
    %v3819 = vpop.f32.mrf.mxu0
    %v3820 = vadd.f32 %v3795, %v3819
    %3821 = vmatmul.f32.gmra.mxu0 %v3777
    %v3822 = vpop.f32.mrf.mxu0
    %v3823 = vadd.f32 %v3795, %v3822
    %3824 = vdwg.mxu0
    %v3825 = vadd.f32 %v3723, %v3814
    %v3826 = vadd.f32 %v3724, %v3817
    %v3827 = vadd.f32 %v3725, %v3820
    %v3828 = vadd.f32 %v3726, %v3823
    %v3829 = vsel %vm119, %v3825, 0.0
    %3830 = vadd.xlane.f32.xlu0 %v3829
    %v3831 = vpop.xlane.xlu0 %3830
    %v3832 = vsel %vm119, %v3826, 0.0
    %3833 = vadd.xlane.f32.xlu0 %v3832
    %v3834 = vpop.xlane.xlu0 %3833
    %v3835 = vsel %vm119, %v3827, 0.0
    %3836 = vadd.xlane.f32.xlu0 %v3835
    %v3837 = vpop.xlane.xlu0 %3836
    %v3838 = vsel %vm119, %v3828, 0.0
    %3839 = vadd.xlane.f32.xlu0 %v3838
    %v3840 = vpop.xlane.xlu0 %3839
    %v3841 = vmul.f32 %v3831, %v1736
    %v3842 = vmul.f32 %v3834, %v1736
    %v3843 = vmul.f32 %v3837, %v1736
    %v3844 = vmul.f32 %v3840, %v1736
    %v3845 = vsub.f32 %v3825, %v3841
    %v3846 = vsub.f32 %v3826, %v3842
    %v3847 = vsub.f32 %v3827, %v3843
    %v3848 = vsub.f32 %v3828, %v3844
    %v3849 = vmul.f32 %v3845, %v3845
    %v3850 = vmul.f32 %v3846, %v3846
    %v3851 = vmul.f32 %v3847, %v3847
    %v3852 = vmul.f32 %v3848, %v3848
    %v3853 = vsel %vm119, %v3849, 0.0
    %3854 = vadd.xlane.f32.xlu0 %v3853
    %v3855 = vpop.xlane.xlu0 %3854
    %v3856 = vsel %vm119, %v3850, 0.0
    %3857 = vadd.xlane.f32.xlu0 %v3856
    %v3858 = vpop.xlane.xlu0 %3857
    %v3859 = vsel %vm119, %v3851, 0.0
    %3860 = vadd.xlane.f32.xlu0 %v3859
    %v3861 = vpop.xlane.xlu0 %3860
    %v3862 = vsel %vm119, %v3852, 0.0
    %3863 = vadd.xlane.f32.xlu0 %v3862
    %v3864 = vpop.xlane.xlu0 %3863
    %v3865 = vmul.f32 %v3855, %v1736
    %v3866 = vmul.f32 %v3858, %v1736
    %v3867 = vmul.f32 %v3861, %v1736
    %v3868 = vmul.f32 %v3864, %v1736
    %v3869 = vadd.f32 %v3865, 1e-05
    %v3870 = vadd.f32 %v3866, 1e-05
    %v3871 = vadd.f32 %v3867, 1e-05
    %v3872 = vadd.f32 %v3868, 1e-05
    %v3873 = vrsqrt.pop %v3869
    %v3874 = vmul.f32 %v3873, %v3869
    %v3875 = vmul.f32 %v3874, %v3873
    %v3876 = vmul.f32 0.5, %v3875
    %v3877 = vsub.f32 1.5, %v3876
    %v3878 = vmul.f32 %v3873, %v3877
    %vm3879 = vweird.f32 %v3869
    %vm3880 = vweird.f32 %v3873
    %vm3881 = vmor %vm3879, %vm3880
    %v3882 = vsel %vm3881, %v3873, %v3878
    %v3883 = vrsqrt.pop %v3870
    %v3884 = vmul.f32 %v3883, %v3870
    %v3885 = vmul.f32 %v3884, %v3883
    %v3886 = vmul.f32 0.5, %v3885
    %v3887 = vsub.f32 1.5, %v3886
    %v3888 = vmul.f32 %v3883, %v3887
    %vm3889 = vweird.f32 %v3870
    %vm3890 = vweird.f32 %v3883
    %vm3891 = vmor %vm3889, %vm3890
    %v3892 = vsel %vm3891, %v3883, %v3888
    %v3893 = vrsqrt.pop %v3871
    %v3894 = vmul.f32 %v3893, %v3871
    %v3895 = vmul.f32 %v3894, %v3893
    %v3896 = vmul.f32 0.5, %v3895
    %v3897 = vsub.f32 1.5, %v3896
    %v3898 = vmul.f32 %v3893, %v3897
    %vm3899 = vweird.f32 %v3871
    %vm3900 = vweird.f32 %v3893
    %vm3901 = vmor %vm3899, %vm3900
    %v3902 = vsel %vm3901, %v3893, %v3898
    %v3903 = vrsqrt.pop %v3872
    %v3904 = vmul.f32 %v3903, %v3872
    %v3905 = vmul.f32 %v3904, %v3903
    %v3906 = vmul.f32 0.5, %v3905
    %v3907 = vsub.f32 1.5, %v3906
    %v3908 = vmul.f32 %v3903, %v3907
    %vm3909 = vweird.f32 %v3872
    %vm3910 = vweird.f32 %v3903
    %vm3911 = vmor %vm3909, %vm3910
    %v3912 = vsel %vm3911, %v3903, %v3908
    %v3913 = vmul.f32 %v3845, %v3882
    %v3914 = vmul.f32 %v3846, %v3892
    %v3915 = vmul.f32 %v3847, %v3902
    %v3916 = vmul.f32 %v3848, %v3912
    %v3917 = vld [vmem:[#allocation2 + $0x708] sm:$0x1]
    %v3918 = vperm.slane %v3917, 0
    %v3919 = vmul.f32 %v3913, %v3918
    %v3920 = vmul.f32 %v3914, %v3918
    %v3921 = vmul.f32 %v3915, %v3918
    %v3922 = vmul.f32 %v3916, %v3918
    %v3923 = vld [vmem:[#allocation2 + $0x710] sm:$0x1]
    %v3924 = vperm.slane %v3923, 0
    %v3925 = vadd.f32 %v3919, %v3924
    %v3926 = vadd.f32 %v3920, %v3924
    %v3927 = vadd.f32 %v3921, %v3924
    %v3928 = vadd.f32 %v3922, %v3924
    %v3929 = vsel %vm119, %v3925, 0.0
    %3930 = vadd.xlane.f32.xlu0 %v3929
    %v3931 = vpop.xlane.xlu0 %3930
    %v3932 = vsel %vm119, %v3926, 0.0
    %3933 = vadd.xlane.f32.xlu0 %v3932
    %v3934 = vpop.xlane.xlu0 %3933
    %v3935 = vsel %vm119, %v3927, 0.0
    %3936 = vadd.xlane.f32.xlu0 %v3935
    %v3937 = vpop.xlane.xlu0 %3936
    %v3938 = vsel %vm119, %v3928, 0.0
    %3939 = vadd.xlane.f32.xlu0 %v3938
    %v3940 = vpop.xlane.xlu0 %3939
    %v3941 = vmul.f32 %v3931, %v1736
    %v3942 = vmul.f32 %v3934, %v1736
    %v3943 = vmul.f32 %v3937, %v1736
    %v3944 = vmul.f32 %v3940, %v1736
    %v3945 = vsub.f32 %v3925, %v3941
    %v3946 = vsub.f32 %v3926, %v3942
    %v3947 = vsub.f32 %v3927, %v3943
    %v3948 = vsub.f32 %v3928, %v3944
    %v3949 = vmul.f32 %v3945, %v3945
    %v3950 = vmul.f32 %v3946, %v3946
    %v3951 = vmul.f32 %v3947, %v3947
    %v3952 = vmul.f32 %v3948, %v3948
    %v3953 = vsel %vm119, %v3949, 0.0
    %3954 = vadd.xlane.f32.xlu0 %v3953
    %v3955 = vpop.xlane.xlu0 %3954
    %v3956 = vsel %vm119, %v3950, 0.0
    %3957 = vadd.xlane.f32.xlu0 %v3956
    %v3958 = vpop.xlane.xlu0 %3957
    %v3959 = vsel %vm119, %v3951, 0.0
    %3960 = vadd.xlane.f32.xlu0 %v3959
    %v3961 = vpop.xlane.xlu0 %3960
    %v3962 = vsel %vm119, %v3952, 0.0
    %3963 = vadd.xlane.f32.xlu0 %v3962
    %v3964 = vpop.xlane.xlu0 %3963
    %v3965 = vmul.f32 %v3955, %v1736
    %v3966 = vmul.f32 %v3958, %v1736
    %v3967 = vmul.f32 %v3961, %v1736
    %v3968 = vmul.f32 %v3964, %v1736
    %v3969 = vadd.f32 %v3965, 1e-05
    %v3970 = vadd.f32 %v3966, 1e-05
    %v3971 = vadd.f32 %v3967, 1e-05
    %v3972 = vadd.f32 %v3968, 1e-05
    %v3973 = vrsqrt.pop %v3969
    %v3974 = vmul.f32 %v3973, %v3969
    %v3975 = vmul.f32 %v3974, %v3973
    %v3976 = vmul.f32 0.5, %v3975
    %v3977 = vsub.f32 1.5, %v3976
    %v3978 = vmul.f32 %v3973, %v3977
    %vm3979 = vweird.f32 %v3969
    %vm3980 = vweird.f32 %v3973
    %vm3981 = vmor %vm3979, %vm3980
    %v3982 = vsel %vm3981, %v3973, %v3978
    %v3983 = vrsqrt.pop %v3970
    %v3984 = vmul.f32 %v3983, %v3970
    %v3985 = vmul.f32 %v3984, %v3983
    %v3986 = vmul.f32 0.5, %v3985
    %v3987 = vsub.f32 1.5, %v3986
    %v3988 = vmul.f32 %v3983, %v3987
    %vm3989 = vweird.f32 %v3970
    %vm3990 = vweird.f32 %v3983
    %vm3991 = vmor %vm3989, %vm3990
    %v3992 = vsel %vm3991, %v3983, %v3988
    %v3993 = vrsqrt.pop %v3971
    %v3994 = vmul.f32 %v3993, %v3971
    %v3995 = vmul.f32 %v3994, %v3993
    %v3996 = vmul.f32 0.5, %v3995
    %v3997 = vsub.f32 1.5, %v3996
    %v3998 = vmul.f32 %v3993, %v3997
    %vm3999 = vweird.f32 %v3971
    %vm4000 = vweird.f32 %v3993
    %vm4001 = vmor %vm3999, %vm4000
    %v4002 = vsel %vm4001, %v3993, %v3998
    %v4003 = vrsqrt.pop %v3972
    %v4004 = vmul.f32 %v4003, %v3972
    %v4005 = vmul.f32 %v4004, %v4003
    %v4006 = vmul.f32 0.5, %v4005
    %v4007 = vsub.f32 1.5, %v4006
    %v4008 = vmul.f32 %v4003, %v4007
    %vm4009 = vweird.f32 %v3972
    %vm4010 = vweird.f32 %v4003
    %vm4011 = vmor %vm4009, %vm4010
    %v4012 = vsel %vm4011, %v4003, %v4008
    %v4013 = vmul.f32 %v3945, %v3982
    %v4014 = vmul.f32 %v3946, %v3992
    %v4015 = vmul.f32 %v3947, %v4002
    %v4016 = vmul.f32 %v3948, %v4012
    %v4017 = vld [vmem:[#allocation2 + $0x718] sm:$0x1]
    %v4018 = vperm.slane %v4017, 0
    %v4019 = vmul.f32 %v4013, %v4018
    %v4020 = vmul.f32 %v4014, %v4018
    %v4021 = vmul.f32 %v4015, %v4018
    %v4022 = vmul.f32 %v4016, %v4018
    %v4023 = vld [vmem:[#allocation2 + $0x720] sm:$0x1]
    %v4024 = vperm.slane %v4023, 0
    %v4025 = vadd.f32 %v4019, %v4024
    %v4026 = vadd.f32 %v4020, %v4024
    %v4027 = vadd.f32 %v4021, %v4024
    %v4028 = vadd.f32 %v4022, %v4024
    %v4033 = vrot.slane %v4025, 4
    %v4034 = vrot.slane %v4026, 4
    %v4035 = vrot.slane %v4027, 4
    %v4036 = vrot.slane %v4028, 4
    %v4041 = vld [vmem:[%s1] sm:$0xff]
    %v4042 = vld [vmem:[%s1 + $0x8] sm:$0xff]
    %v4043 = vld [vmem:[%s1 + $0x10] sm:$0xff]
    %v4044 = vld [vmem:[%s1 + $0x18] sm:$0xff]
    %v4045 = vld [vmem:[%s1 + $0x20] sm:$0xff]
    %v4046 = vld [vmem:[%s1 + $0x28] sm:$0xff]
    %v4047 = vld [vmem:[#allocation2 + $0x38] sm:$0xff]
    %v4048 = vld [vmem:[#allocation2 + $0x40] sm:$0xff]
    %v4049 = vld [vmem:[#allocation2 + $0x48] sm:$0xff]
    %v4050 = vld [vmem:[#allocation2 + $0x50] sm:$0xff]
    %v4051 = vld [vmem:[#allocation2 + $0x58] sm:$0xff]
    %v4052 = vld [vmem:[#allocation2 + $0x60] sm:$0xff]
    %v4053 = vld [vmem:[#allocation2 + $0x68] sm:$0xff]
    %v4054 = vld [vmem:[#allocation2 + $0x70] sm:$0xff]
    %v4055 = vld [vmem:[#allocation2 + $0x78] sm:$0xff]
    %v4056 = vld [vmem:[#allocation2 + $0x80] sm:$0xff]
    %v4057 = vld [vmem:[#allocation2 + $0x88] sm:$0xff]
    %v4058 = vld [vmem:[#allocation2 + $0x90] sm:$0xff]
    %v4059 = vld [vmem:[#allocation2 + $0x98] sm:$0xff]
    %v4060 = vld [vmem:[#allocation2 + $0xa0] sm:$0xff]
    %v4061 = vld [vmem:[#allocation2 + $0xa8] sm:$0xff]
    %v4062 = vld [vmem:[#allocation2 + $0xb0] sm:$0xff]
    %v4063 = vld [vmem:[#allocation2 + $0xb8] sm:$0xff]
    %v4064 = vld [vmem:[#allocation2 + $0xc0] sm:$0xff]
    %v4065 = vld [vmem:[#allocation2 + $0xc8] sm:$0xff]
    %v4066 = vld [vmem:[#allocation2 + $0xd0] sm:$0xff]
    %v4067 = vld [vmem:[#allocation2 + $0xd8] sm:$0xff]
    %v4068 = vld [vmem:[#allocation2 + $0xe0] sm:$0xff]
    %v4069 = vld [vmem:[#allocation2 + $0xe8] sm:$0xff]
    %v4070 = vld [vmem:[#allocation2 + $0xf0] sm:$0xff]
    %v4071 = vld [vmem:[#allocation2 + $0xf8] sm:$0xff]
    %v4072 = vld [vmem:[#allocation2 + $0x100] sm:$0xff]
    %v4073 = vld [vmem:[#allocation2 + $0x108] sm:$0xff]
    %v4074 = vld [vmem:[#allocation2 + $0x110] sm:$0xff]
    %v4075 = vld [vmem:[#allocation2 + $0x118] sm:$0xff]
    %v4076 = vld [vmem:[#allocation2 + $0x120] sm:$0xff]
    %v4077 = vld [vmem:[#allocation2 + $0x128] sm:$0xff]
    %v4078 = vld [vmem:[#allocation2 + $0x130] sm:$0xff]
    %v4079 = vld [vmem:[#allocation2 + $0x138] sm:$0xff]
    %v4080 = vld [vmem:[#allocation2 + $0x140] sm:$0xff]
    %v4081 = vld [vmem:[#allocation2 + $0x148] sm:$0xff]
    %v4082 = vld [vmem:[#allocation2 + $0x150] sm:$0xff]
    %v4083 = vld [vmem:[#allocation2 + $0x158] sm:$0xff]
    %v4084 = vld [vmem:[#allocation2 + $0x160] sm:$0xff]
    %v4085 = vld [vmem:[#allocation2 + $0x168] sm:$0xff]
    %v4086 = vld [vmem:[#allocation2 + $0x170] sm:$0xff]
    %v4087 = vld [vmem:[#allocation2 + $0x178] sm:$0xff]
    %v4088 = vld [vmem:[#allocation2 + $0x180] sm:$0xff]
    %v4089 = vld [vmem:[#allocation2 + $0x188] sm:$0xff]
    %v4090 = vld [vmem:[#allocation2 + $0x190] sm:$0xff]
    %v4091 = vld [vmem:[#allocation2 + $0x198] sm:$0xff]
    %v4092 = vld [vmem:[#allocation2 + $0x1a0] sm:$0xff]
    %v4093 = vld [vmem:[#allocation2 + $0x1a8] sm:$0xff]
    %v4094 = vld [vmem:[#allocation2 + $0x1b0] sm:$0xff]
    %v4095 = vld [vmem:[#allocation2 + $0x1b8] sm:$0xff]
    %v4096 = vld [vmem:[#allocation2 + $0x1c0] sm:$0xff]
    %v4097 = vld [vmem:[#allocation2 + $0x1c8] sm:$0xff]
    %v4098 = vld [vmem:[#allocation2 + $0x1d0] sm:$0xff]
    %v4099 = vld [vmem:[#allocation2 + $0x1d8] sm:$0xff]
    %v4100 = vld [vmem:[#allocation2 + $0x1e0] sm:$0xff]
    %v4101 = vld [vmem:[#allocation2 + $0x1e8] sm:$0xff]
    %v4102 = vld [vmem:[#allocation2 + $0x1f0] sm:$0xff]
    %v4103 = vld [vmem:[#allocation2 + $0x1f8] sm:$0xff]
    %v4104 = vld [vmem:[#allocation2 + $0x200] sm:$0xff]
    %v4105 = vld [vmem:[#allocation2 + $0x208] sm:$0xff]
    %v4106 = vld [vmem:[#allocation2 + $0x210] sm:$0xff]
    %v4107 = vld [vmem:[#allocation2 + $0x218] sm:$0xff]
    %v4108 = vld [vmem:[#allocation2 + $0x220] sm:$0xff]
    %v4109 = vld [vmem:[#allocation2 + $0x228] sm:$0xff]
    %v4110 = vld [vmem:[#allocation2 + $0x230] sm:$0xff]
    %v4111 = vld [vmem:[#allocation2 + $0x238] sm:$0xff]
    %v4112 = vld [vmem:[#allocation2 + $0x240] sm:$0xff]
    %v4113 = vld [vmem:[#allocation2 + $0x248] sm:$0xff]
    %v4114 = vld [vmem:[#allocation2 + $0x250] sm:$0xff]
    %v4115 = vld [vmem:[#allocation2 + $0x258] sm:$0xff]
    %v4116 = vld [vmem:[#allocation2 + $0x260] sm:$0xff]
    %v4117 = vld [vmem:[#allocation2 + $0x268] sm:$0xff]
    %v4118 = vld [vmem:[#allocation2 + $0x270] sm:$0xff]
    %v4119 = vld [vmem:[#allocation2 + $0x278] sm:$0xff]
    %v4120 = vld [vmem:[#allocation2 + $0x280] sm:$0xff]
    %v4121 = vld [vmem:[#allocation2 + $0x288] sm:$0xff]
    %v4122 = vld [vmem:[#allocation2 + $0x290] sm:$0xff]
    %v4123 = vld [vmem:[#allocation2 + $0x298] sm:$0xff]
    %v4124 = vld [vmem:[#allocation2 + $0x2a0] sm:$0xff]
    %v4125 = vld [vmem:[#allocation2 + $0x2a8] sm:$0xff]
    %v4126 = vld [vmem:[#allocation2 + $0x2b0] sm:$0xff]
    %v4127 = vld [vmem:[#allocation2 + $0x2b8] sm:$0xff]
    %v4128 = vld [vmem:[#allocation2 + $0x2c0] sm:$0xff]
    %v4129 = vld [vmem:[#allocation2 + $0x2c8] sm:$0xff]
    %v4130 = vld [vmem:[#allocation2 + $0x2d0] sm:$0xff]
    %v4131 = vld [vmem:[#allocation2 + $0x2d8] sm:$0xff]
    %v4132 = vld [vmem:[#allocation2 + $0x2e0] sm:$0xff]
    %v4133 = vld [vmem:[#allocation2 + $0x2e8] sm:$0xff]
    %v4134 = vld [vmem:[#allocation2 + $0x2f0] sm:$0xff]
    %v4135 = vld [vmem:[#allocation2 + $0x2f8] sm:$0xff]
    %v4136 = vld [vmem:[#allocation2 + $0x300] sm:$0xff]
    %v4137 = vld [vmem:[#allocation2 + $0x308] sm:$0xff]
    %v4138 = vld [vmem:[#allocation2 + $0x310] sm:$0xff]
    %v4139 = vld [vmem:[#allocation2 + $0x318] sm:$0xff]
    %v4140 = vld [vmem:[#allocation2 + $0x320] sm:$0xff]
    %v4141 = vld [vmem:[#allocation2 + $0x328] sm:$0xff]
    %v4142 = vld [vmem:[#allocation2 + $0x330] sm:$0xff]
    %v4143 = vld [vmem:[#allocation2 + $0x338] sm:$0x1]
    %v4144 = vperm.slane %v4143, 0
    %4145 = vmatpush.msra.mxu0 %v4062
    %4146 = vmatpush.msra.mxu0 %v4061
    %4147 = vmatpush.msra.mxu0 %v4060
    %4148 = vmatpush.msra.mxu0 %v4059
    %4149 = vmatpush.msra.mxu0 %v4058
    %4150 = vmatpush.msra.mxu0 %v4057
    %4151 = vmatpush.msra.mxu0 %v4056
    %4152 = vmatpush.msra.mxu0 %v4055
    %4153 = vmatpush.msra.mxu0 %v4054
    %4154 = vmatpush.msra.mxu0 %v4053
    %4155 = vmatpush.msra.mxu0 %v4052
    %4156 = vmatpush.msra.mxu0 %v4051
    %4157 = vmatpush.msra.mxu0 %v4050
    %4158 = vmatpush.msra.mxu0 %v4049
    %4159 = vmatpush.msra.mxu0 %v4048
    %4160 = vmatpush.msra.mxu0 %v4047
    %4161 = vmatmul.f32.gmra.mxu0 %v4041
    %v4162 = vpop.f32.mrf.mxu0
    %v4163 = vadd.f32 %v4144, %v4162
    %4164 = vdwg.mxu0
    %4165 = vmatpush.msra.mxu0 %v4078
    %4166 = vmatpush.msra.mxu0 %v4077
    %4167 = vmatpush.msra.mxu0 %v4076
    %4168 = vmatpush.msra.mxu0 %v4075
    %4169 = vmatpush.msra.mxu0 %v4074
    %4170 = vmatpush.msra.mxu0 %v4073
    %4171 = vmatpush.msra.mxu0 %v4072
    %4172 = vmatpush.msra.mxu0 %v4071
    %4173 = vmatpush.msra.mxu0 %v4070
    %4174 = vmatpush.msra.mxu0 %v4069
    %4175 = vmatpush.msra.mxu0 %v4068
    %4176 = vmatpush.msra.mxu0 %v4067
    %4177 = vmatpush.msra.mxu0 %v4066
    %4178 = vmatpush.msra.mxu0 %v4065
    %4179 = vmatpush.msra.mxu0 %v4064
    %4180 = vmatpush.msra.mxu0 %v4063
    %4181 = vmatmul.f32.gmra.mxu0 %v4042
    %v4182 = vpop.f32.mrf.mxu0
    %v4183 = vadd.f32 %v4163, %v4182
    %4184 = vdwg.mxu0
    %4185 = vmatpush.msra.mxu0 %v4094
    %4186 = vmatpush.msra.mxu0 %v4093
    %4187 = vmatpush.msra.mxu0 %v4092
    %4188 = vmatpush.msra.mxu0 %v4091
    %4189 = vmatpush.msra.mxu0 %v4090
    %4190 = vmatpush.msra.mxu0 %v4089
    %4191 = vmatpush.msra.mxu0 %v4088
    %4192 = vmatpush.msra.mxu0 %v4087
    %4193 = vmatpush.msra.mxu0 %v4086
    %4194 = vmatpush.msra.mxu0 %v4085
    %4195 = vmatpush.msra.mxu0 %v4084
    %4196 = vmatpush.msra.mxu0 %v4083
    %4197 = vmatpush.msra.mxu0 %v4082
    %4198 = vmatpush.msra.mxu0 %v4081
    %4199 = vmatpush.msra.mxu0 %v4080
    %4200 = vmatpush.msra.mxu0 %v4079
    %4201 = vmatmul.f32.gmra.mxu0 %v4043
    %v4202 = vpop.f32.mrf.mxu0
    %v4203 = vadd.f32 %v4183, %v4202
    %4204 = vdwg.mxu0
    %4205 = vmatpush.msra.mxu0 %v4110
    %4206 = vmatpush.msra.mxu0 %v4109
    %4207 = vmatpush.msra.mxu0 %v4108
    %4208 = vmatpush.msra.mxu0 %v4107
    %4209 = vmatpush.msra.mxu0 %v4106
    %4210 = vmatpush.msra.mxu0 %v4105
    %4211 = vmatpush.msra.mxu0 %v4104
    %4212 = vmatpush.msra.mxu0 %v4103
    %4213 = vmatpush.msra.mxu0 %v4102
    %4214 = vmatpush.msra.mxu0 %v4101
    %4215 = vmatpush.msra.mxu0 %v4100
    %4216 = vmatpush.msra.mxu0 %v4099
    %4217 = vmatpush.msra.mxu0 %v4098
    %4218 = vmatpush.msra.mxu0 %v4097
    %4219 = vmatpush.msra.mxu0 %v4096
    %4220 = vmatpush.msra.mxu0 %v4095
    %4221 = vmatmul.f32.gmra.mxu0 %v4044
    %v4222 = vpop.f32.mrf.mxu0
    %v4223 = vadd.f32 %v4203, %v4222
    %4224 = vdwg.mxu0
    %4225 = vmatpush.msra.mxu0 %v4126
    %4226 = vmatpush.msra.mxu0 %v4125
    %4227 = vmatpush.msra.mxu0 %v4124
    %4228 = vmatpush.msra.mxu0 %v4123
    %4229 = vmatpush.msra.mxu0 %v4122
    %4230 = vmatpush.msra.mxu0 %v4121
    %4231 = vmatpush.msra.mxu0 %v4120
    %4232 = vmatpush.msra.mxu0 %v4119
    %4233 = vmatpush.msra.mxu0 %v4118
    %4234 = vmatpush.msra.mxu0 %v4117
    %4235 = vmatpush.msra.mxu0 %v4116
    %4236 = vmatpush.msra.mxu0 %v4115
    %4237 = vmatpush.msra.mxu0 %v4114
    %4238 = vmatpush.msra.mxu0 %v4113
    %4239 = vmatpush.msra.mxu0 %v4112
    %4240 = vmatpush.msra.mxu0 %v4111
    %4241 = vmatmul.f32.gmra.mxu0 %v4045
    %v4242 = vpop.f32.mrf.mxu0
    %v4243 = vadd.f32 %v4223, %v4242
    %4244 = vdwg.mxu0
    %4245 = vmatpush.msra.mxu0 %v4142
    %4246 = vmatpush.msra.mxu0 %v4141
    %4247 = vmatpush.msra.mxu0 %v4140
    %4248 = vmatpush.msra.mxu0 %v4139
    %4249 = vmatpush.msra.mxu0 %v4138
    %4250 = vmatpush.msra.mxu0 %v4137
    %4251 = vmatpush.msra.mxu0 %v4136
    %4252 = vmatpush.msra.mxu0 %v4135
    %4253 = vmatpush.msra.mxu0 %v4134
    %4254 = vmatpush.msra.mxu0 %v4133
    %4255 = vmatpush.msra.mxu0 %v4132
    %4256 = vmatpush.msra.mxu0 %v4131
    %4257 = vmatpush.msra.mxu0 %v4130
    %4258 = vmatpush.msra.mxu0 %v4129
    %4259 = vmatpush.msra.mxu0 %v4128
    %4260 = vmatpush.msra.mxu0 %v4127
    %4261 = vmatmul.f32.gmra.mxu0 %v4046
    %v4262 = vpop.f32.mrf.mxu0
    %v4263 = vadd.f32 %v4243, %v4262
    %4264 = vdwg.mxu0
    %v4265 = vld [vmem:[#allocation2 + $0x340] sm:$0xf]
    %vm4266 = vcmask 64512
    %v4268 = vsel %vm4266, %v4265, 0
    %4270 = vmatpush.msra.mxu0 0.0
    %4271 = vmatpush.msra.mxu0 0.0
    %4272 = vmatpush.msra.mxu0 0.0
    %4273 = vmatpush.msra.mxu0 0.0
    %4274 = vmatpush.msra.mxu0 0.0
    %4275 = vmatpush.msra.mxu0 0.0
    %4276 = vmatpush.msra.mxu0 0.0
    %4277 = vmatpush.msra.mxu0 0.0
    %4278 = vmatpush.msra.mxu0 0.0
    %4279 = vmatpush.msra.mxu0 0.0
    %4280 = vmatpush.msra.mxu0 0.0
    %4281 = vmatpush.msra.mxu0 0.0
    %4282 = vmatpush.msra.mxu0 0.0
    %4283 = vmatpush.msra.mxu0 0.0
    %4284 = vmatpush.msra.mxu0 0.0
    %4285 = vmatpush.msra.mxu0 %v4263
    %4286 = vmatmul.f32.gmra.mxu0 %v4268
    %v4287 = vpop.f32.mrf.mxu0
    %v4288 = vadd.f32 0.0, %v4287
    %4289 = vdwg.mxu0
    %v4290 = vld [vmem:[#allocation2 + $0x728] sm:$0xff]
    %v4291 = vld [vmem:[#allocation2 + $0x730] sm:$0xff]
    %v4292 = vld [vmem:[#allocation2 + $0x738] sm:$0xff]
    %v4293 = vld [vmem:[#allocation2 + $0x740] sm:$0xff]
    %v4294 = vsel %vm119, %v4025, 0
    %v4296 = vsel %vm119, %v4026, 0
    %v4298 = vsel %vm119, %v4027, 0
    %v4300 = vsel %vm119, %v4028, 0
    %4302 = vmatpush.msra.mxu0 0.0
    %4303 = vmatpush.msra.mxu0 0.0
    %4304 = vmatpush.msra.mxu0 0.0
    %4305 = vmatpush.msra.mxu0 0.0
    %4306 = vmatpush.msra.mxu0 0.0
    %4307 = vmatpush.msra.mxu0 0.0
    %4308 = vmatpush.msra.mxu0 0.0
    %4309 = vmatpush.msra.mxu0 0.0
    %4310 = vmatpush.msra.mxu0 0.0
    %4311 = vmatpush.msra.mxu0 0.0
    %4312 = vmatpush.msra.mxu0 0.0
    %4313 = vmatpush.msra.mxu0 0.0
    %4314 = vmatpush.msra.mxu0 %v4293
    %4315 = vmatpush.msra.mxu0 %v4292
    %4316 = vmatpush.msra.mxu0 %v4291
    %4317 = vmatpush.msra.mxu0 %v4290
    %4318 = vmatmul.f32.gmra.mxu0 %v4294
    %v4319 = vpop.f32.mrf.mxu0
    %v4320 = vadd.f32 0.0, %v4319
    %4321 = vmatmul.f32.gmra.mxu0 %v4296
    %v4322 = vpop.f32.mrf.mxu0
    %v4323 = vadd.f32 0.0, %v4322
    %4324 = vmatmul.f32.gmra.mxu0 %v4298
    %v4325 = vpop.f32.mrf.mxu0
    %v4326 = vadd.f32 0.0, %v4325
    %4327 = vmatmul.f32.gmra.mxu0 %v4300
    %v4328 = vpop.f32.mrf.mxu0
    %v4329 = vadd.f32 0.0, %v4328
    %4330 = vdwg.mxu0
    %v4331 = vtanh.pop %v4320
    %v4332 = vtanh.pop %v4323
    %v4333 = vtanh.pop %v4326
    %v4334 = vtanh.pop %v4329
    %v4335 = vld [vmem:[#allocation2 + $0x748] sm:$0xff]
    %v4336 = vld [vmem:[#allocation2 + $0x750] sm:$0xff]
    %v4338 = vsel %vm384, %v4331, 0
    %v4341 = vsel %vm384, %v4332, 0
    %v4344 = vsel %vm384, %v4333, 0
    %v4347 = vsel %vm384, %v4334, 0
    %4349 = vmatpush.msra.mxu0 0.0
    %4350 = vmatpush.msra.mxu0 0.0
    %4351 = vmatpush.msra.mxu0 0.0
    %4352 = vmatpush.msra.mxu0 0.0
    %4353 = vmatpush.msra.mxu0 0.0
    %4354 = vmatpush.msra.mxu0 0.0
    %4355 = vmatpush.msra.mxu0 0.0
    %4356 = vmatpush.msra.mxu0 0.0
    %4357 = vmatpush.msra.mxu0 0.0
    %4358 = vmatpush.msra.mxu0 0.0
    %4359 = vmatpush.msra.mxu0 0.0
    %4360 = vmatpush.msra.mxu0 0.0
    %4361 = vmatpush.msra.mxu0 0.0
    %4362 = vmatpush.msra.mxu0 0.0
    %4363 = vmatpush.msra.mxu0 %v4336
    %4364 = vmatpush.msra.mxu0 %v4335
    %4365 = vmatmul.f32.gmra.mxu0 %v4338
    %v4366 = vpop.f32.mrf.mxu0
    %v4367 = vadd.f32 0.0, %v4366
    %4368 = vmatmul.f32.gmra.mxu0 %v4341
    %v4369 = vpop.f32.mrf.mxu0
    %v4370 = vadd.f32 0.0, %v4369
    %4371 = vmatmul.f32.gmra.mxu0 %v4344
    %v4372 = vpop.f32.mrf.mxu0
    %v4373 = vadd.f32 0.0, %v4372
    %4374 = vmatmul.f32.gmra.mxu0 %v4347
    %v4375 = vpop.f32.mrf.mxu0
    %v4376 = vadd.f32 0.0, %v4375
    %4377 = vdwg.mxu0
    %v4382 = vrot.slane %v4367, 4
    %v4383 = vrot.slane %v4370, 4
    %v4384 = vrot.slane %v4373, 4
    %v4385 = vrot.slane %v4376, 4
    %vm4390 = vcmask 19456
    %v4391 = vsel %vm4390, %v4367, -inf
    %v4392 = vsel %vm4390, %v4382, -inf
    %v4393 = vsel %vm4390, %v4370, -inf
    %v4394 = vsel %vm4390, %v4383, -inf
    %v4395 = vsel %vm4390, %v4373, -inf
    %v4396 = vmax.f32 %v4391, %v4395
    %v4397 = vsel %vm4390, %v4384, -inf
    %v4398 = vmax.f32 %v4392, %v4397
    %v4399 = vsel %vm4390, %v4376, -inf
    %v4400 = vmax.f32 %v4393, %v4399
    %v4401 = vsel %vm4390, %v4385, -inf
    %v4402 = vmax.f32 %v4394, %v4401
    %v4403 = vmax.f32 %v4396, %v4398
    %v4404 = vmax.f32 %v4400, %v4402
    %v4405 = vmax.f32 %v4403, %v4404
    %v4406 = vsub.f32 %v4367, %v4405
    %v4407 = vsub.f32 %v4382, %v4405
    %v4408 = vsub.f32 %v4370, %v4405
    %v4409 = vsub.f32 %v4383, %v4405
    %v4410 = vsub.f32 %v4373, %v4405
    %v4411 = vsub.f32 %v4384, %v4405
    %v4412 = vsub.f32 %v4376, %v4405
    %v4413 = vsub.f32 %v4385, %v4405
    %v4414 = vmul.f32 %v4406, 1.442695
    %v4415 = vpow.pop %v4414
    %v4416 = vmul.f32 %v4407, 1.442695
    %v4417 = vpow.pop %v4416
    %v4418 = vmul.f32 %v4408, 1.442695
    %v4419 = vpow.pop %v4418
    %v4420 = vmul.f32 %v4409, 1.442695
    %v4421 = vpow.pop %v4420
    %v4422 = vmul.f32 %v4410, 1.442695
    %v4423 = vpow.pop %v4422
    %v4424 = vmul.f32 %v4411, 1.442695
    %v4425 = vpow.pop %v4424
    %v4426 = vmul.f32 %v4412, 1.442695
    %v4427 = vpow.pop %v4426
    %v4428 = vmul.f32 %v4413, 1.442695
    %v4429 = vpow.pop %v4428
    %v4430 = vsel %vm4390, %v4415, 0.0
    %v4431 = vsel %vm4390, %v4417, 0.0
    %v4432 = vadd.f32 %v4430, %v4431
    %v4433 = vsel %vm4390, %v4419, 0.0
    %v4434 = vadd.f32 %v4432, %v4433
    %v4435 = vsel %vm4390, %v4421, 0.0
    %v4436 = vadd.f32 %v4434, %v4435
    %v4437 = vsel %vm4390, %v4423, 0.0
    %v4438 = vadd.f32 %v4436, %v4437
    %v4439 = vsel %vm4390, %v4425, 0.0
    %v4440 = vadd.f32 %v4438, %v4439
    %v4441 = vsel %vm4390, %v4427, 0.0
    %v4442 = vadd.f32 %v4440, %v4441
    %v4443 = vsel %vm4390, %v4429, 0.0
    %v4444 = vadd.f32 %v4442, %v4443
    %v4445 = vrcp.pop %v4444
    %v4446 = vmul.f32 %v4444, %v4445
    %v4447 = vsub.f32 1.0, %v4446
    %v4448 = vmul.f32 %v4445, %v4447
    %v4449 = vadd.f32 %v4445, %v4448
    %vm4450 = vweird.f32 %v4444
    %vm4451 = vweird.f32 %v4445
    %vm4452 = vmor %vm4450, %vm4451
    %v4453 = vsel %vm4452, %v4445, %v4449
    %v4454 = vand.u32 2147483647, %v4444
    %vm4455 = vcmp.eq.f32.partialorder %v4454, 8.507059e+37
    %v4456 = vand.u32 %v4444, 2147483648
    %v4457 = vor.u32 1.1754944e-38, %v4456
    %v4458 = vsel %vm4455, %v4457, %v4453
    %v4459 = vmul.f32 %v4415, %v4458
    %v4460 = vmul.f32 %v4417, %v4458
    %v4461 = vmul.f32 %v4419, %v4458
    %v4462 = vmul.f32 %v4421, %v4458
    %v4463 = vmul.f32 %v4423, %v4458
    %v4464 = vmul.f32 %v4425, %v4458
    %v4465 = vmul.f32 %v4427, %v4458
    %v4466 = vmul.f32 %v4429, %v4458
    %v4467 = vsel %vm4390, %v4459, 0.0
    %4468 = vadd.xlane.f32.xlu0 %v4467
    %v4469 = vpop.xlane.xlu0 %4468
    %v4470 = vsel %vm4390, %v4460, 0.0
    %4471 = vadd.xlane.f32.xlu0 %v4470
    %v4472 = vpop.xlane.xlu0 %4471
    %v4473 = vsel %vm4390, %v4461, 0.0
    %4474 = vadd.xlane.f32.xlu0 %v4473
    %v4475 = vpop.xlane.xlu0 %4474
    %v4476 = vsel %vm4390, %v4462, 0.0
    %4477 = vadd.xlane.f32.xlu0 %v4476
    %v4478 = vpop.xlane.xlu0 %4477
    %v4479 = vsel %vm4390, %v4463, 0.0
    %4480 = vadd.xlane.f32.xlu0 %v4479
    %v4481 = vpop.xlane.xlu0 %4480
    %v4482 = vsel %vm4390, %v4464, 0.0
    %4483 = vadd.xlane.f32.xlu0 %v4482
    %v4484 = vpop.xlane.xlu0 %4483
    %v4485 = vsel %vm4390, %v4465, 0.0
    %4486 = vadd.xlane.f32.xlu0 %v4485
    %v4487 = vpop.xlane.xlu0 %4486
    %v4488 = vsel %vm4390, %v4466, 0.0
    %4489 = vadd.xlane.f32.xlu0 %v4488
    %v4490 = vpop.xlane.xlu0 %4489
    %v4491 = vrcp.pop 3.0
    %v4492 = vmul.f32 3.0, %v4491
    %v4493 = vsub.f32 1.0, %v4492
    %v4494 = vmul.f32 %v4491, %v4493
    %v4495 = vadd.f32 %v4491, %v4494
    %vm4496 = vweird.f32 %v4491
    %v4497 = vsel %vm4496, %v4491, %v4495
    %v4498 = vmul.f32 %v4469, %v4497
    %v4499 = vmul.f32 %v4472, %v4497
    %v4500 = vmul.f32 %v4475, %v4497
    %v4501 = vmul.f32 %v4478, %v4497
    %v4502 = vmul.f32 %v4481, %v4497
    %v4503 = vmul.f32 %v4484, %v4497
    %v4504 = vmul.f32 %v4487, %v4497
    %v4505 = vmul.f32 %v4490, %v4497
    %v4506 = vmul.f32 %v4498, %v4025
    %v4507 = vmul.f32 %v4499, %v4033
    %v4508 = vmul.f32 %v4500, %v4026
    %v4509 = vmul.f32 %v4501, %v4034
    %v4510 = vmul.f32 %v4502, %v4027
    %v4511 = vmul.f32 %v4503, %v4035
    %v4512 = vmul.f32 %v4504, %v4028
    %v4513 = vmul.f32 %v4505, %v4036
    %vm4514 = vcmask 257024
    %v4515 = vsel %vm4514, %v4506, 0.0
    %v4516 = vsel %vm4514, %v4507, 0.0
    %v4517 = vadd.f32 %v4515, %v4516
    %v4518 = vsel %vm4514, %v4508, 0.0
    %v4519 = vadd.f32 %v4517, %v4518
    %v4520 = vsel %vm4514, %v4509, 0.0
    %v4521 = vadd.f32 %v4519, %v4520
    %v4522 = vsel %vm4514, %v4510, 0.0
    %v4523 = vadd.f32 %v4521, %v4522
    %v4524 = vsel %vm4514, %v4511, 0.0
    %v4525 = vadd.f32 %v4523, %v4524
    %v4526 = vsel %vm4514, %v4512, 0.0
    %v4527 = vadd.f32 %v4525, %v4526
    %v4528 = vsel %vm4514, %v4513, 0.0
    %v4529 = vadd.f32 %v4527, %v4528
    %4531 = vrot.lane.b32.xlu0 %v4529, 64
    %v4532 = vpop.permute.xlu0 %4531
    %vm4534 = vcmask 523264
    %v4535 = vsel %vm4534, %v4288, %v4532
    %v4536 = vld [vmem:[#allocation2 + $0x758] sm:$0xff]
    %v4537 = vld [vmem:[#allocation2 + $0x760] sm:$0xff]
    %v4538 = vld [vmem:[#allocation2 + $0x768] sm:$0xff]
    %v4539 = vld [vmem:[#allocation2 + $0x770] sm:$0xff]
    %v4540 = vld [vmem:[#allocation2 + $0x778] sm:$0xff]
    %v4541 = vld [vmem:[#allocation2 + $0x780] sm:$0xff]
    %v4542 = vld [vmem:[#allocation2 + $0x788] sm:$0xff]
    %v4543 = vld [vmem:[#allocation2 + $0x790] sm:$0xff]
    %v4544 = vld [vmem:[#allocation2 + $0x798] sm:$0xff]
    %v4545 = vld [vmem:[#allocation2 + $0x7a0] sm:$0xff]
    %v4546 = vld [vmem:[#allocation2 + $0x7a8] sm:$0xff]
    %v4547 = vld [vmem:[#allocation2 + $0x7b0] sm:$0xff]
    %v4548 = vld [vmem:[#allocation2 + $0x7b8] sm:$0x1]
    %v4549 = vperm.slane %v4548, 0
    %vm4550 = vcmask 785408
    %v4552 = vsel %vm4550, %v4535, 0
    %4554 = vmatpush.msra.mxu0 0.0
    %4555 = vmatpush.msra.mxu0 0.0
    %4556 = vmatpush.msra.mxu0 0.0
    %4557 = vmatpush.msra.mxu0 0.0
    %4558 = vmatpush.msra.mxu0 %v4547
    %4559 = vmatpush.msra.mxu0 %v4546
    %4560 = vmatpush.msra.mxu0 %v4545
    %4561 = vmatpush.msra.mxu0 %v4544
    %4562 = vmatpush.msra.mxu0 %v4543
    %4563 = vmatpush.msra.mxu0 %v4542
    %4564 = vmatpush.msra.mxu0 %v4541
    %4565 = vmatpush.msra.mxu0 %v4540
    %4566 = vmatpush.msra.mxu0 %v4539
    %4567 = vmatpush.msra.mxu0 %v4538
    %4568 = vmatpush.msra.mxu0 %v4537
    %4569 = vmatpush.msra.mxu0 %v4536
    %4570 = vmatmul.f32.gmra.mxu0 %v4552
    %v4571 = vpop.f32.mrf.mxu0
    %v4572 = vadd.f32 %v4549, %v4571
    %4573 = vdwg.mxu0
    %v4574 = vmax.f32 %v4572, 0.0
    %v4575 = vld [vmem:[#allocation2 + $0x7c0] sm:$0xff]
    %v4576 = vld [vmem:[#allocation2 + $0x7c8] sm:$0xff]
    %v4577 = vld [vmem:[#allocation2 + $0x7d0] sm:$0xff]
    %v4578 = vld [vmem:[#allocation2 + $0x7d8] sm:$0xff]
    %v4579 = vld [vmem:[#allocation2 + $0x7e0] sm:$0x1]
    %v4580 = vperm.slane %v4579, 0
    %v4582 = vsel %vm119, %v4574, 0
    %4584 = vmatpush.msra.mxu0 0.0
    %4585 = vmatpush.msra.mxu0 0.0
    %4586 = vmatpush.msra.mxu0 0.0
    %4587 = vmatpush.msra.mxu0 0.0
    %4588 = vmatpush.msra.mxu0 0.0
    %4589 = vmatpush.msra.mxu0 0.0
    %4590 = vmatpush.msra.mxu0 0.0
    %4591 = vmatpush.msra.mxu0 0.0
    %4592 = vmatpush.msra.mxu0 0.0
    %4593 = vmatpush.msra.mxu0 0.0
    %4594 = vmatpush.msra.mxu0 0.0
    %4595 = vmatpush.msra.mxu0 0.0
    %4596 = vmatpush.msra.mxu0 %v4578
    %4597 = vmatpush.msra.mxu0 %v4577
    %4598 = vmatpush.msra.mxu0 %v4576
    %4599 = vmatpush.msra.mxu0 %v4575
    %4600 = vmatmul.f32.gmra.mxu0 %v4582
    %v4601 = vpop.f32.mrf.mxu0
    %v4602 = vadd.f32 %v4580, %v4601
    %4603 = vdwg.mxu0
    %v4604 = vmax.f32 %v4602, 0.0
    %v4605 = vld [vmem:[#allocation2 + $0x7e8] sm:$0xff]
    %v4606 = vld [vmem:[#allocation2 + $0x7f0] sm:$0xff]
    %v4607 = vld [vmem:[#allocation2 + $0x7f8] sm:$0xff]
    %v4608 = vld [vmem:[#allocation2 + $0x800] sm:$0xff]
    %v4609 = vld [vmem:[#allocation2 + $0x808] sm:$0xff]
    %v4610 = vld [vmem:[#allocation2 + $0x810] sm:$0xff]
    %v4611 = vld [vmem:[#allocation2 + $0x818] sm:$0xff]
    %v4612 = vld [vmem:[#allocation2 + $0x820] sm:$0xff]
    %4613 = vmatpush.msra.mxu0 0.0
    %4614 = vmatpush.msra.mxu0 0.0
    %4615 = vmatpush.msra.mxu0 0.0
    %4616 = vmatpush.msra.mxu0 0.0
    %4617 = vmatpush.msra.mxu0 0.0
    %4618 = vmatpush.msra.mxu0 0.0
    %4619 = vmatpush.msra.mxu0 0.0
    %4620 = vmatpush.msra.mxu0 0.0
    %4621 = vmatpush.msra.mxu0 0.0
    %4622 = vmatpush.msra.mxu0 0.0
    %4623 = vmatpush.msra.mxu0 0.0
    %4624 = vmatpush.msra.mxu0 0.0
    %4625 = vmatpush.msra.mxu0 %v4612
    %4626 = vmatpush.msra.mxu0 %v4611
    %4627 = vmatpush.msra.mxu0 %v4610
    %4628 = vmatpush.msra.mxu0 %v4609
    %4629 = vmatmul.f32.gmra.mxu0 %v4294
    %v4630 = vpop.f32.mrf.mxu0
    %v4631 = vadd.f32 0.0, %v4630
    %4632 = vmatmul.f32.gmra.mxu0 %v4296
    %v4633 = vpop.f32.mrf.mxu0
    %v4634 = vadd.f32 0.0, %v4633
    %4635 = vmatmul.f32.gmra.mxu0 %v4298
    %v4636 = vpop.f32.mrf.mxu0
    %v4637 = vadd.f32 0.0, %v4636
    %4638 = vmatmul.f32.gmra.mxu0 %v4300
    %v4639 = vpop.f32.mrf.mxu0
    %v4640 = vadd.f32 0.0, %v4639
    %4641 = vdwg.mxu0
    %v4642 = vtanh.pop %v4631
    %v4643 = vtanh.pop %v4634
    %v4644 = vtanh.pop %v4637
    %v4645 = vtanh.pop %v4640
    %v4646 = vld [vmem:[#allocation2 + $0x828] sm:$0xff]
    %v4647 = vld [vmem:[#allocation2 + $0x830] sm:$0xff]
    %v4649 = vsel %vm384, %v4642, 0
    %v4652 = vsel %vm384, %v4643, 0
    %v4655 = vsel %vm384, %v4644, 0
    %v4658 = vsel %vm384, %v4645, 0
    %4660 = vmatpush.msra.mxu0 0.0
    %4661 = vmatpush.msra.mxu0 0.0
    %4662 = vmatpush.msra.mxu0 0.0
    %4663 = vmatpush.msra.mxu0 0.0
    %4664 = vmatpush.msra.mxu0 0.0
    %4665 = vmatpush.msra.mxu0 0.0
    %4666 = vmatpush.msra.mxu0 0.0
    %4667 = vmatpush.msra.mxu0 0.0
    %4668 = vmatpush.msra.mxu0 0.0
    %4669 = vmatpush.msra.mxu0 0.0
    %4670 = vmatpush.msra.mxu0 0.0
    %4671 = vmatpush.msra.mxu0 0.0
    %4672 = vmatpush.msra.mxu0 0.0
    %4673 = vmatpush.msra.mxu0 0.0
    %4674 = vmatpush.msra.mxu0 %v4647
    %4675 = vmatpush.msra.mxu0 %v4646
    %4676 = vmatmul.f32.gmra.mxu0 %v4649
    %v4677 = vpop.f32.mrf.mxu0
    %v4678 = vadd.f32 0.0, %v4677
    %4679 = vmatmul.f32.gmra.mxu0 %v4652
    %v4680 = vpop.f32.mrf.mxu0
    %v4681 = vadd.f32 0.0, %v4680
    %4682 = vmatmul.f32.gmra.mxu0 %v4655
    %v4683 = vpop.f32.mrf.mxu0
    %v4684 = vadd.f32 0.0, %v4683
    %4685 = vmatmul.f32.gmra.mxu0 %v4658
    %v4686 = vpop.f32.mrf.mxu0
    %v4687 = vadd.f32 0.0, %v4686
    %4688 = vdwg.mxu0
    %v4693 = vrot.slane %v4678, 4
    %v4694 = vrot.slane %v4681, 4
    %v4695 = vrot.slane %v4684, 4
    %v4696 = vrot.slane %v4687, 4
    %vm4701 = vcmask 35840
    %v4702 = vsel %vm4701, %v4678, -inf
    %v4703 = vsel %vm4701, %v4693, -inf
    %v4704 = vsel %vm4701, %v4681, -inf
    %v4705 = vsel %vm4701, %v4694, -inf
    %v4706 = vsel %vm4701, %v4684, -inf
    %v4707 = vmax.f32 %v4702, %v4706
    %v4708 = vsel %vm4701, %v4695, -inf
    %v4709 = vmax.f32 %v4703, %v4708
    %v4710 = vsel %vm4701, %v4687, -inf
    %v4711 = vmax.f32 %v4704, %v4710
    %v4712 = vsel %vm4701, %v4696, -inf
    %v4713 = vmax.f32 %v4705, %v4712
    %v4714 = vmax.f32 %v4707, %v4709
    %v4715 = vmax.f32 %v4711, %v4713
    %v4716 = vmax.f32 %v4714, %v4715
    %v4717 = vsub.f32 %v4678, %v4716
    %v4718 = vsub.f32 %v4693, %v4716
    %v4719 = vsub.f32 %v4681, %v4716
    %v4720 = vsub.f32 %v4694, %v4716
    %v4721 = vsub.f32 %v4684, %v4716
    %v4722 = vsub.f32 %v4695, %v4716
    %v4723 = vsub.f32 %v4687, %v4716
    %v4724 = vsub.f32 %v4696, %v4716
    %v4725 = vmul.f32 %v4717, 1.442695
    %v4726 = vpow.pop %v4725
    %v4727 = vmul.f32 %v4718, 1.442695
    %v4728 = vpow.pop %v4727
    %v4729 = vmul.f32 %v4719, 1.442695
    %v4730 = vpow.pop %v4729
    %v4731 = vmul.f32 %v4720, 1.442695
    %v4732 = vpow.pop %v4731
    %v4733 = vmul.f32 %v4721, 1.442695
    %v4734 = vpow.pop %v4733
    %v4735 = vmul.f32 %v4722, 1.442695
    %v4736 = vpow.pop %v4735
    %v4737 = vmul.f32 %v4723, 1.442695
    %v4738 = vpow.pop %v4737
    %v4739 = vmul.f32 %v4724, 1.442695
    %v4740 = vpow.pop %v4739
    %v4741 = vsel %vm4701, %v4726, 0.0
    %v4742 = vsel %vm4701, %v4728, 0.0
    %v4743 = vadd.f32 %v4741, %v4742
    %v4744 = vsel %vm4701, %v4730, 0.0
    %v4745 = vadd.f32 %v4743, %v4744
    %v4746 = vsel %vm4701, %v4732, 0.0
    %v4747 = vadd.f32 %v4745, %v4746
    %v4748 = vsel %vm4701, %v4734, 0.0
    %v4749 = vadd.f32 %v4747, %v4748
    %v4750 = vsel %vm4701, %v4736, 0.0
    %v4751 = vadd.f32 %v4749, %v4750
    %v4752 = vsel %vm4701, %v4738, 0.0
    %v4753 = vadd.f32 %v4751, %v4752
    %v4754 = vsel %vm4701, %v4740, 0.0
    %v4755 = vadd.f32 %v4753, %v4754
    %v4756 = vrcp.pop %v4755
    %v4757 = vmul.f32 %v4755, %v4756
    %v4758 = vsub.f32 1.0, %v4757
    %v4759 = vmul.f32 %v4756, %v4758
    %v4760 = vadd.f32 %v4756, %v4759
    %vm4761 = vweird.f32 %v4755
    %vm4762 = vweird.f32 %v4756
    %vm4763 = vmor %vm4761, %vm4762
    %v4764 = vsel %vm4763, %v4756, %v4760
    %v4765 = vand.u32 2147483647, %v4755
    %vm4766 = vcmp.eq.f32.partialorder %v4765, 8.507059e+37
    %v4767 = vand.u32 %v4755, 2147483648
    %v4768 = vor.u32 1.1754944e-38, %v4767
    %v4769 = vsel %vm4766, %v4768, %v4764
    %v4770 = vmul.f32 %v4726, %v4769
    %v4771 = vmul.f32 %v4728, %v4769
    %v4772 = vmul.f32 %v4730, %v4769
    %v4773 = vmul.f32 %v4732, %v4769
    %v4774 = vmul.f32 %v4734, %v4769
    %v4775 = vmul.f32 %v4736, %v4769
    %v4776 = vmul.f32 %v4738, %v4769
    %v4777 = vmul.f32 %v4740, %v4769
    %v4778 = vsel %vm4701, %v4770, 0.0
    %4779 = vadd.xlane.f32.xlu0 %v4778
    %v4780 = vpop.xlane.xlu0 %4779
    %v4781 = vsel %vm4701, %v4771, 0.0
    %4782 = vadd.xlane.f32.xlu0 %v4781
    %v4783 = vpop.xlane.xlu0 %4782
    %v4784 = vsel %vm4701, %v4772, 0.0
    %4785 = vadd.xlane.f32.xlu0 %v4784
    %v4786 = vpop.xlane.xlu0 %4785
    %v4787 = vsel %vm4701, %v4773, 0.0
    %4788 = vadd.xlane.f32.xlu0 %v4787
    %v4789 = vpop.xlane.xlu0 %4788
    %v4790 = vsel %vm4701, %v4774, 0.0
    %4791 = vadd.xlane.f32.xlu0 %v4790
    %v4792 = vpop.xlane.xlu0 %4791
    %v4793 = vsel %vm4701, %v4775, 0.0
    %4794 = vadd.xlane.f32.xlu0 %v4793
    %v4795 = vpop.xlane.xlu0 %4794
    %v4796 = vsel %vm4701, %v4776, 0.0
    %4797 = vadd.xlane.f32.xlu0 %v4796
    %v4798 = vpop.xlane.xlu0 %4797
    %v4799 = vsel %vm4701, %v4777, 0.0
    %4800 = vadd.xlane.f32.xlu0 %v4799
    %v4801 = vpop.xlane.xlu0 %4800
    %v4802 = vrcp.pop 5.0
    %v4803 = vmul.f32 5.0, %v4802
    %v4804 = vsub.f32 1.0, %v4803
    %v4805 = vmul.f32 %v4802, %v4804
    %v4806 = vadd.f32 %v4802, %v4805
    %vm4807 = vweird.f32 %v4802
    %v4808 = vsel %vm4807, %v4802, %v4806
    %v4809 = vmul.f32 %v4780, %v4808
    %v4810 = vmul.f32 %v4783, %v4808
    %v4811 = vmul.f32 %v4786, %v4808
    %v4812 = vmul.f32 %v4789, %v4808
    %v4813 = vmul.f32 %v4792, %v4808
    %v4814 = vmul.f32 %v4795, %v4808
    %v4815 = vmul.f32 %v4798, %v4808
    %v4816 = vmul.f32 %v4801, %v4808
    %v4817 = vmul.f32 %v4809, %v4025
    %v4818 = vmul.f32 %v4810, %v4033
    %v4819 = vmul.f32 %v4811, %v4026
    %v4820 = vmul.f32 %v4812, %v4034
    %v4821 = vmul.f32 %v4813, %v4027
    %v4822 = vmul.f32 %v4814, %v4035
    %v4823 = vmul.f32 %v4815, %v4028
    %v4824 = vmul.f32 %v4816, %v4036
    %v4825 = vsel %vm4514, %v4817, 0.0
    %v4826 = vsel %vm4514, %v4818, 0.0
    %v4827 = vadd.f32 %v4825, %v4826
    %v4828 = vsel %vm4514, %v4819, 0.0
    %v4829 = vadd.f32 %v4827, %v4828
    %v4830 = vsel %vm4514, %v4820, 0.0
    %v4831 = vadd.f32 %v4829, %v4830
    %v4832 = vsel %vm4514, %v4821, 0.0
    %v4833 = vadd.f32 %v4831, %v4832
    %v4834 = vsel %vm4514, %v4822, 0.0
    %v4835 = vadd.f32 %v4833, %v4834
    %v4836 = vsel %vm4514, %v4823, 0.0
    %v4837 = vadd.f32 %v4835, %v4836
    %v4838 = vsel %vm4514, %v4824, 0.0
    %v4839 = vadd.f32 %v4837, %v4838
    %4841 = vrot.lane.b32.xlu0 %v4839, 64
    %v4842 = vpop.permute.xlu0 %4841
    %4844 = vrot.lane.b32.xlu0 %v4574, 96
    %v4845 = vpop.permute.xlu0 %4844
    %v4847 = vsel %vm4534, %v4288, %v4842
    %v4848 = vsel %vm4550, %v4847, %v4845
    %v4849 = vld [vmem:[#allocation2 + $0x838] sm:$0xff]
    %v4850 = vld [vmem:[#allocation2 + $0x840] sm:$0xff]
    %v4851 = vld [vmem:[#allocation2 + $0x848] sm:$0xff]
    %v4852 = vld [vmem:[#allocation2 + $0x850] sm:$0xff]
    %v4853 = vld [vmem:[#allocation2 + $0x858] sm:$0xff]
    %v4854 = vld [vmem:[#allocation2 + $0x860] sm:$0xff]
    %v4855 = vld [vmem:[#allocation2 + $0x868] sm:$0xff]
    %v4856 = vld [vmem:[#allocation2 + $0x870] sm:$0xff]
    %v4857 = vld [vmem:[#allocation2 + $0x878] sm:$0xff]
    %v4858 = vld [vmem:[#allocation2 + $0x880] sm:$0xff]
    %v4859 = vld [vmem:[#allocation2 + $0x888] sm:$0xff]
    %v4860 = vld [vmem:[#allocation2 + $0x890] sm:$0xff]
    %v4861 = vld [vmem:[#allocation2 + $0x898] sm:$0xff]
    %v4862 = vld [vmem:[#allocation2 + $0x8a0] sm:$0xff]
    %v4863 = vld [vmem:[#allocation2 + $0x8a8] sm:$0xff]
    %v4864 = vld [vmem:[#allocation2 + $0x8b0] sm:$0xff]
    %v4865 = vld [vmem:[#allocation2 + $0x8b8] sm:$0x1]
    %v4866 = vperm.slane %v4865, 0
    %4867 = vmatpush.msra.mxu0 %v4864
    %4868 = vmatpush.msra.mxu0 %v4863
    %4869 = vmatpush.msra.mxu0 %v4862
    %4870 = vmatpush.msra.mxu0 %v4861
    %4871 = vmatpush.msra.mxu0 %v4860
    %4872 = vmatpush.msra.mxu0 %v4859
    %4873 = vmatpush.msra.mxu0 %v4858
    %4874 = vmatpush.msra.mxu0 %v4857
    %4875 = vmatpush.msra.mxu0 %v4856
    %4876 = vmatpush.msra.mxu0 %v4855
    %4877 = vmatpush.msra.mxu0 %v4854
    %4878 = vmatpush.msra.mxu0 %v4853
    %4879 = vmatpush.msra.mxu0 %v4852
    %4880 = vmatpush.msra.mxu0 %v4851
    %4881 = vmatpush.msra.mxu0 %v4850
    %4882 = vmatpush.msra.mxu0 %v4849
    %4883 = vmatmul.f32.gmra.mxu0 %v4848
    %v4884 = vpop.f32.mrf.mxu0
    %v4885 = vadd.f32 %v4866, %v4884
    %4886 = vdwg.mxu0
    %v4887 = vmax.f32 %v4885, 0.0
    %v4888 = vld [vmem:[#allocation2 + $0x8c0] sm:$0xff]
    %v4889 = vld [vmem:[#allocation2 + $0x8c8] sm:$0xff]
    %v4890 = vld [vmem:[#allocation2 + $0x8d0] sm:$0xff]
    %v4891 = vld [vmem:[#allocation2 + $0x8d8] sm:$0xff]
    %v4892 = vld [vmem:[#allocation2 + $0x8e0] sm:$0x1]
    %v4893 = vperm.slane %v4892, 0
    %v4895 = vsel %vm119, %v4887, 0
    %4897 = vmatpush.msra.mxu0 0.0
    %4898 = vmatpush.msra.mxu0 0.0
    %4899 = vmatpush.msra.mxu0 0.0
    %4900 = vmatpush.msra.mxu0 0.0
    %4901 = vmatpush.msra.mxu0 0.0
    %4902 = vmatpush.msra.mxu0 0.0
    %4903 = vmatpush.msra.mxu0 0.0
    %4904 = vmatpush.msra.mxu0 0.0
    %4905 = vmatpush.msra.mxu0 0.0
    %4906 = vmatpush.msra.mxu0 0.0
    %4907 = vmatpush.msra.mxu0 0.0
    %4908 = vmatpush.msra.mxu0 0.0
    %4909 = vmatpush.msra.mxu0 %v4891
    %4910 = vmatpush.msra.mxu0 %v4890
    %4911 = vmatpush.msra.mxu0 %v4889
    %4912 = vmatpush.msra.mxu0 %v4888
    %4913 = vmatmul.f32.gmra.mxu0 %v4895
    %v4914 = vpop.f32.mrf.mxu0
    %v4915 = vadd.f32 %v4893, %v4914
    %4916 = vdwg.mxu0
    %v4917 = vmax.f32 %v4915, 0.0
    %v4918 = vld [vmem:[#allocation2 + $0x8e8] sm:$0xff]
    %v4919 = vld [vmem:[#allocation2 + $0x8f0] sm:$0xff]
    %v4920 = vld [vmem:[#allocation2 + $0x8f8] sm:$0xff]
    %v4921 = vld [vmem:[#allocation2 + $0x900] sm:$0xff]
    %v4923 = vsel %vm119, %v4917, 0
    %4925 = vmatpush.msra.mxu0 0.0
    %4926 = vmatpush.msra.mxu0 0.0
    %4927 = vmatpush.msra.mxu0 0.0
    %4928 = vmatpush.msra.mxu0 0.0
    %4929 = vmatpush.msra.mxu0 0.0
    %4930 = vmatpush.msra.mxu0 0.0
    %4931 = vmatpush.msra.mxu0 0.0
    %4932 = vmatpush.msra.mxu0 0.0
    %4933 = vmatpush.msra.mxu0 0.0
    %4934 = vmatpush.msra.mxu0 0.0
    %4935 = vmatpush.msra.mxu0 0.0
    %4936 = vmatpush.msra.mxu0 0.0
    %4937 = vmatpush.msra.mxu0 %v4921
    %4938 = vmatpush.msra.mxu0 %v4920
    %4939 = vmatpush.msra.mxu0 %v4919
    %4940 = vmatpush.msra.mxu0 %v4918
    %4941 = vmatmul.f32.gmra.mxu0 %v4923
    %v4942 = vpop.f32.mrf.mxu0
    %v4943 = vadd.f32 0.0, %v4942
    %4944 = vdwg.mxu0
    %v4946 = vsel %vm119, %v4604, 0
    %4948 = vmatpush.msra.mxu0 0.0
    %4949 = vmatpush.msra.mxu0 0.0
    %4950 = vmatpush.msra.mxu0 0.0
    %4951 = vmatpush.msra.mxu0 0.0
    %4952 = vmatpush.msra.mxu0 0.0
    %4953 = vmatpush.msra.mxu0 0.0
    %4954 = vmatpush.msra.mxu0 0.0
    %4955 = vmatpush.msra.mxu0 0.0
    %4956 = vmatpush.msra.mxu0 0.0
    %4957 = vmatpush.msra.mxu0 0.0
    %4958 = vmatpush.msra.mxu0 0.0
    %4959 = vmatpush.msra.mxu0 0.0
    %4960 = vmatpush.msra.mxu0 %v4608
    %4961 = vmatpush.msra.mxu0 %v4607
    %4962 = vmatpush.msra.mxu0 %v4606
    %4963 = vmatpush.msra.mxu0 %v4605
    %4964 = vmatmul.f32.gmra.mxu0 %v4946
    %v4965 = vpop.f32.mrf.mxu0
    %v4966 = vadd.f32 %v4943, %v4965
    %4967 = vdwg.mxu0
    %v4968 = vld [vmem:[#allocation2 + $0x908] sm:$0x1]
    %v4969 = vperm.slane %v4968, 0
    %v4970 = vadd.f32 %v4966, %v4969
    %v4971 = vxor.u32 %v4970, 2147483648
    %v4972 = vmul.f32 %v4971, 1.442695
    %v4973 = vpow.pop %v4972
    %v4974 = vadd.f32 %v4973, 1.0
    %v4975 = vrcp.pop %v4974
    %v4976 = vmul.f32 %v4974, %v4975
    %v4977 = vsub.f32 1.0, %v4976
    %v4978 = vmul.f32 %v4975, %v4977
    %v4979 = vadd.f32 %v4975, %v4978
    %vm4980 = vweird.f32 %v4974
    %vm4981 = vweird.f32 %v4975
    %vm4982 = vmor %vm4980, %vm4981
    %v4983 = vsel %vm4982, %v4975, %v4979
    %v4984 = vand.u32 2147483647, %v4974
    %vm4985 = vcmp.eq.f32.partialorder %v4984, 8.507059e+37
    %v4986 = vand.u32 %v4974, 2147483648
    %v4987 = vor.u32 1.1754944e-38, %v4986
    %v4988 = vsel %vm4985, %v4987, %v4983
    %v4989 = vmul.f32 1.0, %v4988
    %v4990 = vld [vmem:[#allocation2 + $0x918] sm:$0x7]
    %v4991 = vperm.slane %v4990, 0
    %v4992 = vlaneseq
    %v4993 = vshrl.u32 %v4992, 7
    %4995 = vset.pattern.permute.xlu0 %v4993
    %4996 = vperm.xlu0 %4995, %v4991
    %v4997 = vpop.permute.xlu0 %4996
    %v4998 = vperm.slane %v4990, 1
    %v4999 = vlaneseq
    %v5000 = vshrl.u32 %v4999, 7
    %5002 = vset.pattern.permute.xlu0 %v5000
    %5003 = vperm.xlu0 %5002, %v4998
    %v5004 = vpop.permute.xlu0 %5003
    %v5005 = vperm.slane %v4990, 2
    %v5006 = vlaneseq
    %v5007 = vshrl.u32 %v5006, 7
    %5009 = vset.pattern.permute.xlu0 %v5007
    %5010 = vperm.xlu0 %5009, %v5005
    %v5011 = vpop.permute.xlu0 %5010
    %vm5012 = vcmp.gt.f32.partialorder %v4997, 0.5
    %vm5013 = vcmp.gt.f32.partialorder %v5004, 0.5
    %vm5014 = vcmp.gt.f32.partialorder %v5011, 0.5
    %v5015 = vsel %vm5012, 1, 0
    %v5016 = vsel %vm5013, 1, 0
    %v5017 = vsel %vm5014, 1, 0
    %vm5018 = vcmp.eq.s32.totalorder %v5015, 1
    %vm5019 = vcmp.eq.s32.totalorder %v5016, 1
    %vm5020 = vcmp.eq.s32.totalorder %v5017, 1
    %v5021 = vsel %vm5018, %v4989, -1e+30
    %v5022 = vsel %vm5019, %v4989, -1e+30
    %v5023 = vsel %vm5020, %v4989, -1e+30
    %v5024 = vsel %vm1174, %v5021, -inf
    %v5025 = vrot.slane %v5024, 4
    %v5026 = vmax.f32 %v5024, %v5025
    %v5027 = vrot.slane %v5026, 2
    %v5028 = vmax.f32 %v5026, %v5027
    %v5029 = vrot.slane %v5028, 1
    %v5030 = vmax.f32 %v5028, %v5029
    %v5031 = vsel %vm1174, %v5022, -inf
    %v5032 = vrot.slane %v5031, 4
    %v5033 = vmax.f32 %v5031, %v5032
    %v5034 = vrot.slane %v5033, 2
    %v5035 = vmax.f32 %v5033, %v5034
    %v5036 = vrot.slane %v5035, 1
    %v5037 = vmax.f32 %v5035, %v5036
    %v5038 = vsel %vm1174, %v5023, -inf
    %v5039 = vrot.slane %v5038, 4
    %v5040 = vmax.f32 %v5038, %v5039
    %v5041 = vrot.slane %v5040, 2
    %v5042 = vmax.f32 %v5040, %v5041
    %v5043 = vrot.slane %v5042, 1
    %v5044 = vmax.f32 %v5042, %v5043
    %v5045 = vld [vmem:[#allocation2 + $0x910] sm:$0x7]
    %v5047 = vsel %vm1170, %v5045, 0
    %v5049 = vsel %vm1174, %v4887, 0
    %5051 = vmatpush.msra.mxu0 0.0
    %5052 = vmatpush.msra.mxu0 0.0
    %5053 = vmatpush.msra.mxu0 0.0
    %5054 = vmatpush.msra.mxu0 0.0
    %5055 = vmatpush.msra.mxu0 0.0
    %5056 = vmatpush.msra.mxu0 0.0
    %5057 = vmatpush.msra.mxu0 0.0
    %5058 = vmatpush.msra.mxu0 0.0
    %5059 = vmatpush.msra.mxu0 0.0
    %5060 = vmatpush.msra.mxu0 0.0
    %5061 = vmatpush.msra.mxu0 0.0
    %5062 = vmatpush.msra.mxu0 0.0
    %5063 = vmatpush.msra.mxu0 0.0
    %5064 = vmatpush.msra.mxu0 0.0
    %5065 = vmatpush.msra.mxu0 0.0
    %5066 = vmatpush.msra.mxu0 %v5049
    %5067 = vmatmul.f32.gmra.mxu0 %v5047
    %v5068 = vpop.f32.mrf.mxu0
    %v5069 = vadd.f32 0.0, %v5068
    %5070 = vdwg.mxu0
    %v5071 = vld [vmem:[#allocation2 + $0x928] sm:$0x3]
    %v5072 = vperm.slane %v5071, 0
    %v5073 = vlaneseq
    %v5074 = vshrl.u32 %v5073, 7
    %5076 = vset.pattern.permute.xlu0 %v5074
    %5077 = vperm.xlu0 %5076, %v5072
    %v5078 = vpop.permute.xlu0 %5077
    %v5079 = vperm.slane %v5071, 1
    %v5080 = vlaneseq
    %v5081 = vshrl.u32 %v5080, 7
    %5083 = vset.pattern.permute.xlu0 %v5081
    %5084 = vperm.xlu0 %5083, %v5079
    %v5085 = vpop.permute.xlu0 %5084
    %vm5086 = vcmp.gt.f32.partialorder %v5078, 0.5
    %vm5087 = vcmp.gt.f32.partialorder %v5085, 0.5
    %v5088 = vsel %vm5086, 1, 0
    %v5089 = vsel %vm5087, 1, 0
    %vm5090 = vcmp.eq.s32.totalorder %v5088, 1
    %vm5091 = vcmp.eq.s32.totalorder %v5089, 1
    %vm5095 = vcmask 1041409
    %v5096 = vsel %vm5095, %v5037, %v5030
    %vm5097 = vcmask 1042434
    %v5098 = vsel %vm5097, %v5044, %v5096
    %v5100 = vsel %vm5090, %v5098, -1e+30
    %v5101 = vsel %vm5091, %v5098, -1e+30
    %vm5102 = vcmask 1042432
    %v5103 = vsel %vm5102, %v5100, -inf
    %v5104 = vrot.slane %v5103, 4
    %v5105 = vmax.f32 %v5103, %v5104
    %v5106 = vrot.slane %v5105, 2
    %v5107 = vmax.f32 %v5105, %v5106
    %v5108 = vrot.slane %v5107, 1
    %v5109 = vmax.f32 %v5107, %v5108
    %v5110 = vsel %vm5102, %v5101, -inf
    %v5111 = vrot.slane %v5110, 4
    %v5112 = vmax.f32 %v5110, %v5111
    %v5113 = vrot.slane %v5112, 2
    %v5114 = vmax.f32 %v5112, %v5113
    %v5115 = vrot.slane %v5114, 1
    %v5116 = vmax.f32 %v5114, %v5115
    %v5117 = vld [vmem:[#allocation2 + $0x920] sm:$0x3]
    %vm5118 = vcmask 23552
    %v5120 = vsel %vm5118, %v5117, 0
    %v5123 = vsel %vm5102, %v5069, 0
    %5125 = vmatpush.msra.mxu0 0.0
    %5126 = vmatpush.msra.mxu0 0.0
    %5127 = vmatpush.msra.mxu0 0.0
    %5128 = vmatpush.msra.mxu0 0.0
    %5129 = vmatpush.msra.mxu0 0.0
    %5130 = vmatpush.msra.mxu0 0.0
    %5131 = vmatpush.msra.mxu0 0.0
    %5132 = vmatpush.msra.mxu0 0.0
    %5133 = vmatpush.msra.mxu0 0.0
    %5134 = vmatpush.msra.mxu0 0.0
    %5135 = vmatpush.msra.mxu0 0.0
    %5136 = vmatpush.msra.mxu0 0.0
    %5137 = vmatpush.msra.mxu0 0.0
    %5138 = vmatpush.msra.mxu0 0.0
    %5139 = vmatpush.msra.mxu0 0.0
    %5140 = vmatpush.msra.mxu0 %v5123
    %5141 = vmatmul.f32.gmra.mxu0 %v5120
    %v5142 = vpop.f32.mrf.mxu0
    %v5143 = vadd.f32 0.0, %v5142
    %5144 = vdwg.mxu0
    %v5145 = vld [vmem:[#allocation2 + $0x930] sm:$0xff]
    %v5146 = vld [vmem:[#allocation2 + $0x938] sm:$0xff]
    %v5147 = vld [vmem:[#allocation2 + $0x940] sm:$0xff]
    %v5148 = vld [vmem:[#allocation2 + $0x948] sm:$0xff]
    %v5149 = vld [vmem:[#allocation2 + $0x950] sm:$0x1]
    %v5150 = vperm.slane %v5149, 0
    %v5151 = vsel %vm119, %v5069, 0
    %5153 = vmatpush.msra.mxu0 0.0
    %5154 = vmatpush.msra.mxu0 0.0
    %5155 = vmatpush.msra.mxu0 0.0
    %5156 = vmatpush.msra.mxu0 0.0
    %5157 = vmatpush.msra.mxu0 0.0
    %5158 = vmatpush.msra.mxu0 0.0
    %5159 = vmatpush.msra.mxu0 0.0
    %5160 = vmatpush.msra.mxu0 0.0
    %5161 = vmatpush.msra.mxu0 0.0
    %5162 = vmatpush.msra.mxu0 0.0
    %5163 = vmatpush.msra.mxu0 0.0
    %5164 = vmatpush.msra.mxu0 0.0
    %5165 = vmatpush.msra.mxu0 %v5148
    %5166 = vmatpush.msra.mxu0 %v5147
    %5167 = vmatpush.msra.mxu0 %v5146
    %5168 = vmatpush.msra.mxu0 %v5145
    %5169 = vmatmul.f32.gmra.mxu0 %v5151
    %v5170 = vpop.f32.mrf.mxu0
    %v5171 = vadd.f32 %v5150, %v5170
    %5172 = vdwg.mxu0
    %v5173 = vxor.u32 %v5171, 2147483648
    %v5174 = vmul.f32 %v5173, 1.442695
    %v5175 = vpow.pop %v5174
    %v5176 = vadd.f32 %v5175, 1.0
    %v5177 = vrcp.pop %v5176
    %v5178 = vmul.f32 %v5176, %v5177
    %v5179 = vsub.f32 1.0, %v5178
    %v5180 = vmul.f32 %v5177, %v5179
    %v5181 = vadd.f32 %v5177, %v5180
    %vm5182 = vweird.f32 %v5176
    %vm5183 = vweird.f32 %v5177
    %vm5184 = vmor %vm5182, %vm5183
    %v5185 = vsel %vm5184, %v5177, %v5181
    %v5186 = vand.u32 2147483647, %v5176
    %vm5187 = vcmp.eq.f32.partialorder %v5186, 8.507059e+37
    %v5188 = vand.u32 %v5176, 2147483648
    %v5189 = vor.u32 1.1754944e-38, %v5188
    %v5190 = vsel %vm5187, %v5189, %v5185
    %v5191 = vmul.f32 1.0, %v5190
    %v5192 = vld [vmem:[#allocation2 + $0x958] sm:$0xff]
    %v5193 = vld [vmem:[#allocation2 + $0x960] sm:$0xff]
    %v5194 = vld [vmem:[#allocation2 + $0x968] sm:$0xff]
    %v5195 = vld [vmem:[#allocation2 + $0x970] sm:$0xff]
    %v5196 = vld [vmem:[#allocation2 + $0x978] sm:$0x1]
    %v5197 = vperm.slane %v5196, 0
    %v5199 = vsel %vm119, %v5143, 0
    %5201 = vmatpush.msra.mxu0 0.0
    %5202 = vmatpush.msra.mxu0 0.0
    %5203 = vmatpush.msra.mxu0 0.0
    %5204 = vmatpush.msra.mxu0 0.0
    %5205 = vmatpush.msra.mxu0 0.0
    %5206 = vmatpush.msra.mxu0 0.0
    %5207 = vmatpush.msra.mxu0 0.0
    %5208 = vmatpush.msra.mxu0 0.0
    %5209 = vmatpush.msra.mxu0 0.0
    %5210 = vmatpush.msra.mxu0 0.0
    %5211 = vmatpush.msra.mxu0 0.0
    %5212 = vmatpush.msra.mxu0 0.0
    %5213 = vmatpush.msra.mxu0 %v5195
    %5214 = vmatpush.msra.mxu0 %v5194
    %5215 = vmatpush.msra.mxu0 %v5193
    %5216 = vmatpush.msra.mxu0 %v5192
    %5217 = vmatmul.f32.gmra.mxu0 %v5199
    %v5218 = vpop.f32.mrf.mxu0
    %v5219 = vadd.f32 %v5197, %v5218
    %5220 = vdwg.mxu0
    %v5221 = vxor.u32 %v5219, 2147483648
    %v5222 = vmul.f32 %v5221, 1.442695
    %v5223 = vpow.pop %v5222
    %v5224 = vadd.f32 %v5223, 1.0
    %v5225 = vrcp.pop %v5224
    %v5226 = vmul.f32 %v5224, %v5225
    %v5227 = vsub.f32 1.0, %v5226
    %v5228 = vmul.f32 %v5225, %v5227
    %v5229 = vadd.f32 %v5225, %v5228
    %vm5230 = vweird.f32 %v5224
    %vm5231 = vweird.f32 %v5225
    %vm5232 = vmor %vm5230, %vm5231
    %v5233 = vsel %vm5232, %v5225, %v5229
    %v5234 = vand.u32 2147483647, %v5224
    %vm5235 = vcmp.eq.f32.partialorder %v5234, 8.507059e+37
    %v5236 = vand.u32 %v5224, 2147483648
    %v5237 = vor.u32 1.1754944e-38, %v5236
    %v5238 = vsel %vm5235, %v5237, %v5233
    %v5239 = vmul.f32 1.0, %v5238
    %v5240 = vmul.f32 %v5030, 0.5
    %v5241 = vmul.f32 %v5037, 0.5
    %v5242 = vmul.f32 %v5044, 0.5
    %v5243 = vmul.f32 %v5191, 0.5
    %v5245 = vrot.slane %v5243, 1
    %v5246 = vrot.slane %v5243, 2
    %v5250 = vadd.f32 %v5240, %v5243
    %v5251 = vadd.f32 %v5241, %v5245
    %v5252 = vadd.f32 %v5242, %v5246
    %v5253 = vmul.f32 %v5109, 0.5
    %v5254 = vmul.f32 %v5116, 0.5
    %v5255 = vmul.f32 %v5239, 0.5
    %v5257 = vrot.slane %v5255, 1
    %v5260 = vadd.f32 %v5253, %v5255
    %v5261 = vadd.f32 %v5254, %v5257
    %v5265 = vrot.slane %v5251, 7
    %v5266 = vsel %vm5095, %v5265, %v5250
    %v5267 = vrot.slane %v5252, 6
    %v5268 = vsel %vm5097, %v5267, %v5266
    %v5272 = vrot.slane %v5260, 5
    %v5273 = vrot.slane %v5261, 4
    %vm5274 = vcmask 1044484
    %v5275 = vsel %vm5274, %v5273, %v5272
    %v5277 = vsel %vm5102, %v5268, %v5275
    %vm5278 = vcmask 1044480
    %v5279 = vsel %vm5278, %v5277, 0.0
    %5280 = vst [vmem:[%s3] sm:$0xff] %v5279
    // Predicated region
    $region18: #{forward.1} parent=1 // pred_check
      _
    $region19: #{forward.1} parent=1 // pred_check_branch
      %5282 = sbr.rel (0) target = $region21
    $region20: #{forward.1} parent=1 // pred_region
      _
    $region21: #{forward.1} parent=1 // pred_fallthru
      _
    // Predicated region
    $region22: #{forward.1} parent=1 // pred_check
      _
    $region23: #{forward.1} parent=1 // pred_check_branch
      %5284 = sbr.rel (0) target = $region25
    $region24: #{forward.1} parent=1 // pred_region
      _
    $region25: #{forward.1} parent=1 // pred_fallthru
      _
    %5285 = vsyncpa [#allocation3], 1

</llo_original>
